<compile_context>
chip_gen: v5e
topology: v5e:2x2
jax: 0.10.0
libtpu: 0.0.40
codegen_flags: <defaults>
</compile_context>

<pallas_src>
import functools

import jax
import jax.numpy as jnp
import numpy as np
from jax.experimental import pallas as pl
from jax.experimental.pallas import tpu as pltpu


# -----------------------------------------------------------------------------
# Pallas kernels: tiled matmul with fused LeakyReLU epilogue
# -----------------------------------------------------------------------------
def _matmul_act_kernel_acc(a_ref, b_ref, o_ref, acc_ref, *, negative_slope, apply_act):
    """Multi-K-step path: f32 VMEM accumulator across the trailing K grid axis."""

    @pl.when(pl.program_id(2) == 0)
    def _init():
        acc_ref[...] = jnp.zeros_like(acc_ref)

    acc_ref[...] += jnp.dot(
        a_ref[...], b_ref[...], preferred_element_type=jnp.float32
    )

    @pl.when(pl.program_id(2) == pl.num_programs(2) - 1)
    def _finalize():
        acc = acc_ref[...]
        if apply_act:
            acc = jnp.where(acc >= 0, acc, negative_slope * acc)
        o_ref[...] = acc.astype(o_ref.dtype)


def _matmul_act_kernel_single(a_ref, b_ref, o_ref, *, negative_slope, apply_act):
    """Single-K-block fast path: no scratch, no pl.when — dot -> act -> store."""
    acc = jnp.dot(a_ref[...], b_ref[...], preferred_element_type=jnp.float32)
    if apply_act:
        acc = jnp.where(acc >= 0, acc, negative_slope * acc)
    o_ref[...] = acc.astype(o_ref.dtype)


def _choose_tm(m):
    if m <= 256:
        return m          # full-extent block (always legal per the (8,128) rule)
    if m >= 4096:
        return 512        # halve B re-reads for large M
    return 256


def _choose_tn(n):
    return n if n <= 512 else 256


def _choose_tk(k):
    if k <= 1024:
        return k
    if k % 1024 == 0:
        return 1024
    if k % 128 == 0:
        return 128
    return k


def matmul_act(a, b, apply_act, *, out_dtype=jnp.bfloat16):
    """out = act(A @ B) via a Pallas TPU kernel.

    A: (M, K), B: (K, N). Inputs are cast to bf16 (native MXU path); the
    accumulation is f32 (register or VMEM scratch across the K grid axis).
    """
    a = a.astype(jnp.bfloat16)
    b = b.astype(jnp.bfloat16)
    M, K = a.shape
    K2, N = b.shape
    assert K == K2, (K, K2)

    tm = _choose_tm(M)
    tn = _choose_tn(N)
    tk = _choose_tk(K)
    assert K % tk == 0                 # keep the reduction axis exact (no garbage K)
    k_steps = K // tk

    out_itemsize = jnp.dtype(out_dtype).itemsize
    blk_bytes = (
        2 * (tm * tk + tk * tn) * 2                 # bf16 A/B, double-buffered
        + 2 * tm * tn * out_itemsize                # output, double-buffered
        + (tm * tn * 4 if k_steps > 1 else 0)       # f32 accumulator (multi-K only)
    )
    vmem_limit = min(32 << 20, max(16 << 20, 2 * blk_bytes))

    if k_steps == 1:
        kernel = functools.partial(
            _matmul_act_kernel_single, negative_slope=0.2, apply_act=apply_act
        )
        grid_spec = pltpu.PrefetchScalarGridSpec(
            num_scalar_prefetch=0,
            grid=(pl.cdiv(M, tm), pl.cdiv(N, tn)),
            in_specs=[
                pl.BlockSpec((tm, tk), lambda i, j: (i, 0)),
                pl.BlockSpec((tk, tn), lambda i, j: (0, j)),
            ],
            out_specs=pl.BlockSpec((tm, tn), lambda i, j: (i, j)),
        )
        dim_sem = ("parallel", "parallel")
    else:
        kernel = functools.partial(
            _matmul_act_kernel_acc, negative_slope=0.2, apply_act=apply_act
        )
        grid_spec = pltpu.PrefetchScalarGridSpec(
            num_scalar_prefetch=0,
            grid=(pl.cdiv(M, tm), pl.cdiv(N, tn), k_steps),
            in_specs=[
                pl.BlockSpec((tm, tk), lambda i, j, k: (i, k)),
                pl.BlockSpec((tk, tn), lambda i, j, k: (k, j)),
            ],
            out_specs=pl.BlockSpec((tm, tn), lambda i, j, k: (i, j)),
            scratch_shapes=[pltpu.VMEM((tm, tn), jnp.float32)],
        )
        dim_sem = ("parallel", "parallel", "arbitrary")

    return pl.pallas_call(
        kernel,
        out_shape=jax.ShapeDtypeStruct((M, N), out_dtype),
        grid_spec=grid_spec,
        compiler_params=pltpu.CompilerParams(
            dimension_semantics=dim_sem,
            vmem_limit_bytes=vmem_limit,
        ),
    )(a, b)


# -----------------------------------------------------------------------------
# Conv2d(k=4, s=2, p=2, bias=False), NHWC, via im2col + the Pallas matmul
# -----------------------------------------------------------------------------
def _im2col_nhwc(x, k=4, s=2, p=2):
    """x: (N, H, W, C) -> (N*H_out*W_out, k*k*C); column index = (kh*k+kw)*C + c."""
    N, H, W, C = x.shape
    H_out = (H + 2 * p - k) // s + 1
    W_out = (W + 2 * p - k) // s + 1
    x_pad = jnp.pad(x, ((0, 0), (p, p), (p, p), (0, 0)))
    cols = []
    for kh in range(k):
        for kw in range(k):
            cols.append(
                x_pad[
                    :,
                    kh : kh + s * (H_out - 1) + 1 : s,
                    kw : kw + s * (W_out - 1) + 1 : s,
                    :,
                ]
            )
    patches = jnp.stack(cols, axis=3)  # (N, H_out, W_out, k*k, C)
    return patches.reshape(N * H_out * W_out, k * k * C), H_out, W_out


def conv4x4_s2_p2(x_nhwc, w_mat, c_out, apply_act, out_dtype):
    n = x_nhwc.shape[0]
    patches, h_out, w_out = _im2col_nhwc(x_nhwc)
    out = matmul_act(patches, w_mat, apply_act, out_dtype=out_dtype)
    return out.reshape(n, h_out, w_out, c_out)


# -----------------------------------------------------------------------------
# OutputDiscriminator forward
# -----------------------------------------------------------------------------
FILTERS = [64, 128, 256, 512, 1]
IN_CH = 2


def init_params(key):
    """Weights ~ N(0, 0.02), matching _initialize_weights(); PyTorch OIHW layout."""
    params = []
    c_in = IN_CH
    for c_out in FILTERS:
        key, sub = jax.random.split(key)
        w = 0.02 * jax.random.normal(sub, (c_out, c_in, 4, 4), dtype=jnp.float32)
        params.append(w)
        c_in = c_out
    return params


def prepare_params(params):
    """(C_out, C_in, 4, 4) f32 -> (4*4*C_in, C_out) bf16, flattened once.

    Row ordering (kh, kw, c_in) matches the im2col column ordering above.
    """
    mats = []
    for w in params:
        c_out = w.shape[0]
        w_mat = jnp.transpose(w, (2, 3, 1, 0)).reshape(-1, c_out)
        mats.append(w_mat.astype(jnp.bfloat16))
    return mats


def output_discriminator(x_nchw, params):
    """x: (N, C, H, W) f32 -> (N, 1, H', W') f32, same semantics as the PyTorch module."""
    w_mats = prepare_params(params)
    x = jnp.transpose(x_nchw, (0, 2, 3, 1)).astype(jnp.bfloat16)  # NHWC bf16
    for i, (w_mat, c_out) in enumerate(zip(w_mats, FILTERS)):
        last = i == len(FILTERS) - 1
        x = conv4x4_s2_p2(
            x,
            w_mat,
            c_out,
            apply_act=not last,
            out_dtype=jnp.float32 if last else jnp.bfloat16,
        )
    return jnp.transpose(x, (0, 3, 1, 2))  # back to NCHW


# -----------------------------------------------------------------------------
# Pure-JAX f32 reference (for correctness check)
# -----------------------------------------------------------------------------
def reference_forward(x, params):
    def conv(x, w):
        return jax.lax.conv_general_dilated(
            x, w, window_strides=(2, 2), padding=((2, 2), (2, 2)),
            dimension_numbers=("NCHW", "OIHW", "NCHW"),
        )

    def lrelu(v):
        return jnp.where(v >= 0, v, 0.2 * v)

    for i, w in enumerate(params):
        x = conv(x, w)
        if i < len(params) - 1:
            x = lrelu(x)
    return x


if __name__ == "__main__":
    key = jax.random.PRNGKey(0)
    kx, kp = jax.random.split(key)

    # Small input consistent with the module: 2-channel score map, NCHW.
    x = jax.random.normal(kx, (2, IN_CH, 16, 16), dtype=jnp.float32)
    params = init_params(kp)

    fwd = jax.jit(output_discriminator)
    out = jax.block_until_ready(fwd(x, params))

    ref = jax.block_until_ready(reference_forward(x, params))
    assert out.shape == ref.shape, (out.shape, ref.shape)
    # bf16 inputs / f32 accumulation: allow a little slack vs the f32 reference.
    np.testing.assert_allclose(np.asarray(out), np.asarray(ref), rtol=5e-2, atol=5e-3)

    print("KERNEL_OK")
</pallas_src>

<mosaic_0001>
module attributes {stable_mosaic.version = 11 : i64} {
  func.func @_matmul_act_kernel_single(%arg0: i32, %arg1: i32, %arg2: memref<162x32xbf16, #tpu.memory_space<vmem>>, %arg3: memref<32x64xbf16, #tpu.memory_space<vmem>>, %arg4: memref<162x64xbf16, #tpu.memory_space<vmem>>) attributes {dimension_semantics = [#tpu.dimension_semantics<parallel>, #tpu.dimension_semantics<parallel>], iteration_bounds = array<i64: 1, 1>, scalar_prefetch = 0 : i64, scratch_operands = 0 : i64, tpu.core_type = #tpu.core_type<tc>, window_params = [{transform_indices = @transform_0, window_bounds = array<i64: 162, 32>}, {transform_indices = @transform_1, window_bounds = array<i64: 32, 64>}, {transform_indices = @transform_2, window_bounds = array<i64: 162, 64>}]} {
    %c0 = arith.constant 0 : index
    %c0_0 = arith.constant 0 : index
    %0 = vector.load %arg2[%c0, %c0_0] : memref<162x32xbf16, #tpu.memory_space<vmem>>, vector<162x32xbf16>
    %c0_1 = arith.constant 0 : index
    %c0_2 = arith.constant 0 : index
    %1 = vector.load %arg3[%c0_1, %c0_2] : memref<32x64xbf16, #tpu.memory_space<vmem>>, vector<32x64xbf16>
    %cst = arith.constant dense<0.000000e+00> : vector<162x64xf32>
    %2 = tpu.matmul %0, %1, %cst {dimension_numbers = #tpu.dot_dimension_numbers<[1], [0], [0], [1], [0, 0, 1, 1], [], []>} : vector<162x32xbf16>, vector<32x64xbf16>, vector<162x64xf32> -> vector<162x64xf32>
    %cst_3 = arith.constant 0.000000e+00 : f32
    %3 = vector.broadcast %cst_3 : f32 to vector<162x64xf32>
    %4 = arith.cmpf oge, %2, %3 : vector<162x64xf32>
    %cst_4 = arith.constant 2.000000e-01 : f32
    %5 = vector.broadcast %cst_4 : f32 to vector<162x64xf32>
    %6 = arith.mulf %5, %2 : vector<162x64xf32>
    %7 = arith.select %4, %2, %6 : vector<162x64xi1>, vector<162x64xf32>
    %8 = arith.truncf %7 : vector<162x64xf32> to vector<162x64xbf16>
    %c0_5 = arith.constant 0 : index
    %c0_6 = arith.constant 0 : index
    %9 = vector.load %arg4[%c0_5, %c0_6] : memref<162x64xbf16, #tpu.memory_space<vmem>>, vector<162x64xbf16>
    tpu.vector_store %arg4[%c0_5, %c0_6], %8 {strides = array<i32>} : memref<162x64xbf16, #tpu.memory_space<vmem>>, vector<162x64xbf16>,
    return
  }
  func.func @transform_0(%arg0: i32, %arg1: i32) -> (i32, i32) {
    %c0_i32 = arith.constant 0 : i32
    %c0_i32_0 = arith.constant 0 : i32
    return %arg0, %c0_i32 : i32, i32
  }
  func.func @transform_1(%arg0: i32, %arg1: i32) -> (i32, i32) {
    %c0_i32 = arith.constant 0 : i32
    %c0_i32_0 = arith.constant 0 : i32
    return %c0_i32, %arg1 : i32, i32
  }
  func.func @transform_2(%arg0: i32, %arg1: i32) -> (i32, i32) {
    %c0_i32 = arith.constant 0 : i32
    return %arg0, %arg1 : i32, i32
  }
}

module attributes {stable_mosaic.version = 11 : i64} {
  func.func @_matmul_act_kernel_single(%arg0: i32, %arg1: i32, %arg2: memref<50x1024xbf16, #tpu.memory_space<vmem>>, %arg3: memref<1024x128xbf16, #tpu.memory_space<vmem>>, %arg4: memref<50x128xbf16, #tpu.memory_space<vmem>>) attributes {dimension_semantics = [#tpu.dimension_semantics<parallel>, #tpu.dimension_semantics<parallel>], iteration_bounds = array<i64: 1, 1>, scalar_prefetch = 0 : i64, scratch_operands = 0 : i64, tpu.core_type = #tpu.core_type<tc>, window_params = [{transform_indices = @transform_0, window_bounds = array<i64: 50, 1024>}, {transform_indices = @transform_1, window_bounds = array<i64: 1024, 128>}, {transform_indices = @transform_2, window_bounds = array<i64: 50, 128>}]} {
    %c0 = arith.constant 0 : index
    %c0_0 = arith.constant 0 : index
    %0 = vector.load %arg2[%c0, %c0_0] : memref<50x1024xbf16, #tpu.memory_space<vmem>>, vector<50x1024xbf16>
    %c0_1 = arith.constant 0 : index
    %c0_2 = arith.constant 0 : index
    %1 = vector.load %arg3[%c0_1, %c0_2] : memref<1024x128xbf16, #tpu.memory_space<vmem>>, vector<1024x128xbf16>
    %cst = arith.constant dense<0.000000e+00> : vector<50x128xf32>
    %2 = tpu.matmul %0, %1, %cst {dimension_numbers = #tpu.dot_dimension_numbers<[1], [0], [0], [1], [0, 0, 1, 1], [], []>} : vector<50x1024xbf16>, vector<1024x128xbf16>, vector<50x128xf32> -> vector<50x128xf32>
    %cst_3 = arith.constant 0.000000e+00 : f32
    %3 = vector.broadcast %cst_3 : f32 to vector<50x128xf32>
    %4 = arith.cmpf oge, %2, %3 : vector<50x128xf32>
    %cst_4 = arith.constant 2.000000e-01 : f32
    %5 = vector.broadcast %cst_4 : f32 to vector<50x128xf32>
    %6 = arith.mulf %5, %2 : vector<50x128xf32>
    %7 = arith.select %4, %2, %6 : vector<50x128xi1>, vector<50x128xf32>
    %8 = arith.truncf %7 : vector<50x128xf32> to vector<50x128xbf16>
    %c0_5 = arith.constant 0 : index
    %c0_6 = arith.constant 0 : index
    %9 = vector.load %arg4[%c0_5, %c0_6] : memref<50x128xbf16, #tpu.memory_space<vmem>>, vector<50x128xbf16>
    tpu.vector_store %arg4[%c0_5, %c0_6], %8 {strides = array<i32>} : memref<50x128xbf16, #tpu.memory_space<vmem>>, vector<50x128xbf16>,
    return
  }
  func.func @transform_0(%arg0: i32, %arg1: i32) -> (i32, i32) {
    %c0_i32 = arith.constant 0 : i32
    %c0_i32_0 = arith.constant 0 : i32
    return %arg0, %c0_i32 : i32, i32
  }
  func.func @transform_1(%arg0: i32, %arg1: i32) -> (i32, i32) {
    %c0_i32 = arith.constant 0 : i32
    %c0_i32_0 = arith.constant 0 : i32
    return %c0_i32, %arg1 : i32, i32
  }
  func.func @transform_2(%arg0: i32, %arg1: i32) -> (i32, i32) {
    %c0_i32 = arith.constant 0 : i32
    return %arg0, %arg1 : i32, i32
  }
}

module attributes {stable_mosaic.version = 11 : i64} {
  func.func @_matmul_act_kernel_acc(%arg0: i32, %arg1: i32, %arg2: i32, %arg3: memref<18x1024xbf16, #tpu.memory_space<vmem>>, %arg4: memref<1024x256xbf16, #tpu.memory_space<vmem>>, %arg5: memref<18x256xbf16, #tpu.memory_space<vmem>>, %arg6: memref<18x256xf32, #tpu.memory_space<vmem>>) attributes {dimension_semantics = [#tpu.dimension_semantics<parallel>, #tpu.dimension_semantics<parallel>, #tpu.dimension_semantics<arbitrary>], iteration_bounds = array<i64: 1, 1, 2>, scalar_prefetch = 0 : i64, scratch_operands = 1 : i64, tpu.core_type = #tpu.core_type<tc>, window_params = [{transform_indices = @transform_0, window_bounds = array<i64: 18, 1024>}, {transform_indices = @transform_1, window_bounds = array<i64: 1024, 256>}, {transform_indices = @transform_2, window_bounds = array<i64: 18, 256>}]} {
    %c0_i32 = arith.constant 0 : i32
    %0 = arith.cmpi eq, %arg2, %c0_i32 : i32
    %1 = arith.extui %0 : i1 to i32
    %c0_i32_0 = arith.constant 0 : i32
    %2 = arith.cmpi ne, %1, %c0_i32_0 : i32
    scf.if %2 {
      %cst_9 = arith.constant 0.000000e+00 : f32
      %12 = vector.broadcast %cst_9 : f32 to vector<18x256xf32>
      %c0_10 = arith.constant 0 : index
      %c0_11 = arith.constant 0 : index
      %13 = vector.load %arg6[%c0_10, %c0_11] : memref<18x256xf32, #tpu.memory_space<vmem>>, vector<18x256xf32>
      tpu.vector_store %arg6[%c0_10, %c0_11], %12 {strides = array<i32>} : memref<18x256xf32, #tpu.memory_space<vmem>>, vector<18x256xf32>,
    } else {
    }
    %c0 = arith.constant 0 : index
    %c0_1 = arith.constant 0 : index
    %3 = vector.load %arg6[%c0, %c0_1] : memref<18x256xf32, #tpu.memory_space<vmem>>, vector<18x256xf32>
    %c0_2 = arith.constant 0 : index
    %c0_3 = arith.constant 0 : index
    %4 = vector.load %arg3[%c0_2, %c0_3] : memref<18x1024xbf16, #tpu.memory_space<vmem>>, vector<18x1024xbf16>
    %c0_4 = arith.constant 0 : index
    %c0_5 = arith.constant 0 : index
    %5 = vector.load %arg4[%c0_4, %c0_5] : memref<1024x256xbf16, #tpu.memory_space<vmem>>, vector<1024x256xbf16>
    %cst = arith.constant dense<0.000000e+00> : vector<18x256xf32>
    %6 = tpu.matmul %4, %5, %cst {dimension_numbers = #tpu.dot_dimension_numbers<[1], [0], [0], [1], [0, 0, 1, 1], [], []>} : vector<18x1024xbf16>, vector<1024x256xbf16>, vector<18x256xf32> -> vector<18x256xf32>
    %7 = arith.addf %3, %6 : vector<18x256xf32>
    %c0_6 = arith.constant 0 : index
    %c0_7 = arith.constant 0 : index
    %8 = vector.load %arg6[%c0_6, %c0_7] : memref<18x256xf32, #tpu.memory_space<vmem>>, vector<18x256xf32>
    tpu.vector_store %arg6[%c0_6, %c0_7], %7 {strides = array<i32>} : memref<18x256xf32, #tpu.memory_space<vmem>>, vector<18x256xf32>,
    %c1_i32 = arith.constant 1 : i32
    %9 = arith.cmpi eq, %arg2, %c1_i32 : i32
    %10 = arith.extui %9 : i1 to i32
    %c0_i32_8 = arith.constant 0 : i32
    %11 = arith.cmpi ne, %10, %c0_i32_8 : i32
    scf.if %11 {
      %c0_9 = arith.constant 0 : index
      %c0_10 = arith.constant 0 : index
      %12 = vector.load %arg6[%c0_9, %c0_10] : memref<18x256xf32, #tpu.memory_space<vmem>>, vector<18x256xf32>
      %cst_11 = arith.constant 0.000000e+00 : f32
      %13 = vector.broadcast %cst_11 : f32 to vector<18x256xf32>
      %14 = arith.cmpf oge, %12, %13 : vector<18x256xf32>
      %cst_12 = arith.constant 2.000000e-01 : f32
      %15 = vector.broadcast %cst_12 : f32 to vector<18x256xf32>
      %16 = arith.mulf %15, %12 : vector<18x256xf32>
      %17 = arith.select %14, %12, %16 : vector<18x256xi1>, vector<18x256xf32>
      %18 = arith.truncf %17 : vector<18x256xf32> to vector<18x256xbf16>
      %c0_13 = arith.constant 0 : index
      %c0_14 = arith.constant 0 : index
      %19 = vector.load %arg5[%c0_13, %c0_14] : memref<18x256xbf16, #tpu.memory_space<vmem>>, vector<18x256xbf16>
      tpu.vector_store %arg5[%c0_13, %c0_14], %18 {strides = array<i32>} : memref<18x256xbf16, #tpu.memory_space<vmem>>, vector<18x256xbf16>,
    } else {
    }
    return
  }
  func.func @transform_0(%arg0: i32, %arg1: i32, %arg2: i32) -> (i32, i32) {
    %c0_i32 = arith.constant 0 : i32
    return %arg0, %arg2 : i32, i32
  }
  func.func @transform_1(%arg0: i32, %arg1: i32, %arg2: i32) -> (i32, i32) {
    %c0_i32 = arith.constant 0 : i32
    return %arg2, %arg1 : i32, i32
  }
  func.func @transform_2(%arg0: i32, %arg1: i32, %arg2: i32) -> (i32, i32) {
    %c0_i32 = arith.constant 0 : i32
    return %arg0, %arg1 : i32, i32
  }
}

module attributes {stable_mosaic.version = 11 : i64} {
  func.func @_matmul_act_kernel_acc(%arg0: i32, %arg1: i32, %arg2: i32, %arg3: memref<8x1024xbf16, #tpu.memory_space<vmem>>, %arg4: memref<1024x512xbf16, #tpu.memory_space<vmem>>, %arg5: memref<8x512xbf16, #tpu.memory_space<vmem>>, %arg6: memref<8x512xf32, #tpu.memory_space<vmem>>) attributes {dimension_semantics = [#tpu.dimension_semantics<parallel>, #tpu.dimension_semantics<parallel>, #tpu.dimension_semantics<arbitrary>], iteration_bounds = array<i64: 1, 1, 4>, scalar_prefetch = 0 : i64, scratch_operands = 1 : i64, tpu.core_type = #tpu.core_type<tc>, window_params = [{transform_indices = @transform_0, window_bounds = array<i64: 8, 1024>}, {transform_indices = @transform_1, window_bounds = array<i64: 1024, 512>}, {transform_indices = @transform_2, window_bounds = array<i64: 8, 512>}]} {
    %c0_i32 = arith.constant 0 : i32
    %0 = arith.cmpi eq, %arg2, %c0_i32 : i32
    %1 = arith.extui %0 : i1 to i32
    %c0_i32_0 = arith.constant 0 : i32
    %2 = arith.cmpi ne, %1, %c0_i32_0 : i32
    scf.if %2 {
      %cst_9 = arith.constant 0.000000e+00 : f32
      %12 = vector.broadcast %cst_9 : f32 to vector<8x512xf32>
      %c0_10 = arith.constant 0 : index
      %c0_11 = arith.constant 0 : index
      %13 = vector.load %arg6[%c0_10, %c0_11] : memref<8x512xf32, #tpu.memory_space<vmem>>, vector<8x512xf32>
      tpu.vector_store %arg6[%c0_10, %c0_11], %12 {strides = array<i32>} : memref<8x512xf32, #tpu.memory_space<vmem>>, vector<8x512xf32>,
    } else {
    }
    %c0 = arith.constant 0 : index
    %c0_1 = arith.constant 0 : index
    %3 = vector.load %arg6[%c0, %c0_1] : memref<8x512xf32, #tpu.memory_space<vmem>>, vector<8x512xf32>
    %c0_2 = arith.constant 0 : index
    %c0_3 = arith.constant 0 : index
    %4 = vector.load %arg3[%c0_2, %c0_3] : memref<8x1024xbf16, #tpu.memory_space<vmem>>, vector<8x1024xbf16>
    %c0_4 = arith.constant 0 : index
    %c0_5 = arith.constant 0 : index
    %5 = vector.load %arg4[%c0_4, %c0_5] : memref<1024x512xbf16, #tpu.memory_space<vmem>>, vector<1024x512xbf16>
    %cst = arith.constant dense<0.000000e+00> : vector<8x512xf32>
    %6 = tpu.matmul %4, %5, %cst {dimension_numbers = #tpu.dot_dimension_numbers<[1], [0], [0], [1], [0, 0, 1, 1], [], []>} : vector<8x1024xbf16>, vector<1024x512xbf16>, vector<8x512xf32> -> vector<8x512xf32>
    %7 = arith.addf %3, %6 : vector<8x512xf32>
    %c0_6 = arith.constant 0 : index
    %c0_7 = arith.constant 0 : index
    %8 = vector.load %arg6[%c0_6, %c0_7] : memref<8x512xf32, #tpu.memory_space<vmem>>, vector<8x512xf32>
    tpu.vector_store %arg6[%c0_6, %c0_7], %7 {strides = array<i32>} : memref<8x512xf32, #tpu.memory_space<vmem>>, vector<8x512xf32>,
    %c3_i32 = arith.constant 3 : i32
    %9 = arith.cmpi eq, %arg2, %c3_i32 : i32
    %10 = arith.extui %9 : i1 to i32
    %c0_i32_8 = arith.constant 0 : i32
    %11 = arith.cmpi ne, %10, %c0_i32_8 : i32
    scf.if %11 {
      %c0_9 = arith.constant 0 : index
      %c0_10 = arith.constant 0 : index
      %12 = vector.load %arg6[%c0_9, %c0_10] : memref<8x512xf32, #tpu.memory_space<vmem>>, vector<8x512xf32>
      %cst_11 = arith.constant 0.000000e+00 : f32
      %13 = vector.broadcast %cst_11 : f32 to vector<8x512xf32>
      %14 = arith.cmpf oge, %12, %13 : vector<8x512xf32>
      %cst_12 = arith.constant 2.000000e-01 : f32
      %15 = vector.broadcast %cst_12 : f32 to vector<8x512xf32>
      %16 = arith.mulf %15, %12 : vector<8x512xf32>
      %17 = arith.select %14, %12, %16 : vector<8x512xi1>, vector<8x512xf32>
      %18 = arith.truncf %17 : vector<8x512xf32> to vector<8x512xbf16>
      %c0_13 = arith.constant 0 : index
      %c0_14 = arith.constant 0 : index
      %19 = vector.load %arg5[%c0_13, %c0_14] : memref<8x512xbf16, #tpu.memory_space<vmem>>, vector<8x512xbf16>
      tpu.vector_store %arg5[%c0_13, %c0_14], %18 {strides = array<i32>} : memref<8x512xbf16, #tpu.memory_space<vmem>>, vector<8x512xbf16>,
    } else {
    }
    return
  }
  func.func @transform_0(%arg0: i32, %arg1: i32, %arg2: i32) -> (i32, i32) {
    %c0_i32 = arith.constant 0 : i32
    return %arg0, %arg2 : i32, i32
  }
  func.func @transform_1(%arg0: i32, %arg1: i32, %arg2: i32) -> (i32, i32) {
    %c0_i32 = arith.constant 0 : i32
    return %arg2, %arg1 : i32, i32
  }
  func.func @transform_2(%arg0: i32, %arg1: i32, %arg2: i32) -> (i32, i32) {
    %c0_i32 = arith.constant 0 : i32
    return %arg0, %arg1 : i32, i32
  }
}

module attributes {stable_mosaic.version = 11 : i64} {
  func.func @_matmul_act_kernel_acc(%arg0: i32, %arg1: i32, %arg2: i32, %arg3: memref<8x1024xbf16, #tpu.memory_space<vmem>>, %arg4: memref<1024x1xbf16, #tpu.memory_space<vmem>>, %arg5: memref<8x1xf32, #tpu.memory_space<vmem>>, %arg6: memref<8x1xf32, #tpu.memory_space<vmem>>) attributes {dimension_semantics = [#tpu.dimension_semantics<parallel>, #tpu.dimension_semantics<parallel>, #tpu.dimension_semantics<arbitrary>], iteration_bounds = array<i64: 1, 1, 8>, scalar_prefetch = 0 : i64, scratch_operands = 1 : i64, tpu.core_type = #tpu.core_type<tc>, window_params = [{transform_indices = @transform_0, window_bounds = array<i64: 8, 1024>}, {transform_indices = @transform_1, window_bounds = array<i64: 1024, 1>}, {transform_indices = @transform_2, window_bounds = array<i64: 8, 1>}]} {
    %c0_i32 = arith.constant 0 : i32
    %0 = arith.cmpi eq, %arg2, %c0_i32 : i32
    %1 = arith.extui %0 : i1 to i32
    %c0_i32_0 = arith.constant 0 : i32
    %2 = arith.cmpi ne, %1, %c0_i32_0 : i32
    scf.if %2 {
      %cst_9 = arith.constant 0.000000e+00 : f32
      %12 = vector.broadcast %cst_9 : f32 to vector<8x1xf32>
      %c0_10 = arith.constant 0 : index
      %c0_11 = arith.constant 0 : index
      %13 = vector.load %arg6[%c0_10, %c0_11] : memref<8x1xf32, #tpu.memory_space<vmem>>, vector<8x1xf32>
      tpu.vector_store %arg6[%c0_10, %c0_11], %12 {strides = array<i32>} : memref<8x1xf32, #tpu.memory_space<vmem>>, vector<8x1xf32>,
    } else {
    }
    %c0 = arith.constant 0 : index
    %c0_1 = arith.constant 0 : index
    %3 = vector.load %arg6[%c0, %c0_1] : memref<8x1xf32, #tpu.memory_space<vmem>>, vector<8x1xf32>
    %c0_2 = arith.constant 0 : index
    %c0_3 = arith.constant 0 : index
    %4 = vector.load %arg3[%c0_2, %c0_3] : memref<8x1024xbf16, #tpu.memory_space<vmem>>, vector<8x1024xbf16>
    %c0_4 = arith.constant 0 : index
    %c0_5 = arith.constant 0 : index
    %5 = vector.load %arg4[%c0_4, %c0_5] : memref<1024x1xbf16, #tpu.memory_space<vmem>>, vector<1024x1xbf16>
    %cst = arith.constant dense<0.000000e+00> : vector<8x1xf32>
    %6 = tpu.matmul %4, %5, %cst {dimension_numbers = #tpu.dot_dimension_numbers<[1], [0], [0], [1], [0, 0, 1, 1], [], []>} : vector<8x1024xbf16>, vector<1024x1xbf16>, vector<8x1xf32> -> vector<8x1xf32>
    %7 = arith.addf %3, %6 : vector<8x1xf32>
    %c0_6 = arith.constant 0 : index
    %c0_7 = arith.constant 0 : index
    %8 = vector.load %arg6[%c0_6, %c0_7] : memref<8x1xf32, #tpu.memory_space<vmem>>, vector<8x1xf32>
    tpu.vector_store %arg6[%c0_6, %c0_7], %7 {strides = array<i32>} : memref<8x1xf32, #tpu.memory_space<vmem>>, vector<8x1xf32>,
    %c7_i32 = arith.constant 7 : i32
    %9 = arith.cmpi eq, %arg2, %c7_i32 : i32
    %10 = arith.extui %9 : i1 to i32
    %c0_i32_8 = arith.constant 0 : i32
    %11 = arith.cmpi ne, %10, %c0_i32_8 : i32
    scf.if %11 {
      %c0_9 = arith.constant 0 : index
      %c0_10 = arith.constant 0 : index
      %12 = vector.load %arg6[%c0_9, %c0_10] : memref<8x1xf32, #tpu.memory_space<vmem>>, vector<8x1xf32>
      %c0_11 = arith.constant 0 : index
      %c0_12 = arith.constant 0 : index
      %13 = vector.load %arg5[%c0_11, %c0_12] : memref<8x1xf32, #tpu.memory_space<vmem>>, vector<8x1xf32>
      tpu.vector_store %arg5[%c0_11, %c0_12], %12 {strides = array<i32>} : memref<8x1xf32, #tpu.memory_space<vmem>>, vector<8x1xf32>,
    } else {
    }
    return
  }
  func.func @transform_0(%arg0: i32, %arg1: i32, %arg2: i32) -> (i32, i32) {
    %c0_i32 = arith.constant 0 : i32
    return %arg0, %arg2 : i32, i32
  }
  func.func @transform_1(%arg0: i32, %arg1: i32, %arg2: i32) -> (i32, i32) {
    %c0_i32 = arith.constant 0 : i32
    return %arg2, %arg1 : i32, i32
  }
  func.func @transform_2(%arg0: i32, %arg1: i32, %arg2: i32) -> (i32, i32) {
    %c0_i32 = arith.constant 0 : i32
    return %arg0, %arg1 : i32, i32
  }
}

</mosaic_0001>

<llo_original>
// kernel: output_discriminator.5
$region0: #{output_discriminator.5}
  #allocation0 [shape = 'u32[]', space=smem, size = 0x4, offset = 0x4, fixed_abs, tag = 'smem constant byte address 0x4 - core index']
  #allocation1 [shape = 'u32[72,128]{1,0:T(1,128)}', space=vmem, size = 0x9000, scoped, tag = 'internal scratch']
  %s0 = inlined_call_operand.vmem [shape: bf16[162,32], index: 0, kind: input, shape index: {}]
  %s1 = inlined_call_operand.vmem [shape: bf16[32,64], index: 1, kind: input, shape index: {}]
  %s2 = inlined_call_operand.vmem [shape: bf16[162,64], index: 2, kind: output, shape index: {}]
  %s3 = sld [smem:[#allocation0]]
  $region18: #{output_discriminator.5} parent=0
    _
  %s5 = ssub.s32 1, %s3
  %s6 = scalar_select 0, %s5, %s3
  // Predicated region
  $region2: #{output_discriminator.5} parent=0 // pred_check
    _
  $region3: #{output_discriminator.5} parent=0 // pred_check_branch
    %8 = sbr.rel (0) target = $region5
  $region4: #{output_discriminator.5} parent=0 // pred_region
    _
  $region5: #{output_discriminator.5} parent=0 // pred_fallthru
    _
  // Predicated region
  $region6: #{output_discriminator.5} parent=0 // pred_check
    _
  $region7: #{output_discriminator.5} parent=0 // pred_check_branch
    %10 = sbr.rel (0) target = $region9
  $region8: #{output_discriminator.5} parent=0 // pred_region
    _
  $region9: #{output_discriminator.5} parent=0 // pred_fallthru
    _
  %v12 = vld [vmem:[%s0] sm:$0xf]
  %v13 = vld [vmem:[%s0 + $0x4] sm:$0xf]
  %v14 = vld [vmem:[%s0 + $0x8] sm:$0xf]
  %v15 = vld [vmem:[%s0 + $0xc] sm:$0xf]
  %v16 = vld [vmem:[%s0 + $0x10] sm:$0xf]
  %v17 = vld [vmem:[%s0 + $0x14] sm:$0xf]
  %v18 = vld [vmem:[%s0 + $0x18] sm:$0xf]
  %v19 = vld [vmem:[%s0 + $0x1c] sm:$0xf]
  %v20 = vld [vmem:[%s0 + $0x20] sm:$0xf]
  %v21 = vld [vmem:[%s0 + $0x24] sm:$0xf]
  %v22 = vld [vmem:[%s0 + $0x28] sm:$0xf]
  %v23 = vld [vmem:[%s0 + $0x2c] sm:$0xf]
  %v24 = vld [vmem:[%s0 + $0x30] sm:$0xf]
  %v25 = vld [vmem:[%s0 + $0x34] sm:$0xf]
  %v26 = vld [vmem:[%s0 + $0x38] sm:$0xf]
  %v27 = vld [vmem:[%s0 + $0x3c] sm:$0xf]
  %v28 = vld [vmem:[%s0 + $0x40] sm:$0xf]
  %v29 = vld [vmem:[%s0 + $0x44] sm:$0xf]
  %v30 = vld [vmem:[%s0 + $0x48] sm:$0xf]
  %v31 = vld [vmem:[%s0 + $0x4c] sm:$0xf]
  %v32 = vld [vmem:[%s0 + $0x50] sm:$0x1]
  %v33 = vld [vmem:[%s1] sm:$0xf]
  %v34 = vld [vmem:[%s1 + $0x4] sm:$0xf]
  %v35 = vld [vmem:[%s1 + $0x8] sm:$0xf]
  %v36 = vld [vmem:[%s1 + $0xc] sm:$0xf]
  %v58 = vunpack.c.l.b16 %v12
  %v59 = vunpack.c.l.b16 %v13
  %v60 = vunpack.c.l.b16 %v14
  %v61 = vunpack.c.l.b16 %v15
  %v62 = vunpack.c.l.b16 %v16
  %v63 = vunpack.c.l.b16 %v17
  %v64 = vunpack.c.l.b16 %v18
  %v65 = vunpack.c.l.b16 %v19
  %v66 = vunpack.c.l.b16 %v20
  %v67 = vunpack.c.l.b16 %v21
  %v68 = vunpack.c.l.b16 %v22
  %v69 = vunpack.c.l.b16 %v23
  %v70 = vunpack.c.l.b16 %v24
  %v71 = vunpack.c.l.b16 %v25
  %v72 = vunpack.c.l.b16 %v26
  %v73 = vunpack.c.l.b16 %v27
  %v74 = vunpack.c.l.b16 %v28
  %v75 = vunpack.c.l.b16 %v29
  %v76 = vunpack.c.l.b16 %v30
  %v77 = vunpack.c.l.b16 %v31
  %v78 = vunpack.c.l.b16 %v32
  %v79 = vpack.c.b16 %v59, %v58
  %v80 = vpack.c.b16 %v61, %v60
  %v81 = vpack.c.b16 %v63, %v62
  %v82 = vpack.c.b16 %v65, %v64
  %v83 = vpack.c.b16 %v67, %v66
  %v84 = vpack.c.b16 %v69, %v68
  %v85 = vpack.c.b16 %v71, %v70
  %v86 = vpack.c.b16 %v73, %v72
  %v87 = vpack.c.b16 %v75, %v74
  %v88 = vpack.c.b16 %v77, %v76
  %v89 = vpack.c.b16 %v78, %v78
  %v94 = vunpack.c.l.b16 %v33
  %v95 = vunpack.c.l.b16 %v34
  %v96 = vunpack.c.l.b16 %v35
  %v97 = vunpack.c.l.b16 %v36
  %v98 = vpack.c.b16 %v95, %v94
  %v99 = vpack.c.b16 %v97, %v96
  %vm102 = vcmask 261120
  %v104 = vsel %vm102, %v79, 0
  %v107 = vsel %vm102, %v80, 0
  %v110 = vsel %vm102, %v81, 0
  %v113 = vsel %vm102, %v82, 0
  %v116 = vsel %vm102, %v83, 0
  %v119 = vsel %vm102, %v84, 0
  %v122 = vsel %vm102, %v85, 0
  %v125 = vsel %vm102, %v86, 0
  %v128 = vsel %vm102, %v87, 0
  %v131 = vsel %vm102, %v88, 0
  %v134 = vsel %vm102, %v89, 0
  %136 = vmatpush.bf16.msra.mxu0 0
  %137 = vmatpush.bf16.msra.mxu0 0
  %138 = vmatpush.bf16.msra.mxu0 0
  %139 = vmatpush.bf16.msra.mxu0 0
  %140 = vmatpush.bf16.msra.mxu0 0
  %141 = vmatpush.bf16.msra.mxu0 0
  %142 = vmatpush.bf16.msra.mxu0 %v99
  %143 = vmatpush.bf16.msra.mxu0 %v98
  %144 = vmatmul.bf16.gmra.mxu0 %v104
  %v145 = vpop.f32.mrf.mxu0
  %v146 = vadd.f32 0.0, %v145
  %v147 = vpop.f32.mrf.mxu0
  %v148 = vadd.f32 0.0, %v147
  %149 = vmatmul.bf16.gmra.mxu0 %v107
  %v150 = vpop.f32.mrf.mxu0
  %v151 = vadd.f32 0.0, %v150
  %v152 = vpop.f32.mrf.mxu0
  %v153 = vadd.f32 0.0, %v152
  %154 = vmatmul.bf16.gmra.mxu0 %v110
  %v155 = vpop.f32.mrf.mxu0
  %v156 = vadd.f32 0.0, %v155
  %v157 = vpop.f32.mrf.mxu0
  %v158 = vadd.f32 0.0, %v157
  %159 = vmatmul.bf16.gmra.mxu0 %v113
  %v160 = vpop.f32.mrf.mxu0
  %v161 = vadd.f32 0.0, %v160
  %v162 = vpop.f32.mrf.mxu0
  %v163 = vadd.f32 0.0, %v162
  %164 = vmatmul.bf16.gmra.mxu0 %v116
  %v165 = vpop.f32.mrf.mxu0
  %v166 = vadd.f32 0.0, %v165
  %v167 = vpop.f32.mrf.mxu0
  %v168 = vadd.f32 0.0, %v167
  %169 = vmatmul.bf16.gmra.mxu0 %v119
  %v170 = vpop.f32.mrf.mxu0
  %v171 = vadd.f32 0.0, %v170
  %v172 = vpop.f32.mrf.mxu0
  %v173 = vadd.f32 0.0, %v172
  %174 = vmatmul.bf16.gmra.mxu0 %v122
  %v175 = vpop.f32.mrf.mxu0
  %v176 = vadd.f32 0.0, %v175
  %v177 = vpop.f32.mrf.mxu0
  %v178 = vadd.f32 0.0, %v177
  %179 = vmatmul.bf16.gmra.mxu0 %v125
  %v180 = vpop.f32.mrf.mxu0
  %v181 = vadd.f32 0.0, %v180
  %v182 = vpop.f32.mrf.mxu0
  %v183 = vadd.f32 0.0, %v182
  %184 = vmatmul.bf16.gmra.mxu0 %v128
  %v185 = vpop.f32.mrf.mxu0
  %v186 = vadd.f32 0.0, %v185
  %v187 = vpop.f32.mrf.mxu0
  %v188 = vadd.f32 0.0, %v187
  %189 = vmatmul.bf16.gmra.mxu0 %v131
  %v190 = vpop.f32.mrf.mxu0
  %v191 = vadd.f32 0.0, %v190
  %v192 = vpop.f32.mrf.mxu0
  %v193 = vadd.f32 0.0, %v192
  %194 = vmatmul.bf16.gmra.mxu0 %v134
  %v195 = vpop.f32.mrf.mxu0
  %v196 = vadd.f32 0.0, %v195
  %v197 = vpop.f32.mrf.mxu0
  %198 = vdwg.mxu0
  %vm199 = vcmp.ge.f32.partialorder %v146, 0.0
  %vm200 = vcmp.ge.f32.partialorder %v148, 0.0
  %vm201 = vcmp.ge.f32.partialorder %v151, 0.0
  %vm202 = vcmp.ge.f32.partialorder %v153, 0.0
  %vm203 = vcmp.ge.f32.partialorder %v156, 0.0
  %vm204 = vcmp.ge.f32.partialorder %v158, 0.0
  %vm205 = vcmp.ge.f32.partialorder %v161, 0.0
  %vm206 = vcmp.ge.f32.partialorder %v163, 0.0
  %vm207 = vcmp.ge.f32.partialorder %v166, 0.0
  %vm208 = vcmp.ge.f32.partialorder %v168, 0.0
  %vm209 = vcmp.ge.f32.partialorder %v171, 0.0
  %vm210 = vcmp.ge.f32.partialorder %v173, 0.0
  %vm211 = vcmp.ge.f32.partialorder %v176, 0.0
  %vm212 = vcmp.ge.f32.partialorder %v178, 0.0
  %vm213 = vcmp.ge.f32.partialorder %v181, 0.0
  %vm214 = vcmp.ge.f32.partialorder %v183, 0.0
  %vm215 = vcmp.ge.f32.partialorder %v186, 0.0
  %vm216 = vcmp.ge.f32.partialorder %v188, 0.0
  %vm217 = vcmp.ge.f32.partialorder %v191, 0.0
  %vm218 = vcmp.ge.f32.partialorder %v193, 0.0
  %vm219 = vcmp.ge.f32.partialorder %v196, 0.0
  %v220 = vmul.f32 %v146, 0.2
  %v221 = vmul.f32 %v148, 0.2
  %v222 = vmul.f32 %v151, 0.2
  %v223 = vmul.f32 %v153, 0.2
  %v224 = vmul.f32 %v156, 0.2
  %v225 = vmul.f32 %v158, 0.2
  %v226 = vmul.f32 %v161, 0.2
  %v227 = vmul.f32 %v163, 0.2
  %v228 = vmul.f32 %v166, 0.2
  %v229 = vmul.f32 %v168, 0.2
  %v230 = vmul.f32 %v171, 0.2
  %v231 = vmul.f32 %v173, 0.2
  %v232 = vmul.f32 %v176, 0.2
  %v233 = vmul.f32 %v178, 0.2
  %v234 = vmul.f32 %v181, 0.2
  %v235 = vmul.f32 %v183, 0.2
  %v236 = vmul.f32 %v186, 0.2
  %v237 = vmul.f32 %v188, 0.2
  %v238 = vmul.f32 %v191, 0.2
  %v239 = vmul.f32 %v193, 0.2
  %v240 = vmul.f32 %v196, 0.2
  %v241 = vsel %vm199, %v146, %v220
  %v242 = vsel %vm200, %v148, %v221
  %v243 = vsel %vm201, %v151, %v222
  %v244 = vsel %vm202, %v153, %v223
  %v245 = vsel %vm203, %v156, %v224
  %v246 = vsel %vm204, %v158, %v225
  %v247 = vsel %vm205, %v161, %v226
  %v248 = vsel %vm206, %v163, %v227
  %v249 = vsel %vm207, %v166, %v228
  %v250 = vsel %vm208, %v168, %v229
  %v251 = vsel %vm209, %v171, %v230
  %v252 = vsel %vm210, %v173, %v231
  %v253 = vsel %vm211, %v176, %v232
  %v254 = vsel %vm212, %v178, %v233
  %v255 = vsel %vm213, %v181, %v234
  %v256 = vsel %vm214, %v183, %v235
  %v257 = vsel %vm215, %v186, %v236
  %v258 = vsel %vm216, %v188, %v237
  %v259 = vsel %vm217, %v191, %v238
  %v260 = vsel %vm218, %v193, %v239
  %v261 = vsel %vm219, %v196, %v240
  %v262 = vpack.c.bf16 %v241, %v241
  %v263 = vpack.c.bf16 %v242, %v242
  %v264 = vpack.c.bf16 %v243, %v243
  %v265 = vpack.c.bf16 %v244, %v244
  %v266 = vpack.c.bf16 %v245, %v245
  %v267 = vpack.c.bf16 %v246, %v246
  %v268 = vpack.c.bf16 %v247, %v247
  %v269 = vpack.c.bf16 %v248, %v248
  %v270 = vpack.c.bf16 %v249, %v249
  %v271 = vpack.c.bf16 %v250, %v250
  %v272 = vpack.c.bf16 %v251, %v251
  %v273 = vpack.c.bf16 %v252, %v252
  %v274 = vpack.c.bf16 %v253, %v253
  %v275 = vpack.c.bf16 %v254, %v254
  %v276 = vpack.c.bf16 %v255, %v255
  %v277 = vpack.c.bf16 %v256, %v256
  %v278 = vpack.c.bf16 %v257, %v257
  %v279 = vpack.c.bf16 %v258, %v258
  %v280 = vpack.c.bf16 %v259, %v259
  %v281 = vpack.c.bf16 %v260, %v260
  %v282 = vpack.c.bf16 %v261, %v261
  %vm283 = vcmask 519168
  %284 = vst.msk [vmem:[%s2] sm:$0xf] %vm283, %v262
  %285 = vst.msk [vmem:[%s2 + $0x4] sm:$0xf] %vm283, %v263
  %286 = vst.msk [vmem:[%s2 + $0x8] sm:$0xf] %vm283, %v264
  %287 = vst.msk [vmem:[%s2 + $0xc] sm:$0xf] %vm283, %v265
  %288 = vst.msk [vmem:[%s2 + $0x10] sm:$0xf] %vm283, %v266
  %289 = vst.msk [vmem:[%s2 + $0x14] sm:$0xf] %vm283, %v267
  %290 = vst.msk [vmem:[%s2 + $0x18] sm:$0xf] %vm283, %v268
  %291 = vst.msk [vmem:[%s2 + $0x1c] sm:$0xf] %vm283, %v269
  %292 = vst.msk [vmem:[%s2 + $0x20] sm:$0xf] %vm283, %v270
  %293 = vst.msk [vmem:[%s2 + $0x24] sm:$0xf] %vm283, %v271
  %294 = vst.msk [vmem:[%s2 + $0x28] sm:$0xf] %vm283, %v272
  %295 = vst.msk [vmem:[%s2 + $0x2c] sm:$0xf] %vm283, %v273
  %296 = vst.msk [vmem:[%s2 + $0x30] sm:$0xf] %vm283, %v274
  %297 = vst.msk [vmem:[%s2 + $0x34] sm:$0xf] %vm283, %v275
  %298 = vst.msk [vmem:[%s2 + $0x38] sm:$0xf] %vm283, %v276
  %299 = vst.msk [vmem:[%s2 + $0x3c] sm:$0xf] %vm283, %v277
  %300 = vst.msk [vmem:[%s2 + $0x40] sm:$0xf] %vm283, %v278
  %301 = vst.msk [vmem:[%s2 + $0x44] sm:$0xf] %vm283, %v279
  %302 = vst.msk [vmem:[%s2 + $0x48] sm:$0xf] %vm283, %v280
  %303 = vst.msk [vmem:[%s2 + $0x4c] sm:$0xf] %vm283, %v281
  %vm304 = vcmask 516096
  %305 = vst.msk [vmem:[%s2 + $0x50] sm:$0x1] %vm304, %v282
  // Predicated region
  $region10: #{output_discriminator.5} parent=0 // pred_check
    _
  $region11: #{output_discriminator.5} parent=0 // pred_check_branch
    %307 = sbr.rel (0) target = $region13
  $region12: #{output_discriminator.5} parent=0 // pred_region
    _
  $region13: #{output_discriminator.5} parent=0 // pred_fallthru
    _
  // Predicated region
  $region14: #{output_discriminator.5} parent=0 // pred_check
    _
  $region15: #{output_discriminator.5} parent=0 // pred_check_branch
    %309 = sbr.rel (0) target = $region17
  $region16: #{output_discriminator.5} parent=0 // pred_region
    _
  $region17: #{output_discriminator.5} parent=0 // pred_fallthru
    _

// kernel: output_discriminator.6
$region0: #{output_discriminator.6}
  #allocation0 [shape = 'u32[]', space=smem, size = 0x4, offset = 0x4, fixed_abs, tag = 'smem constant byte address 0x4 - core index']
  #allocation1 [shape = 'u32[72,128]{1,0:T(1,128)}', space=vmem, size = 0x9000, scoped, tag = 'internal scratch']
  %s0 = inlined_call_operand.vmem [shape: bf16[50,1024], index: 0, kind: input, shape index: {}]
  %s1 = inlined_call_operand.vmem [shape: bf16[1024,128], index: 1, kind: input, shape index: {}]
  %s2 = inlined_call_operand.vmem [shape: bf16[50,128], index: 2, kind: output, shape index: {}]
  %s3 = sld [smem:[#allocation0]]
  $region18: #{output_discriminator.6} parent=0
    _
  %s5 = ssub.s32 1, %s3
  %s6 = scalar_select 0, %s5, %s3
  // Predicated region
  $region2: #{output_discriminator.6} parent=0 // pred_check
    _
  $region3: #{output_discriminator.6} parent=0 // pred_check_branch
    %8 = sbr.rel (0) target = $region5
  $region4: #{output_discriminator.6} parent=0 // pred_region
    _
  $region5: #{output_discriminator.6} parent=0 // pred_fallthru
    _
  // Predicated region
  $region6: #{output_discriminator.6} parent=0 // pred_check
    _
  $region7: #{output_discriminator.6} parent=0 // pred_check_branch
    %10 = sbr.rel (0) target = $region9
  $region8: #{output_discriminator.6} parent=0 // pred_region
    _
  $region9: #{output_discriminator.6} parent=0 // pred_fallthru
    _
  %v11 = vld [vmem:[%s0] sm:$0xff]
  %v12 = vld [vmem:[%s0 + $0x8] sm:$0xff]
  %v13 = vld [vmem:[%s0 + $0x10] sm:$0xff]
  %v14 = vld [vmem:[%s0 + $0x18] sm:$0xff]
  %v15 = vld [vmem:[%s0 + $0x20] sm:$0xff]
  %v16 = vld [vmem:[%s0 + $0x28] sm:$0xff]
  %v17 = vld [vmem:[%s0 + $0x30] sm:$0xff]
  %v18 = vld [vmem:[%s0 + $0x38] sm:$0xff]
  %v19 = vld [vmem:[%s0 + $0x40] sm:$0xff]
  %v20 = vld [vmem:[%s0 + $0x48] sm:$0xff]
  %v21 = vld [vmem:[%s0 + $0x50] sm:$0xff]
  %v22 = vld [vmem:[%s0 + $0x58] sm:$0xff]
  %v23 = vld [vmem:[%s0 + $0x60] sm:$0xff]
  %v24 = vld [vmem:[%s0 + $0x68] sm:$0xff]
  %v25 = vld [vmem:[%s0 + $0x70] sm:$0xff]
  %v26 = vld [vmem:[%s0 + $0x78] sm:$0xff]
  %v27 = vld [vmem:[%s0 + $0x80] sm:$0xff]
  %v28 = vld [vmem:[%s0 + $0x88] sm:$0xff]
  %v29 = vld [vmem:[%s0 + $0x90] sm:$0xff]
  %v30 = vld [vmem:[%s0 + $0x98] sm:$0xff]
  %v31 = vld [vmem:[%s0 + $0xa0] sm:$0xff]
  %v32 = vld [vmem:[%s0 + $0xa8] sm:$0xff]
  %v33 = vld [vmem:[%s0 + $0xb0] sm:$0xff]
  %v34 = vld [vmem:[%s0 + $0xb8] sm:$0xff]
  %v35 = vld [vmem:[%s0 + $0xc0] sm:$0x11]
  %v36 = vld [vmem:[%s0 + $0xc8] sm:$0x11]
  %v37 = vld [vmem:[%s0 + $0xd0] sm:$0x11]
  %v38 = vld [vmem:[%s0 + $0xd8] sm:$0x11]
  %v39 = vld [vmem:[%s1] sm:$0xf]
  %v40 = vld [vmem:[%s1 + $0x4] sm:$0xf]
  %v41 = vld [vmem:[%s1 + $0x8] sm:$0xf]
  %v42 = vld [vmem:[%s1 + $0xc] sm:$0xf]
  %v43 = vld [vmem:[%s1 + $0x10] sm:$0xf]
  %v44 = vld [vmem:[%s1 + $0x14] sm:$0xf]
  %v45 = vld [vmem:[%s1 + $0x18] sm:$0xf]
  %v46 = vld [vmem:[%s1 + $0x1c] sm:$0xf]
  %v47 = vld [vmem:[%s1 + $0x20] sm:$0xf]
  %v48 = vld [vmem:[%s1 + $0x24] sm:$0xf]
  %v49 = vld [vmem:[%s1 + $0x28] sm:$0xf]
  %v50 = vld [vmem:[%s1 + $0x2c] sm:$0xf]
  %v51 = vld [vmem:[%s1 + $0x30] sm:$0xf]
  %v52 = vld [vmem:[%s1 + $0x34] sm:$0xf]
  %v53 = vld [vmem:[%s1 + $0x38] sm:$0xf]
  %v54 = vld [vmem:[%s1 + $0x3c] sm:$0xf]
  %v55 = vld [vmem:[%s1 + $0x40] sm:$0xf]
  %v56 = vld [vmem:[%s1 + $0x44] sm:$0xf]
  %v57 = vld [vmem:[%s1 + $0x48] sm:$0xf]
  %v58 = vld [vmem:[%s1 + $0x4c] sm:$0xf]
  %v59 = vld [vmem:[%s1 + $0x50] sm:$0xf]
  %v60 = vld [vmem:[%s1 + $0x54] sm:$0xf]
  %v61 = vld [vmem:[%s1 + $0x58] sm:$0xf]
  %v62 = vld [vmem:[%s1 + $0x5c] sm:$0xf]
  %v63 = vld [vmem:[%s1 + $0x60] sm:$0xf]
  %v64 = vld [vmem:[%s1 + $0x64] sm:$0xf]
  %v65 = vld [vmem:[%s1 + $0x68] sm:$0xf]
  %v66 = vld [vmem:[%s1 + $0x6c] sm:$0xf]
  %v67 = vld [vmem:[%s1 + $0x70] sm:$0xf]
  %v68 = vld [vmem:[%s1 + $0x74] sm:$0xf]
  %v69 = vld [vmem:[%s1 + $0x78] sm:$0xf]
  %v70 = vld [vmem:[%s1 + $0x7c] sm:$0xf]
  %v71 = vld [vmem:[%s1 + $0x80] sm:$0xf]
  %v72 = vld [vmem:[%s1 + $0x84] sm:$0xf]
  %v73 = vld [vmem:[%s1 + $0x88] sm:$0xf]
  %v74 = vld [vmem:[%s1 + $0x8c] sm:$0xf]
  %v75 = vld [vmem:[%s1 + $0x90] sm:$0xf]
  %v76 = vld [vmem:[%s1 + $0x94] sm:$0xf]
  %v77 = vld [vmem:[%s1 + $0x98] sm:$0xf]
  %v78 = vld [vmem:[%s1 + $0x9c] sm:$0xf]
  %v79 = vld [vmem:[%s1 + $0xa0] sm:$0xf]
  %v80 = vld [vmem:[%s1 + $0xa4] sm:$0xf]
  %v81 = vld [vmem:[%s1 + $0xa8] sm:$0xf]
  %v82 = vld [vmem:[%s1 + $0xac] sm:$0xf]
  %v83 = vld [vmem:[%s1 + $0xb0] sm:$0xf]
  %v84 = vld [vmem:[%s1 + $0xb4] sm:$0xf]
  %v85 = vld [vmem:[%s1 + $0xb8] sm:$0xf]
  %v86 = vld [vmem:[%s1 + $0xbc] sm:$0xf]
  %v87 = vld [vmem:[%s1 + $0xc0] sm:$0xf]
  %v88 = vld [vmem:[%s1 + $0xc4] sm:$0xf]
  %v89 = vld [vmem:[%s1 + $0xc8] sm:$0xf]
  %v90 = vld [vmem:[%s1 + $0xcc] sm:$0xf]
  %v91 = vld [vmem:[%s1 + $0xd0] sm:$0xf]
  %v92 = vld [vmem:[%s1 + $0xd4] sm:$0xf]
  %v93 = vld [vmem:[%s1 + $0xd8] sm:$0xf]
  %v94 = vld [vmem:[%s1 + $0xdc] sm:$0xf]
  %v95 = vld [vmem:[%s1 + $0xe0] sm:$0xf]
  %v96 = vld [vmem:[%s1 + $0xe4] sm:$0xf]
  %v97 = vld [vmem:[%s1 + $0xe8] sm:$0xf]
  %v98 = vld [vmem:[%s1 + $0xec] sm:$0xf]
  %v99 = vld [vmem:[%s1 + $0xf0] sm:$0xf]
  %v100 = vld [vmem:[%s1 + $0xf4] sm:$0xf]
  %v101 = vld [vmem:[%s1 + $0xf8] sm:$0xf]
  %v102 = vld [vmem:[%s1 + $0xfc] sm:$0xf]
  %v103 = vld [vmem:[%s1 + $0x100] sm:$0xf]
  %v104 = vld [vmem:[%s1 + $0x104] sm:$0xf]
  %v105 = vld [vmem:[%s1 + $0x108] sm:$0xf]
  %v106 = vld [vmem:[%s1 + $0x10c] sm:$0xf]
  %v107 = vld [vmem:[%s1 + $0x110] sm:$0xf]
  %v108 = vld [vmem:[%s1 + $0x114] sm:$0xf]
  %v109 = vld [vmem:[%s1 + $0x118] sm:$0xf]
  %v110 = vld [vmem:[%s1 + $0x11c] sm:$0xf]
  %v111 = vld [vmem:[%s1 + $0x120] sm:$0xf]
  %v112 = vld [vmem:[%s1 + $0x124] sm:$0xf]
  %v113 = vld [vmem:[%s1 + $0x128] sm:$0xf]
  %v114 = vld [vmem:[%s1 + $0x12c] sm:$0xf]
  %v115 = vld [vmem:[%s1 + $0x130] sm:$0xf]
  %v116 = vld [vmem:[%s1 + $0x134] sm:$0xf]
  %v117 = vld [vmem:[%s1 + $0x138] sm:$0xf]
  %v118 = vld [vmem:[%s1 + $0x13c] sm:$0xf]
  %v119 = vld [vmem:[%s1 + $0x140] sm:$0xf]
  %v120 = vld [vmem:[%s1 + $0x144] sm:$0xf]
  %v121 = vld [vmem:[%s1 + $0x148] sm:$0xf]
  %v122 = vld [vmem:[%s1 + $0x14c] sm:$0xf]
  %v123 = vld [vmem:[%s1 + $0x150] sm:$0xf]
  %v124 = vld [vmem:[%s1 + $0x154] sm:$0xf]
  %v125 = vld [vmem:[%s1 + $0x158] sm:$0xf]
  %v126 = vld [vmem:[%s1 + $0x15c] sm:$0xf]
  %v127 = vld [vmem:[%s1 + $0x160] sm:$0xf]
  %v128 = vld [vmem:[%s1 + $0x164] sm:$0xf]
  %v129 = vld [vmem:[%s1 + $0x168] sm:$0xf]
  %v130 = vld [vmem:[%s1 + $0x16c] sm:$0xf]
  %v131 = vld [vmem:[%s1 + $0x170] sm:$0xf]
  %v132 = vld [vmem:[%s1 + $0x174] sm:$0xf]
  %v133 = vld [vmem:[%s1 + $0x178] sm:$0xf]
  %v134 = vld [vmem:[%s1 + $0x17c] sm:$0xf]
  %v135 = vld [vmem:[%s1 + $0x180] sm:$0xf]
  %v136 = vld [vmem:[%s1 + $0x184] sm:$0xf]
  %v137 = vld [vmem:[%s1 + $0x188] sm:$0xf]
  %v138 = vld [vmem:[%s1 + $0x18c] sm:$0xf]
  %v139 = vld [vmem:[%s1 + $0x190] sm:$0xf]
  %v140 = vld [vmem:[%s1 + $0x194] sm:$0xf]
  %v141 = vld [vmem:[%s1 + $0x198] sm:$0xf]
  %v142 = vld [vmem:[%s1 + $0x19c] sm:$0xf]
  %v143 = vld [vmem:[%s1 + $0x1a0] sm:$0xf]
  %v144 = vld [vmem:[%s1 + $0x1a4] sm:$0xf]
  %v145 = vld [vmem:[%s1 + $0x1a8] sm:$0xf]
  %v146 = vld [vmem:[%s1 + $0x1ac] sm:$0xf]
  %v147 = vld [vmem:[%s1 + $0x1b0] sm:$0xf]
  %v148 = vld [vmem:[%s1 + $0x1b4] sm:$0xf]
  %v149 = vld [vmem:[%s1 + $0x1b8] sm:$0xf]
  %v150 = vld [vmem:[%s1 + $0x1bc] sm:$0xf]
  %v151 = vld [vmem:[%s1 + $0x1c0] sm:$0xf]
  %v152 = vld [vmem:[%s1 + $0x1c4] sm:$0xf]
  %v153 = vld [vmem:[%s1 + $0x1c8] sm:$0xf]
  %v154 = vld [vmem:[%s1 + $0x1cc] sm:$0xf]
  %v155 = vld [vmem:[%s1 + $0x1d0] sm:$0xf]
  %v156 = vld [vmem:[%s1 + $0x1d4] sm:$0xf]
  %v157 = vld [vmem:[%s1 + $0x1d8] sm:$0xf]
  %v158 = vld [vmem:[%s1 + $0x1dc] sm:$0xf]
  %v159 = vld [vmem:[%s1 + $0x1e0] sm:$0xf]
  %v160 = vld [vmem:[%s1 + $0x1e4] sm:$0xf]
  %v161 = vld [vmem:[%s1 + $0x1e8] sm:$0xf]
  %v162 = vld [vmem:[%s1 + $0x1ec] sm:$0xf]
  %v163 = vld [vmem:[%s1 + $0x1f0] sm:$0xf]
  %v164 = vld [vmem:[%s1 + $0x1f4] sm:$0xf]
  %v165 = vld [vmem:[%s1 + $0x1f8] sm:$0xf]
  %v166 = vld [vmem:[%s1 + $0x1fc] sm:$0xf]
  %v195 = vunpack.c.l.b16 %v11
  %v196 = vunpack.c.h.b16 %v11
  %v197 = vunpack.c.l.b16 %v12
  %v198 = vunpack.c.h.b16 %v12
  %v199 = vunpack.c.l.b16 %v13
  %v200 = vunpack.c.h.b16 %v13
  %v201 = vunpack.c.l.b16 %v14
  %v202 = vunpack.c.h.b16 %v14
  %v203 = vunpack.c.l.b16 %v15
  %v204 = vunpack.c.h.b16 %v15
  %v205 = vunpack.c.l.b16 %v16
  %v206 = vunpack.c.h.b16 %v16
  %v207 = vunpack.c.l.b16 %v17
  %v208 = vunpack.c.h.b16 %v17
  %v209 = vunpack.c.l.b16 %v18
  %v210 = vunpack.c.h.b16 %v18
  %v211 = vunpack.c.l.b16 %v19
  %v212 = vunpack.c.h.b16 %v19
  %v213 = vunpack.c.l.b16 %v20
  %v214 = vunpack.c.h.b16 %v20
  %v215 = vunpack.c.l.b16 %v21
  %v216 = vunpack.c.h.b16 %v21
  %v217 = vunpack.c.l.b16 %v22
  %v218 = vunpack.c.h.b16 %v22
  %v219 = vunpack.c.l.b16 %v23
  %v220 = vunpack.c.h.b16 %v23
  %v221 = vunpack.c.l.b16 %v24
  %v222 = vunpack.c.h.b16 %v24
  %v223 = vunpack.c.l.b16 %v25
  %v224 = vunpack.c.h.b16 %v25
  %v225 = vunpack.c.l.b16 %v26
  %v226 = vunpack.c.h.b16 %v26
  %v227 = vunpack.c.l.b16 %v27
  %v228 = vunpack.c.h.b16 %v27
  %v229 = vunpack.c.l.b16 %v28
  %v230 = vunpack.c.h.b16 %v28
  %v231 = vunpack.c.l.b16 %v29
  %v232 = vunpack.c.h.b16 %v29
  %v233 = vunpack.c.l.b16 %v30
  %v234 = vunpack.c.h.b16 %v30
  %v235 = vunpack.c.l.b16 %v31
  %v236 = vunpack.c.h.b16 %v31
  %v237 = vunpack.c.l.b16 %v32
  %v238 = vunpack.c.h.b16 %v32
  %v239 = vunpack.c.l.b16 %v33
  %v240 = vunpack.c.h.b16 %v33
  %v241 = vunpack.c.l.b16 %v34
  %v242 = vunpack.c.h.b16 %v34
  %v243 = vunpack.c.l.b16 %v35
  %v244 = vunpack.c.h.b16 %v35
  %v245 = vunpack.c.l.b16 %v36
  %v246 = vunpack.c.h.b16 %v36
  %v247 = vunpack.c.l.b16 %v37
  %v248 = vunpack.c.h.b16 %v37
  %v249 = vunpack.c.l.b16 %v38
  %v250 = vunpack.c.h.b16 %v38
  %v251 = vpack.c.b16 %v203, %v195
  %v252 = vpack.c.b16 %v204, %v196
  %v253 = vpack.c.b16 %v205, %v197
  %v254 = vpack.c.b16 %v206, %v198
  %v255 = vpack.c.b16 %v207, %v199
  %v256 = vpack.c.b16 %v208, %v200
  %v257 = vpack.c.b16 %v209, %v201
  %v258 = vpack.c.b16 %v210, %v202
  %v259 = vpack.c.b16 %v219, %v211
  %v260 = vpack.c.b16 %v220, %v212
  %v261 = vpack.c.b16 %v221, %v213
  %v262 = vpack.c.b16 %v222, %v214
  %v263 = vpack.c.b16 %v223, %v215
  %v264 = vpack.c.b16 %v224, %v216
  %v265 = vpack.c.b16 %v225, %v217
  %v266 = vpack.c.b16 %v226, %v218
  %v267 = vpack.c.b16 %v235, %v227
  %v268 = vpack.c.b16 %v236, %v228
  %v269 = vpack.c.b16 %v237, %v229
  %v270 = vpack.c.b16 %v238, %v230
  %v271 = vpack.c.b16 %v239, %v231
  %v272 = vpack.c.b16 %v240, %v232
  %v273 = vpack.c.b16 %v241, %v233
  %v274 = vpack.c.b16 %v242, %v234
  %v275 = vpack.c.b16 %v243, %v243
  %v276 = vpack.c.b16 %v244, %v244
  %v277 = vpack.c.b16 %v245, %v245
  %v278 = vpack.c.b16 %v246, %v246
  %v279 = vpack.c.b16 %v247, %v247
  %v280 = vpack.c.b16 %v248, %v248
  %v281 = vpack.c.b16 %v249, %v249
  %v282 = vpack.c.b16 %v250, %v250
  %v443 = vunpack.c.l.b16 %v39
  %v444 = vunpack.c.l.b16 %v40
  %v445 = vunpack.c.l.b16 %v41
  %v446 = vunpack.c.l.b16 %v42
  %v447 = vunpack.c.l.b16 %v43
  %v448 = vunpack.c.l.b16 %v44
  %v449 = vunpack.c.l.b16 %v45
  %v450 = vunpack.c.l.b16 %v46
  %v451 = vunpack.c.l.b16 %v47
  %v452 = vunpack.c.l.b16 %v48
  %v453 = vunpack.c.l.b16 %v49
  %v454 = vunpack.c.l.b16 %v50
  %v455 = vunpack.c.l.b16 %v51
  %v456 = vunpack.c.l.b16 %v52
  %v457 = vunpack.c.l.b16 %v53
  %v458 = vunpack.c.l.b16 %v54
  %v459 = vunpack.c.l.b16 %v55
  %v460 = vunpack.c.l.b16 %v56
  %v461 = vunpack.c.l.b16 %v57
  %v462 = vunpack.c.l.b16 %v58
  %v463 = vunpack.c.l.b16 %v59
  %v464 = vunpack.c.l.b16 %v60
  %v465 = vunpack.c.l.b16 %v61
  %v466 = vunpack.c.l.b16 %v62
  %v467 = vunpack.c.l.b16 %v63
  %v468 = vunpack.c.l.b16 %v64
  %v469 = vunpack.c.l.b16 %v65
  %v470 = vunpack.c.l.b16 %v66
  %v471 = vunpack.c.l.b16 %v67
  %v472 = vunpack.c.l.b16 %v68
  %v473 = vunpack.c.l.b16 %v69
  %v474 = vunpack.c.l.b16 %v70
  %v475 = vunpack.c.l.b16 %v71
  %v476 = vunpack.c.l.b16 %v72
  %v477 = vunpack.c.l.b16 %v73
  %v478 = vunpack.c.l.b16 %v74
  %v479 = vunpack.c.l.b16 %v75
  %v480 = vunpack.c.l.b16 %v76
  %v481 = vunpack.c.l.b16 %v77
  %v482 = vunpack.c.l.b16 %v78
  %v483 = vunpack.c.l.b16 %v79
  %v484 = vunpack.c.l.b16 %v80
  %v485 = vunpack.c.l.b16 %v81
  %v486 = vunpack.c.l.b16 %v82
  %v487 = vunpack.c.l.b16 %v83
  %v488 = vunpack.c.l.b16 %v84
  %v489 = vunpack.c.l.b16 %v85
  %v490 = vunpack.c.l.b16 %v86
  %v491 = vunpack.c.l.b16 %v87
  %v492 = vunpack.c.l.b16 %v88
  %v493 = vunpack.c.l.b16 %v89
  %v494 = vunpack.c.l.b16 %v90
  %v495 = vunpack.c.l.b16 %v91
  %v496 = vunpack.c.l.b16 %v92
  %v497 = vunpack.c.l.b16 %v93
  %v498 = vunpack.c.l.b16 %v94
  %v499 = vunpack.c.l.b16 %v95
  %v500 = vunpack.c.l.b16 %v96
  %v501 = vunpack.c.l.b16 %v97
  %v502 = vunpack.c.l.b16 %v98
  %v503 = vunpack.c.l.b16 %v99
  %v504 = vunpack.c.l.b16 %v100
  %v505 = vunpack.c.l.b16 %v101
  %v506 = vunpack.c.l.b16 %v102
  %v507 = vunpack.c.l.b16 %v103
  %v508 = vunpack.c.l.b16 %v104
  %v509 = vunpack.c.l.b16 %v105
  %v510 = vunpack.c.l.b16 %v106
  %v511 = vunpack.c.l.b16 %v107
  %v512 = vunpack.c.l.b16 %v108
  %v513 = vunpack.c.l.b16 %v109
  %v514 = vunpack.c.l.b16 %v110
  %v515 = vunpack.c.l.b16 %v111
  %v516 = vunpack.c.l.b16 %v112
  %v517 = vunpack.c.l.b16 %v113
  %v518 = vunpack.c.l.b16 %v114
  %v519 = vunpack.c.l.b16 %v115
  %v520 = vunpack.c.l.b16 %v116
  %v521 = vunpack.c.l.b16 %v117
  %v522 = vunpack.c.l.b16 %v118
  %v523 = vunpack.c.l.b16 %v119
  %v524 = vunpack.c.l.b16 %v120
  %v525 = vunpack.c.l.b16 %v121
  %v526 = vunpack.c.l.b16 %v122
  %v527 = vunpack.c.l.b16 %v123
  %v528 = vunpack.c.l.b16 %v124
  %v529 = vunpack.c.l.b16 %v125
  %v530 = vunpack.c.l.b16 %v126
  %v531 = vunpack.c.l.b16 %v127
  %v532 = vunpack.c.l.b16 %v128
  %v533 = vunpack.c.l.b16 %v129
  %v534 = vunpack.c.l.b16 %v130
  %v535 = vunpack.c.l.b16 %v131
  %v536 = vunpack.c.l.b16 %v132
  %v537 = vunpack.c.l.b16 %v133
  %v538 = vunpack.c.l.b16 %v134
  %v539 = vunpack.c.l.b16 %v135
  %v540 = vunpack.c.l.b16 %v136
  %v541 = vunpack.c.l.b16 %v137
  %v542 = vunpack.c.l.b16 %v138
  %v543 = vunpack.c.l.b16 %v139
  %v544 = vunpack.c.l.b16 %v140
  %v545 = vunpack.c.l.b16 %v141
  %v546 = vunpack.c.l.b16 %v142
  %v547 = vunpack.c.l.b16 %v143
  %v548 = vunpack.c.l.b16 %v144
  %v549 = vunpack.c.l.b16 %v145
  %v550 = vunpack.c.l.b16 %v146
  %v551 = vunpack.c.l.b16 %v147
  %v552 = vunpack.c.l.b16 %v148
  %v553 = vunpack.c.l.b16 %v149
  %v554 = vunpack.c.l.b16 %v150
  %v555 = vunpack.c.l.b16 %v151
  %v556 = vunpack.c.l.b16 %v152
  %v557 = vunpack.c.l.b16 %v153
  %v558 = vunpack.c.l.b16 %v154
  %v559 = vunpack.c.l.b16 %v155
  %v560 = vunpack.c.l.b16 %v156
  %v561 = vunpack.c.l.b16 %v157
  %v562 = vunpack.c.l.b16 %v158
  %v563 = vunpack.c.l.b16 %v159
  %v564 = vunpack.c.l.b16 %v160
  %v565 = vunpack.c.l.b16 %v161
  %v566 = vunpack.c.l.b16 %v162
  %v567 = vunpack.c.l.b16 %v163
  %v568 = vunpack.c.l.b16 %v164
  %v569 = vunpack.c.l.b16 %v165
  %v570 = vunpack.c.l.b16 %v166
  %v571 = vpack.c.b16 %v444, %v443
  %v572 = vpack.c.b16 %v446, %v445
  %v573 = vpack.c.b16 %v448, %v447
  %v574 = vpack.c.b16 %v450, %v449
  %v575 = vpack.c.b16 %v452, %v451
  %v576 = vpack.c.b16 %v454, %v453
  %v577 = vpack.c.b16 %v456, %v455
  %v578 = vpack.c.b16 %v458, %v457
  %v579 = vpack.c.b16 %v460, %v459
  %v580 = vpack.c.b16 %v462, %v461
  %v581 = vpack.c.b16 %v464, %v463
  %v582 = vpack.c.b16 %v466, %v465
  %v583 = vpack.c.b16 %v468, %v467
  %v584 = vpack.c.b16 %v470, %v469
  %v585 = vpack.c.b16 %v472, %v471
  %v586 = vpack.c.b16 %v474, %v473
  %v587 = vpack.c.b16 %v476, %v475
  %v588 = vpack.c.b16 %v478, %v477
  %v589 = vpack.c.b16 %v480, %v479
  %v590 = vpack.c.b16 %v482, %v481
  %v591 = vpack.c.b16 %v484, %v483
  %v592 = vpack.c.b16 %v486, %v485
  %v593 = vpack.c.b16 %v488, %v487
  %v594 = vpack.c.b16 %v490, %v489
  %v595 = vpack.c.b16 %v492, %v491
  %v596 = vpack.c.b16 %v494, %v493
  %v597 = vpack.c.b16 %v496, %v495
  %v598 = vpack.c.b16 %v498, %v497
  %v599 = vpack.c.b16 %v500, %v499
  %v600 = vpack.c.b16 %v502, %v501
  %v601 = vpack.c.b16 %v504, %v503
  %v602 = vpack.c.b16 %v506, %v505
  %v603 = vpack.c.b16 %v508, %v507
  %v604 = vpack.c.b16 %v510, %v509
  %v605 = vpack.c.b16 %v512, %v511
  %v606 = vpack.c.b16 %v514, %v513
  %v607 = vpack.c.b16 %v516, %v515
  %v608 = vpack.c.b16 %v518, %v517
  %v609 = vpack.c.b16 %v520, %v519
  %v610 = vpack.c.b16 %v522, %v521
  %v611 = vpack.c.b16 %v524, %v523
  %v612 = vpack.c.b16 %v526, %v525
  %v613 = vpack.c.b16 %v528, %v527
  %v614 = vpack.c.b16 %v530, %v529
  %v615 = vpack.c.b16 %v532, %v531
  %v616 = vpack.c.b16 %v534, %v533
  %v617 = vpack.c.b16 %v536, %v535
  %v618 = vpack.c.b16 %v538, %v537
  %v619 = vpack.c.b16 %v540, %v539
  %v620 = vpack.c.b16 %v542, %v541
  %v621 = vpack.c.b16 %v544, %v543
  %v622 = vpack.c.b16 %v546, %v545
  %v623 = vpack.c.b16 %v548, %v547
  %v624 = vpack.c.b16 %v550, %v549
  %v625 = vpack.c.b16 %v552, %v551
  %v626 = vpack.c.b16 %v554, %v553
  %v627 = vpack.c.b16 %v556, %v555
  %v628 = vpack.c.b16 %v558, %v557
  %v629 = vpack.c.b16 %v560, %v559
  %v630 = vpack.c.b16 %v562, %v561
  %v631 = vpack.c.b16 %v564, %v563
  %v632 = vpack.c.b16 %v566, %v565
  %v633 = vpack.c.b16 %v568, %v567
  %v634 = vpack.c.b16 %v570, %v569
  %699 = vmatpush.bf16.msra.mxu0 %v578
  %700 = vmatpush.bf16.msra.mxu0 %v577
  %701 = vmatpush.bf16.msra.mxu0 %v576
  %702 = vmatpush.bf16.msra.mxu0 %v575
  %703 = vmatpush.bf16.msra.mxu0 %v574
  %704 = vmatpush.bf16.msra.mxu0 %v573
  %705 = vmatpush.bf16.msra.mxu0 %v572
  %706 = vmatpush.bf16.msra.mxu0 %v571
  %707 = vmatmul.bf16.gmra.mxu0 %v251
  %v708 = vpop.f32.mrf.mxu0
  %v709 = vadd.f32 0.0, %v708
  %v710 = vpop.f32.mrf.mxu0
  %v711 = vadd.f32 0.0, %v710
  %712 = vmatmul.bf16.gmra.mxu0 %v259
  %v713 = vpop.f32.mrf.mxu0
  %v714 = vadd.f32 0.0, %v713
  %v715 = vpop.f32.mrf.mxu0
  %v716 = vadd.f32 0.0, %v715
  %717 = vmatmul.bf16.gmra.mxu0 %v267
  %v718 = vpop.f32.mrf.mxu0
  %v719 = vadd.f32 0.0, %v718
  %v720 = vpop.f32.mrf.mxu0
  %v721 = vadd.f32 0.0, %v720
  %722 = vmatmul.bf16.gmra.mxu0 %v275
  %v723 = vpop.f32.mrf.mxu0
  %v724 = vadd.f32 0.0, %v723
  %v725 = vpop.f32.mrf.mxu0
  %726 = vdwg.mxu0
  %727 = vmatpush.bf16.msra.mxu0 %v586
  %728 = vmatpush.bf16.msra.mxu0 %v585
  %729 = vmatpush.bf16.msra.mxu0 %v584
  %730 = vmatpush.bf16.msra.mxu0 %v583
  %731 = vmatpush.bf16.msra.mxu0 %v582
  %732 = vmatpush.bf16.msra.mxu0 %v581
  %733 = vmatpush.bf16.msra.mxu0 %v580
  %734 = vmatpush.bf16.msra.mxu0 %v579
  %735 = vmatmul.bf16.gmra.mxu0 %v252
  %v736 = vpop.f32.mrf.mxu0
  %v737 = vadd.f32 %v709, %v736
  %v738 = vpop.f32.mrf.mxu0
  %v739 = vadd.f32 %v711, %v738
  %740 = vmatmul.bf16.gmra.mxu0 %v260
  %v741 = vpop.f32.mrf.mxu0
  %v742 = vadd.f32 %v714, %v741
  %v743 = vpop.f32.mrf.mxu0
  %v744 = vadd.f32 %v716, %v743
  %745 = vmatmul.bf16.gmra.mxu0 %v268
  %v746 = vpop.f32.mrf.mxu0
  %v747 = vadd.f32 %v719, %v746
  %v748 = vpop.f32.mrf.mxu0
  %v749 = vadd.f32 %v721, %v748
  %750 = vmatmul.bf16.gmra.mxu0 %v276
  %v751 = vpop.f32.mrf.mxu0
  %v752 = vadd.f32 %v724, %v751
  %v753 = vpop.f32.mrf.mxu0
  %754 = vdwg.mxu0
  %755 = vmatpush.bf16.msra.mxu0 %v594
  %756 = vmatpush.bf16.msra.mxu0 %v593
  %757 = vmatpush.bf16.msra.mxu0 %v592
  %758 = vmatpush.bf16.msra.mxu0 %v591
  %759 = vmatpush.bf16.msra.mxu0 %v590
  %760 = vmatpush.bf16.msra.mxu0 %v589
  %761 = vmatpush.bf16.msra.mxu0 %v588
  %762 = vmatpush.bf16.msra.mxu0 %v587
  %763 = vmatmul.bf16.gmra.mxu0 %v253
  %v764 = vpop.f32.mrf.mxu0
  %v765 = vadd.f32 %v737, %v764
  %v766 = vpop.f32.mrf.mxu0
  %v767 = vadd.f32 %v739, %v766
  %768 = vmatmul.bf16.gmra.mxu0 %v261
  %v769 = vpop.f32.mrf.mxu0
  %v770 = vadd.f32 %v742, %v769
  %v771 = vpop.f32.mrf.mxu0
  %v772 = vadd.f32 %v744, %v771
  %773 = vmatmul.bf16.gmra.mxu0 %v269
  %v774 = vpop.f32.mrf.mxu0
  %v775 = vadd.f32 %v747, %v774
  %v776 = vpop.f32.mrf.mxu0
  %v777 = vadd.f32 %v749, %v776
  %778 = vmatmul.bf16.gmra.mxu0 %v277
  %v779 = vpop.f32.mrf.mxu0
  %v780 = vadd.f32 %v752, %v779
  %v781 = vpop.f32.mrf.mxu0
  %782 = vdwg.mxu0
  %783 = vmatpush.bf16.msra.mxu0 %v602
  %784 = vmatpush.bf16.msra.mxu0 %v601
  %785 = vmatpush.bf16.msra.mxu0 %v600
  %786 = vmatpush.bf16.msra.mxu0 %v599
  %787 = vmatpush.bf16.msra.mxu0 %v598
  %788 = vmatpush.bf16.msra.mxu0 %v597
  %789 = vmatpush.bf16.msra.mxu0 %v596
  %790 = vmatpush.bf16.msra.mxu0 %v595
  %791 = vmatmul.bf16.gmra.mxu0 %v254
  %v792 = vpop.f32.mrf.mxu0
  %v793 = vadd.f32 %v765, %v792
  %v794 = vpop.f32.mrf.mxu0
  %v795 = vadd.f32 %v767, %v794
  %796 = vmatmul.bf16.gmra.mxu0 %v262
  %v797 = vpop.f32.mrf.mxu0
  %v798 = vadd.f32 %v770, %v797
  %v799 = vpop.f32.mrf.mxu0
  %v800 = vadd.f32 %v772, %v799
  %801 = vmatmul.bf16.gmra.mxu0 %v270
  %v802 = vpop.f32.mrf.mxu0
  %v803 = vadd.f32 %v775, %v802
  %v804 = vpop.f32.mrf.mxu0
  %v805 = vadd.f32 %v777, %v804
  %806 = vmatmul.bf16.gmra.mxu0 %v278
  %v807 = vpop.f32.mrf.mxu0
  %v808 = vadd.f32 %v780, %v807
  %v809 = vpop.f32.mrf.mxu0
  %810 = vdwg.mxu0
  %811 = vmatpush.bf16.msra.mxu0 %v610
  %812 = vmatpush.bf16.msra.mxu0 %v609
  %813 = vmatpush.bf16.msra.mxu0 %v608
  %814 = vmatpush.bf16.msra.mxu0 %v607
  %815 = vmatpush.bf16.msra.mxu0 %v606
  %816 = vmatpush.bf16.msra.mxu0 %v605
  %817 = vmatpush.bf16.msra.mxu0 %v604
  %818 = vmatpush.bf16.msra.mxu0 %v603
  %819 = vmatmul.bf16.gmra.mxu0 %v255
  %v820 = vpop.f32.mrf.mxu0
  %v821 = vadd.f32 %v793, %v820
  %v822 = vpop.f32.mrf.mxu0
  %v823 = vadd.f32 %v795, %v822
  %824 = vmatmul.bf16.gmra.mxu0 %v263
  %v825 = vpop.f32.mrf.mxu0
  %v826 = vadd.f32 %v798, %v825
  %v827 = vpop.f32.mrf.mxu0
  %v828 = vadd.f32 %v800, %v827
  %829 = vmatmul.bf16.gmra.mxu0 %v271
  %v830 = vpop.f32.mrf.mxu0
  %v831 = vadd.f32 %v803, %v830
  %v832 = vpop.f32.mrf.mxu0
  %v833 = vadd.f32 %v805, %v832
  %834 = vmatmul.bf16.gmra.mxu0 %v279
  %v835 = vpop.f32.mrf.mxu0
  %v836 = vadd.f32 %v808, %v835
  %v837 = vpop.f32.mrf.mxu0
  %838 = vdwg.mxu0
  %839 = vmatpush.bf16.msra.mxu0 %v618
  %840 = vmatpush.bf16.msra.mxu0 %v617
  %841 = vmatpush.bf16.msra.mxu0 %v616
  %842 = vmatpush.bf16.msra.mxu0 %v615
  %843 = vmatpush.bf16.msra.mxu0 %v614
  %844 = vmatpush.bf16.msra.mxu0 %v613
  %845 = vmatpush.bf16.msra.mxu0 %v612
  %846 = vmatpush.bf16.msra.mxu0 %v611
  %847 = vmatmul.bf16.gmra.mxu0 %v256
  %v848 = vpop.f32.mrf.mxu0
  %v849 = vadd.f32 %v821, %v848
  %v850 = vpop.f32.mrf.mxu0
  %v851 = vadd.f32 %v823, %v850
  %852 = vmatmul.bf16.gmra.mxu0 %v264
  %v853 = vpop.f32.mrf.mxu0
  %v854 = vadd.f32 %v826, %v853
  %v855 = vpop.f32.mrf.mxu0
  %v856 = vadd.f32 %v828, %v855
  %857 = vmatmul.bf16.gmra.mxu0 %v272
  %v858 = vpop.f32.mrf.mxu0
  %v859 = vadd.f32 %v831, %v858
  %v860 = vpop.f32.mrf.mxu0
  %v861 = vadd.f32 %v833, %v860
  %862 = vmatmul.bf16.gmra.mxu0 %v280
  %v863 = vpop.f32.mrf.mxu0
  %v864 = vadd.f32 %v836, %v863
  %v865 = vpop.f32.mrf.mxu0
  %866 = vdwg.mxu0
  %867 = vmatpush.bf16.msra.mxu0 %v626
  %868 = vmatpush.bf16.msra.mxu0 %v625
  %869 = vmatpush.bf16.msra.mxu0 %v624
  %870 = vmatpush.bf16.msra.mxu0 %v623
  %871 = vmatpush.bf16.msra.mxu0 %v622
  %872 = vmatpush.bf16.msra.mxu0 %v621
  %873 = vmatpush.bf16.msra.mxu0 %v620
  %874 = vmatpush.bf16.msra.mxu0 %v619
  %875 = vmatmul.bf16.gmra.mxu0 %v257
  %v876 = vpop.f32.mrf.mxu0
  %v877 = vadd.f32 %v849, %v876
  %v878 = vpop.f32.mrf.mxu0
  %v879 = vadd.f32 %v851, %v878
  %880 = vmatmul.bf16.gmra.mxu0 %v265
  %v881 = vpop.f32.mrf.mxu0
  %v882 = vadd.f32 %v854, %v881
  %v883 = vpop.f32.mrf.mxu0
  %v884 = vadd.f32 %v856, %v883
  %885 = vmatmul.bf16.gmra.mxu0 %v273
  %v886 = vpop.f32.mrf.mxu0
  %v887 = vadd.f32 %v859, %v886
  %v888 = vpop.f32.mrf.mxu0
  %v889 = vadd.f32 %v861, %v888
  %890 = vmatmul.bf16.gmra.mxu0 %v281
  %v891 = vpop.f32.mrf.mxu0
  %v892 = vadd.f32 %v864, %v891
  %v893 = vpop.f32.mrf.mxu0
  %894 = vdwg.mxu0
  %895 = vmatpush.bf16.msra.mxu0 %v634
  %896 = vmatpush.bf16.msra.mxu0 %v633
  %897 = vmatpush.bf16.msra.mxu0 %v632
  %898 = vmatpush.bf16.msra.mxu0 %v631
  %899 = vmatpush.bf16.msra.mxu0 %v630
  %900 = vmatpush.bf16.msra.mxu0 %v629
  %901 = vmatpush.bf16.msra.mxu0 %v628
  %902 = vmatpush.bf16.msra.mxu0 %v627
  %903 = vmatmul.bf16.gmra.mxu0 %v258
  %v904 = vpop.f32.mrf.mxu0
  %v905 = vadd.f32 %v877, %v904
  %v906 = vpop.f32.mrf.mxu0
  %v907 = vadd.f32 %v879, %v906
  %908 = vmatmul.bf16.gmra.mxu0 %v266
  %v909 = vpop.f32.mrf.mxu0
  %v910 = vadd.f32 %v882, %v909
  %v911 = vpop.f32.mrf.mxu0
  %v912 = vadd.f32 %v884, %v911
  %913 = vmatmul.bf16.gmra.mxu0 %v274
  %v914 = vpop.f32.mrf.mxu0
  %v915 = vadd.f32 %v887, %v914
  %v916 = vpop.f32.mrf.mxu0
  %v917 = vadd.f32 %v889, %v916
  %918 = vmatmul.bf16.gmra.mxu0 %v282
  %v919 = vpop.f32.mrf.mxu0
  %v920 = vadd.f32 %v892, %v919
  %v921 = vpop.f32.mrf.mxu0
  %922 = vdwg.mxu0
  %vm923 = vcmp.ge.f32.partialorder %v905, 0.0
  %vm924 = vcmp.ge.f32.partialorder %v907, 0.0
  %vm925 = vcmp.ge.f32.partialorder %v910, 0.0
  %vm926 = vcmp.ge.f32.partialorder %v912, 0.0
  %vm927 = vcmp.ge.f32.partialorder %v915, 0.0
  %vm928 = vcmp.ge.f32.partialorder %v917, 0.0
  %vm929 = vcmp.ge.f32.partialorder %v920, 0.0
  %v930 = vmul.f32 %v905, 0.2
  %v931 = vmul.f32 %v907, 0.2
  %v932 = vmul.f32 %v910, 0.2
  %v933 = vmul.f32 %v912, 0.2
  %v934 = vmul.f32 %v915, 0.2
  %v935 = vmul.f32 %v917, 0.2
  %v936 = vmul.f32 %v920, 0.2
  %v937 = vsel %vm923, %v905, %v930
  %v938 = vsel %vm924, %v907, %v931
  %v939 = vsel %vm925, %v910, %v932
  %v940 = vsel %vm926, %v912, %v933
  %v941 = vsel %vm927, %v915, %v934
  %v942 = vsel %vm928, %v917, %v935
  %v943 = vsel %vm929, %v920, %v936
  %v944 = vpack.c.bf16 %v937, %v937
  %v945 = vpack.c.bf16 %v938, %v938
  %v946 = vpack.c.bf16 %v939, %v939
  %v947 = vpack.c.bf16 %v940, %v940
  %v948 = vpack.c.bf16 %v941, %v941
  %v949 = vpack.c.bf16 %v942, %v942
  %v950 = vpack.c.bf16 %v943, %v943
  %951 = vst [vmem:[%s2] sm:$0xf] %v944
  %952 = vst [vmem:[%s2 + $0x4] sm:$0xf] %v945
  %953 = vst [vmem:[%s2 + $0x8] sm:$0xf] %v946
  %954 = vst [vmem:[%s2 + $0xc] sm:$0xf] %v947
  %955 = vst [vmem:[%s2 + $0x10] sm:$0xf] %v948
  %956 = vst [vmem:[%s2 + $0x14] sm:$0xf] %v949
  %957 = vst [vmem:[%s2 + $0x18] sm:$0x1] %v950
  // Predicated region
  $region10: #{output_discriminator.6} parent=0 // pred_check
    _
  $region11: #{output_discriminator.6} parent=0 // pred_check_branch
    %959 = sbr.rel (0) target = $region13
  $region12: #{output_discriminator.6} parent=0 // pred_region
    _
  $region13: #{output_discriminator.6} parent=0 // pred_fallthru
    _
  // Predicated region
  $region14: #{output_discriminator.6} parent=0 // pred_check
    _
  $region15: #{output_discriminator.6} parent=0 // pred_check_branch
    %961 = sbr.rel (0) target = $region17
  $region16: #{output_discriminator.6} parent=0 // pred_region
    _
  $region17: #{output_discriminator.6} parent=0 // pred_fallthru
    _

// kernel: output_discriminator.7
$region0: #{output_discriminator.7}
  #allocation0 [shape = 'u32[]', space=smem, size = 0x4, offset = 0x4, fixed_abs, tag = 'smem constant byte address 0x4 - core index']
  #allocation1 [shape = 'u32[72,128]{1,0:T(1,128)}', space=vmem, size = 0x9000, scoped, tag = 'internal scratch']
  #allocation2 [shape = 'f32[18,256]{1,0:T(8,128)}', space=vmem, size = 0x6000, scoped, tag = 'scratch operand']
  %s0 = inlined_call_operand.vmem [shape: bf16[18,2048], index: 0, kind: input, shape index: {}]
  %s1 = inlined_call_operand.vmem [shape: bf16[2048,256], index: 1, kind: input, shape index: {}]
  %s2 = inlined_call_operand.vmem [shape: bf16[18,256], index: 2, kind: output, shape index: {}]
  %s3 = sld [smem:[#allocation0]]
  $region72: #{output_discriminator.7} parent=0
    _
  %s5 = ssub.s32 1, %s3
  %s6 = scalar_select 0, %s5, %s3
  $region1: #{output_discriminator.7} parent=0
    #allocation3 [shape = 'u8[98304]{0}', space=vmem, size = 0x18000, scoped, tag = 'input window, operand 0']
    loop: start=0, step=1, limit=4
    $region2: #{output_discriminator.7} parent=1 // loop_pre_header
      _
    $region3: #{output_discriminator.7} parent=1 // loop_header
      %s8 = sphi 0, %s12
      %p9 = scmp.ge.s32.totalorder %s8, 4
      %s15 = sphi 0, %s34
      %s16 = sphi 0, %s30
      %s17 = sphi 0, %s26
      %s18 = sphi 0, %s15
      %s19 = sphi 0, %s16
      %s20 = sphi 0, %s17
      %s21 = sphi 0, %s18
      %s22 = sphi 0, %s19
      %s23 = sphi 0, %s20
      %s39 = sphi 0, %s41
      %s42 = sphi 0, %s39
      %s43 = sphi 0, %s42
      %s59 = sphi 0, %s43
      %s67 = sphi 0, %s69
      %s70 = sphi 0, %s67
      %s71 = sphi 0, %s70
      %s87 = sphi 0, %s71
      %s95 = sphi 0, %s97
      %s98 = sphi 0, %s95
      %s99 = sphi 0, %s98
      %s115 = sphi 0, %s99
    $region4: #{output_discriminator.7} parent=1 // loop_header_branch
      %11 = sbr.rel (%p9) target = $region8
    $region5: #{output_discriminator.7} parent=1 // loop_body
      %s13 = ssub.s32 %s8, 1
      %s14 = ssub.s32 %s8, 2
      %s24 = sadd.s32 1, %s17
      %p25 = scmp.ge.s32.totalorder %s24, 2
      %s26 = scalar_select %p25, 0, %s24
      %s27 = sadd.s32 1, %s16
      %s28 = scalar_select %p25, %s27, %s16
      %p29 = scmp.ge.s32.totalorder %s28, 1
      %s30 = scalar_select %p29, 0, %s28
      %s31 = sadd.s32 1, %s15
      %s32 = scalar_select %p29, %s31, %s15
      %p33 = scmp.ge.s32.totalorder %s32, 1
      %s34 = scalar_select %p33, 0, %s32
      %s35 = ssub.s32 %s15, %s34
      %s36 = ssub.s32 %s17, %s26
      %s37 = sor.u32 %s35, %s36
      %p38 = scmp.eq.s32.totalorder %s37, 0
      %s40 = sadd.s32 %s39, 1
      %s41 = scalar_select %p38, %s39, %s40
      %p44 = pneg %p38
      %p45 = scmp.eq.s32.totalorder %s8, 1
      %p46 = por %p44, %p45
      %p47 = scmp.ne.s32.totalorder %s39, %s42
      %p48 = scmp.eq.s32.totalorder %s8, 0
      %p49 = por %p47, %p48
      %p50 = scmp.ne.s32.totalorder %s39, %s42
      %p51 = scmp.eq.s32.totalorder %s13, 1
      %p52 = por %p50, %p51
      %p53 = scmp.ne.s32.totalorder %s42, %s43
      %p54 = scmp.eq.s32.totalorder %s13, 0
      %p55 = por %p53, %p54
      %p56 = scmp.ne.s32.totalorder %s42, %s43
      %p57 = scmp.eq.s32.totalorder %s14, 1
      %p58 = por %p56, %p57
      %p60 = scmp.ne.s32.totalorder %s43, %s59
      %p61 = scmp.eq.s32.totalorder %s14, 0
      %p62 = por %p60, %p61
      %s63 = ssub.s32 %s17, %s26
      %s64 = ssub.s32 %s16, %s30
      %s65 = sor.u32 %s63, %s64
      %p66 = scmp.eq.s32.totalorder %s65, 0
      %s68 = sadd.s32 %s67, 1
      %s69 = scalar_select %p66, %s67, %s68
      %p72 = pneg %p66
      %p73 = scmp.eq.s32.totalorder %s8, 1
      %p74 = por %p72, %p73
      %p75 = scmp.ne.s32.totalorder %s67, %s70
      %p76 = scmp.eq.s32.totalorder %s8, 0
      %p77 = por %p75, %p76
      %p78 = scmp.ne.s32.totalorder %s67, %s70
      %p79 = scmp.eq.s32.totalorder %s13, 1
      %p80 = por %p78, %p79
      %p81 = scmp.ne.s32.totalorder %s70, %s71
      %p82 = scmp.eq.s32.totalorder %s13, 0
      %p83 = por %p81, %p82
      %p84 = scmp.ne.s32.totalorder %s70, %s71
      %p85 = scmp.eq.s32.totalorder %s14, 1
      %p86 = por %p84, %p85
      %p88 = scmp.ne.s32.totalorder %s71, %s87
      %p89 = scmp.eq.s32.totalorder %s14, 0
      %p90 = por %p88, %p89
      %s91 = ssub.s32 %s15, %s34
      %s92 = ssub.s32 %s16, %s30
      %s93 = sor.u32 %s91, %s92
      %p94 = scmp.eq.s32.totalorder %s93, 0
      %s96 = sadd.s32 %s95, 1
      %s97 = scalar_select %p94, %s95, %s96
      %p100 = pneg %p94
      %p101 = scmp.eq.s32.totalorder %s8, 1
      %p102 = por %p100, %p101
      %p103 = scmp.ne.s32.totalorder %s95, %s98
      %p104 = scmp.eq.s32.totalorder %s8, 0
      %p105 = por %p103, %p104
      %p106 = scmp.ne.s32.totalorder %s95, %s98
      %p107 = scmp.eq.s32.totalorder %s13, 1
      %p108 = por %p106, %p107
      %p109 = scmp.ne.s32.totalorder %s98, %s99
      %p110 = scmp.eq.s32.totalorder %s13, 0
      %p111 = por %p109, %p110
      %p112 = scmp.ne.s32.totalorder %s98, %s99
      %p113 = scmp.eq.s32.totalorder %s14, 1
      %p114 = por %p112, %p113
      %p116 = scmp.ne.s32.totalorder %s99, %s115
      %p117 = scmp.eq.s32.totalorder %s14, 0
      %p118 = por %p116, %p117
      %p119 = scmp.le.s32.totalorder 1, %s8
      %p120 = scmp.lt.s32.totalorder %s8, 3
      %p121 = pnand %p119, %p120
      %p122 = pneg %p121
      // Predicated region
      $region9: #{output_discriminator.7} parent=5 // pred_check
        _
      $region10: #{output_discriminator.7} parent=5 // pred_check_branch
        %124 = sbr.rel (%p121) target = $region12
      $region11: #{output_discriminator.7} parent=5 // pred_region
        %s125 = ssub.s32 %s8, 1
      $region12: #{output_discriminator.7} parent=5 // pred_fallthru
        _
      %p126 = scmp.lt.s32.totalorder %s8, 2
      // Predicated region
      $region13: #{output_discriminator.7} parent=5 // pred_check
        %p127 = pneg %p126
      $region14: #{output_discriminator.7} parent=5 // pred_check_branch
        %129 = sbr.rel (%p127) target = $region16
      $region15: #{output_discriminator.7} parent=5 // pred_region
        // Predicated region
        $region17: #{output_discriminator.7} parent=15 // pred_check
          %p130 = pneg %p49
        $region18: #{output_discriminator.7} parent=15 // pred_check_branch
          %132 = sbr.rel (%p130) target = $region20
        $region19: #{output_discriminator.7} parent=15 // pred_region
          %s133 = sand.u32 %s39, 1
          %s134 = sand.u32 %s39, 1
          %s135 = smul.addr %s134, 96
          %s136 = scalar_lea.vmem [#allocation3], %s135
          %s137 = smul.u32 3, %s15
          %s138 = smul.u32 8, %s17
          %s139 = smul.addr %s137, 16
          %s140 = sadd.s32 %s138, %s139
          %s141 = smul.addr %s140, 4
          %s142 = scalar_lea.vmem %s0, %s141
          // Predicated region
          $region21: #{output_discriminator.7} parent=19 // pred_check
            _
          $region22: #{output_discriminator.7} parent=19 // pred_check_branch
            %144 = sbr.rel (0) target = $region24
          $region23: #{output_discriminator.7} parent=19 // pred_region
            // Predicated region
            $region25: #{output_discriminator.7} parent=23 // pred_check
              _
            $region26: #{output_discriminator.7} parent=23 // pred_check_branch
              %146 = sbr.rel (0) target = $region28
            $region27: #{output_discriminator.7} parent=23 // pred_region
              loop: start=0, step=1, limit=1
              $region29: #{output_discriminator.7} parent=27 // loop_pre_header
                _
              $region30: #{output_discriminator.7} parent=27 // loop_header
                %s148 = sphi 0, %s152
                %p149 = scmp.ge.s32.totalorder %s148, 1
                %s153 = sphi %s142, %s142
                %s154 = sphi %s136, %s136
              $region31: #{output_discriminator.7} parent=27 // loop_header_branch
                %151 = sbr.rel (%p149) target = $region35
              $region32: #{output_discriminator.7} parent=27 // loop_body
                %v155 = vld [vmem:[%s153] sm:$0xff]
                %156 = vst [vmem:[%s154] sm:$0xff] %v155
                %v157 = vld [vmem:[%s153 + $0x8] sm:$0xff]
                %158 = vst [vmem:[%s154 + $0x8] sm:$0xff] %v157
                %v159 = vld [vmem:[%s153 + $0x10] sm:$0xff]
                %160 = vst [vmem:[%s154 + $0x10] sm:$0xff] %v159
                %v161 = vld [vmem:[%s153 + $0x18] sm:$0xff]
                %162 = vst [vmem:[%s154 + $0x18] sm:$0xff] %v161
                %v163 = vld [vmem:[%s153 + $0x40] sm:$0xff]
                %164 = vst [vmem:[%s154 + $0x20] sm:$0xff] %v163
                %v165 = vld [vmem:[%s153 + $0x48] sm:$0xff]
                %166 = vst [vmem:[%s154 + $0x28] sm:$0xff] %v165
                %v167 = vld [vmem:[%s153 + $0x50] sm:$0xff]
                %168 = vst [vmem:[%s154 + $0x30] sm:$0xff] %v167
                %v169 = vld [vmem:[%s153 + $0x58] sm:$0xff]
                %170 = vst [vmem:[%s154 + $0x38] sm:$0xff] %v169
                %v171 = vld [vmem:[%s153 + $0x80] sm:$0xff]
                %172 = vst [vmem:[%s154 + $0x40] sm:$0xff] %v171
                %v173 = vld [vmem:[%s153 + $0x88] sm:$0xff]
                %174 = vst [vmem:[%s154 + $0x48] sm:$0xff] %v173
                %v175 = vld [vmem:[%s153 + $0x90] sm:$0xff]
                %176 = vst [vmem:[%s154 + $0x50] sm:$0xff] %v175
                %v177 = vld [vmem:[%s153 + $0x98] sm:$0xff]
                %178 = vst [vmem:[%s154 + $0x58] sm:$0xff] %v177
              $region33: #{output_discriminator.7} parent=27 // loop_footer
                %s152 = sadd.s32 1, %s148
              $region34: #{output_discriminator.7} parent=27 // loop_footer_branch
                %147 = sbr.rel target = $region30
              $region35: #{output_discriminator.7} parent=27 // loop_exit
                _
            $region28: #{output_discriminator.7} parent=23 // pred_fallthru
              _
            // Predicated region
            $region36: #{output_discriminator.7} parent=23 // pred_check
              _
            $region37: #{output_discriminator.7} parent=23 // pred_check_branch
              %180 = sbr.rel target = $region39
            $region38: #{output_discriminator.7} parent=23 // pred_region
              _
            $region39: #{output_discriminator.7} parent=23 // pred_fallthru
              _
          $region24: #{output_discriminator.7} parent=19 // pred_fallthru
            _
          %181 = vnop
        $region20: #{output_discriminator.7} parent=15 // pred_fallthru
          _
        // Predicated region
        $region40: #{output_discriminator.7} parent=15 // pred_check
          %p182 = pneg %p77
        $region41: #{output_discriminator.7} parent=15 // pred_check_branch
          %184 = sbr.rel (%p182) target = $region43
        $region42: #{output_discriminator.7} parent=15 // pred_region
          %s185 = smul.u32 128, %s17
          %s186 = smul.u32 2, %s16
          %p187 = scmp.lt.s32.totalorder %s185, 255
          %s188 = scalar_select %p187, %s185, 255
          %p189 = scmp.lt.s32.totalorder %s186, 1
          %s190 = scalar_select %p189, %s186, 1
          %s191 = smul.addr %s188, 2
          %s192 = sadd.s32 %s190, %s191
          %s193 = smul.addr %s192, 4
          %s194 = scalar_lea.vmem %s1, %s193
          %s195 = smul.u32 128, %s17
          %s196 = smul.u32 2, %s16
        $region43: #{output_discriminator.7} parent=15 // pred_fallthru
          _
      $region16: #{output_discriminator.7} parent=5 // pred_fallthru
        _
      %p197 = scmp.le.s32.totalorder 1, %s8
      %p198 = scmp.lt.s32.totalorder %s8, 3
      %p199 = pnand %p197, %p198
      %p200 = pneg %p199
      // Predicated region
      $region44: #{output_discriminator.7} parent=5 // pred_check
        _
      $region45: #{output_discriminator.7} parent=5 // pred_check_branch
        %202 = sbr.rel (%p199) target = $region47
      $region46: #{output_discriminator.7} parent=5 // pred_region
        %s203 = ssub.s32 %s8, 1
        %s204 = sand.u32 %s42, 1
        %s205 = sand.u32 %s42, 1
        %s206 = smul.addr %s205, 96
        %s207 = scalar_lea.vmem [#allocation3], %s206
        // Predicated region
        $region48: #{output_discriminator.7} parent=46 // pred_check
          %p208 = pneg %p55
        $region49: #{output_discriminator.7} parent=46 // pred_check_branch
          %210 = sbr.rel (%p208) target = $region51
        $region50: #{output_discriminator.7} parent=46 // pred_region
          _
        $region51: #{output_discriminator.7} parent=46 // pred_fallthru
          _
        %s211 = sand.u32 %s42, 1
        %s212 = sand.u32 %s42, 1
        %s213 = smul.addr %s212, 96
        %s214 = scalar_lea.vmem [#allocation3], %s213
        %p215 = pneg %p55
        %p216 = pneg %p52
        %s217 = smul.u32 128, %s20
        %s218 = smul.u32 2, %s19
        %p219 = scmp.lt.s32.totalorder %s217, 255
        %s220 = scalar_select %p219, %s217, 255
        %p221 = scmp.lt.s32.totalorder %s218, 1
        %s222 = scalar_select %p221, %s218, 1
        %s223 = smul.addr %s220, 2
        %s224 = sadd.s32 %s222, %s223
        %s225 = smul.addr %s224, 4
        %s226 = scalar_lea.vmem %s1, %s225
        %p227 = pneg %p83
        %p228 = pneg %p80
        %p229 = pneg %p111
        %p230 = pneg %p108
        %s231 = smul.u32 3, %s18
        %s232 = smul.u32 2, %s19
        %p233 = scmp.lt.s32.totalorder %s231, 2
        %s234 = scalar_select %p233, %s231, 2
        %p235 = scmp.lt.s32.totalorder %s232, 1
        %s236 = scalar_select %p235, %s232, 1
        %s237 = smul.addr %s234, 2
        %s238 = sadd.s32 %s236, %s237
        %s239 = smul.addr %s238, 4
        %s240 = scalar_lea.vmem %s2, %s239
        %s241 = smul.u32 3, %s18
        %s242 = smul.u32 8, %s20
        %s243 = smul.u32 128, %s20
        %s244 = smul.u32 2, %s19
        %p245 = scmp.lt.s32.totalorder %s243, 255
        %s246 = scalar_select %p245, %s243, 255
        %p247 = scmp.lt.s32.totalorder %s244, 1
        %s248 = scalar_select %p247, %s244, 1
        %s249 = smul.addr %s246, 2
        %s250 = sadd.s32 %s248, %s249
        %s251 = smul.addr %s250, 4
        %s252 = scalar_lea.vmem %s1, %s251
        %s253 = smul.u32 128, %s20
        %s254 = smul.u32 2, %s19
        %s255 = smul.u32 3, %s18
        %s256 = smul.u32 2, %s19
        %p257 = scmp.lt.s32.totalorder %s255, 2
        %s258 = scalar_select %p257, %s255, 2
        %p259 = scmp.lt.s32.totalorder %s256, 1
        %s260 = scalar_select %p259, %s256, 1
        %s261 = smul.addr %s258, 2
        %s262 = sadd.s32 %s260, %s261
        %s263 = smul.addr %s262, 4
        %s264 = scalar_lea.vmem %s2, %s263
        %s265 = smul.u32 3, %s18
        %s266 = smul.u32 2, %s19
        %p267 = scmp.eq.s32.totalorder %s20, 0
        // Predicated region
        $region52: #{output_discriminator.7} parent=46 // pred_check
          %p268 = pneg %p267
        $region53: #{output_discriminator.7} parent=46 // pred_check_branch
          %270 = sbr.rel (%p268) target = $region55
        $region54: #{output_discriminator.7} parent=46 // pred_region
          %271 = vst [vmem:[#allocation2] sm:$0xff] 0.0
          %272 = vst [vmem:[#allocation2 + $0x8] sm:$0xff] 0.0
          %273 = vst [vmem:[#allocation2 + $0x10] sm:$0xff] 0.0
          %274 = vst [vmem:[#allocation2 + $0x18] sm:$0xff] 0.0
          %275 = vst [vmem:[#allocation2 + $0x20] sm:$0x3] 0.0
          %276 = vst [vmem:[#allocation2 + $0x28] sm:$0x3] 0.0
        $region55: #{output_discriminator.7} parent=46 // pred_fallthru
          _
        %v277 = vld [vmem:[#allocation2] sm:$0xff]
        %v278 = vld [vmem:[#allocation2 + $0x8] sm:$0xff]
        %v279 = vld [vmem:[#allocation2 + $0x10] sm:$0xff]
        %v280 = vld [vmem:[#allocation2 + $0x18] sm:$0xff]
        %v281 = vld [vmem:[#allocation2 + $0x20] sm:$0x3]
        %v282 = vld [vmem:[#allocation2 + $0x28] sm:$0x3]
        %v283 = vld [vmem:[%s207] sm:$0xff]
        %v284 = vld [vmem:[%s207 + $0x8] sm:$0xff]
        %v285 = vld [vmem:[%s207 + $0x10] sm:$0xff]
        %v286 = vld [vmem:[%s207 + $0x18] sm:$0xff]
        %v287 = vld [vmem:[%s207 + $0x20] sm:$0xff]
        %v288 = vld [vmem:[%s207 + $0x28] sm:$0xff]
        %v289 = vld [vmem:[%s207 + $0x30] sm:$0xff]
        %v290 = vld [vmem:[%s207 + $0x38] sm:$0xff]
        %v291 = vld [vmem:[%s207 + $0x40] sm:$0x11]
        %v292 = vld [vmem:[%s207 + $0x48] sm:$0x11]
        %v293 = vld [vmem:[%s207 + $0x50] sm:$0x11]
        %v294 = vld [vmem:[%s207 + $0x58] sm:$0x11]
        %v295 = vld [vmem:[%s252] sm:$0xff]
        %v296 = vld [vmem:[%s252 + $0x8] sm:$0xff]
        %v297 = vld [vmem:[%s252 + $0x10] sm:$0xff]
        %v298 = vld [vmem:[%s252 + $0x18] sm:$0xff]
        %v299 = vld [vmem:[%s252 + $0x20] sm:$0xff]
        %v300 = vld [vmem:[%s252 + $0x28] sm:$0xff]
        %v301 = vld [vmem:[%s252 + $0x30] sm:$0xff]
        %v302 = vld [vmem:[%s252 + $0x38] sm:$0xff]
        %v303 = vld [vmem:[%s252 + $0x40] sm:$0xff]
        %v304 = vld [vmem:[%s252 + $0x48] sm:$0xff]
        %v305 = vld [vmem:[%s252 + $0x50] sm:$0xff]
        %v306 = vld [vmem:[%s252 + $0x58] sm:$0xff]
        %v307 = vld [vmem:[%s252 + $0x60] sm:$0xff]
        %v308 = vld [vmem:[%s252 + $0x68] sm:$0xff]
        %v309 = vld [vmem:[%s252 + $0x70] sm:$0xff]
        %v310 = vld [vmem:[%s252 + $0x78] sm:$0xff]
        %v311 = vld [vmem:[%s252 + $0x80] sm:$0xff]
        %v312 = vld [vmem:[%s252 + $0x88] sm:$0xff]
        %v313 = vld [vmem:[%s252 + $0x90] sm:$0xff]
        %v314 = vld [vmem:[%s252 + $0x98] sm:$0xff]
        %v315 = vld [vmem:[%s252 + $0xa0] sm:$0xff]
        %v316 = vld [vmem:[%s252 + $0xa8] sm:$0xff]
        %v317 = vld [vmem:[%s252 + $0xb0] sm:$0xff]
        %v318 = vld [vmem:[%s252 + $0xb8] sm:$0xff]
        %v319 = vld [vmem:[%s252 + $0xc0] sm:$0xff]
        %v320 = vld [vmem:[%s252 + $0xc8] sm:$0xff]
        %v321 = vld [vmem:[%s252 + $0xd0] sm:$0xff]
        %v322 = vld [vmem:[%s252 + $0xd8] sm:$0xff]
        %v323 = vld [vmem:[%s252 + $0xe0] sm:$0xff]
        %v324 = vld [vmem:[%s252 + $0xe8] sm:$0xff]
        %v325 = vld [vmem:[%s252 + $0xf0] sm:$0xff]
        %v326 = vld [vmem:[%s252 + $0xf8] sm:$0xff]
        %v327 = vld [vmem:[%s252 + $0x100] sm:$0xff]
        %v328 = vld [vmem:[%s252 + $0x108] sm:$0xff]
        %v329 = vld [vmem:[%s252 + $0x110] sm:$0xff]
        %v330 = vld [vmem:[%s252 + $0x118] sm:$0xff]
        %v331 = vld [vmem:[%s252 + $0x120] sm:$0xff]
        %v332 = vld [vmem:[%s252 + $0x128] sm:$0xff]
        %v333 = vld [vmem:[%s252 + $0x130] sm:$0xff]
        %v334 = vld [vmem:[%s252 + $0x138] sm:$0xff]
        %v335 = vld [vmem:[%s252 + $0x140] sm:$0xff]
        %v336 = vld [vmem:[%s252 + $0x148] sm:$0xff]
        %v337 = vld [vmem:[%s252 + $0x150] sm:$0xff]
        %v338 = vld [vmem:[%s252 + $0x158] sm:$0xff]
        %v339 = vld [vmem:[%s252 + $0x160] sm:$0xff]
        %v340 = vld [vmem:[%s252 + $0x168] sm:$0xff]
        %v341 = vld [vmem:[%s252 + $0x170] sm:$0xff]
        %v342 = vld [vmem:[%s252 + $0x178] sm:$0xff]
        %v343 = vld [vmem:[%s252 + $0x180] sm:$0xff]
        %v344 = vld [vmem:[%s252 + $0x188] sm:$0xff]
        %v345 = vld [vmem:[%s252 + $0x190] sm:$0xff]
        %v346 = vld [vmem:[%s252 + $0x198] sm:$0xff]
        %v347 = vld [vmem:[%s252 + $0x1a0] sm:$0xff]
        %v348 = vld [vmem:[%s252 + $0x1a8] sm:$0xff]
        %v349 = vld [vmem:[%s252 + $0x1b0] sm:$0xff]
        %v350 = vld [vmem:[%s252 + $0x1b8] sm:$0xff]
        %v351 = vld [vmem:[%s252 + $0x1c0] sm:$0xff]
        %v352 = vld [vmem:[%s252 + $0x1c8] sm:$0xff]
        %v353 = vld [vmem:[%s252 + $0x1d0] sm:$0xff]
        %v354 = vld [vmem:[%s252 + $0x1d8] sm:$0xff]
        %v355 = vld [vmem:[%s252 + $0x1e0] sm:$0xff]
        %v356 = vld [vmem:[%s252 + $0x1e8] sm:$0xff]
        %v357 = vld [vmem:[%s252 + $0x1f0] sm:$0xff]
        %v358 = vld [vmem:[%s252 + $0x1f8] sm:$0xff]
        %v359 = vld [vmem:[%s252 + $0x200] sm:$0xff]
        %v360 = vld [vmem:[%s252 + $0x208] sm:$0xff]
        %v361 = vld [vmem:[%s252 + $0x210] sm:$0xff]
        %v362 = vld [vmem:[%s252 + $0x218] sm:$0xff]
        %v363 = vld [vmem:[%s252 + $0x220] sm:$0xff]
        %v364 = vld [vmem:[%s252 + $0x228] sm:$0xff]
        %v365 = vld [vmem:[%s252 + $0x230] sm:$0xff]
        %v366 = vld [vmem:[%s252 + $0x238] sm:$0xff]
        %v367 = vld [vmem:[%s252 + $0x240] sm:$0xff]
        %v368 = vld [vmem:[%s252 + $0x248] sm:$0xff]
        %v369 = vld [vmem:[%s252 + $0x250] sm:$0xff]
        %v370 = vld [vmem:[%s252 + $0x258] sm:$0xff]
        %v371 = vld [vmem:[%s252 + $0x260] sm:$0xff]
        %v372 = vld [vmem:[%s252 + $0x268] sm:$0xff]
        %v373 = vld [vmem:[%s252 + $0x270] sm:$0xff]
        %v374 = vld [vmem:[%s252 + $0x278] sm:$0xff]
        %v375 = vld [vmem:[%s252 + $0x280] sm:$0xff]
        %v376 = vld [vmem:[%s252 + $0x288] sm:$0xff]
        %v377 = vld [vmem:[%s252 + $0x290] sm:$0xff]
        %v378 = vld [vmem:[%s252 + $0x298] sm:$0xff]
        %v379 = vld [vmem:[%s252 + $0x2a0] sm:$0xff]
        %v380 = vld [vmem:[%s252 + $0x2a8] sm:$0xff]
        %v381 = vld [vmem:[%s252 + $0x2b0] sm:$0xff]
        %v382 = vld [vmem:[%s252 + $0x2b8] sm:$0xff]
        %v383 = vld [vmem:[%s252 + $0x2c0] sm:$0xff]
        %v384 = vld [vmem:[%s252 + $0x2c8] sm:$0xff]
        %v385 = vld [vmem:[%s252 + $0x2d0] sm:$0xff]
        %v386 = vld [vmem:[%s252 + $0x2d8] sm:$0xff]
        %v387 = vld [vmem:[%s252 + $0x2e0] sm:$0xff]
        %v388 = vld [vmem:[%s252 + $0x2e8] sm:$0xff]
        %v389 = vld [vmem:[%s252 + $0x2f0] sm:$0xff]
        %v390 = vld [vmem:[%s252 + $0x2f8] sm:$0xff]
        %v391 = vld [vmem:[%s252 + $0x300] sm:$0xff]
        %v392 = vld [vmem:[%s252 + $0x308] sm:$0xff]
        %v393 = vld [vmem:[%s252 + $0x310] sm:$0xff]
        %v394 = vld [vmem:[%s252 + $0x318] sm:$0xff]
        %v395 = vld [vmem:[%s252 + $0x320] sm:$0xff]
        %v396 = vld [vmem:[%s252 + $0x328] sm:$0xff]
        %v397 = vld [vmem:[%s252 + $0x330] sm:$0xff]
        %v398 = vld [vmem:[%s252 + $0x338] sm:$0xff]
        %v399 = vld [vmem:[%s252 + $0x340] sm:$0xff]
        %v400 = vld [vmem:[%s252 + $0x348] sm:$0xff]
        %v401 = vld [vmem:[%s252 + $0x350] sm:$0xff]
        %v402 = vld [vmem:[%s252 + $0x358] sm:$0xff]
        %v403 = vld [vmem:[%s252 + $0x360] sm:$0xff]
        %v404 = vld [vmem:[%s252 + $0x368] sm:$0xff]
        %v405 = vld [vmem:[%s252 + $0x370] sm:$0xff]
        %v406 = vld [vmem:[%s252 + $0x378] sm:$0xff]
        %v407 = vld [vmem:[%s252 + $0x380] sm:$0xff]
        %v408 = vld [vmem:[%s252 + $0x388] sm:$0xff]
        %v409 = vld [vmem:[%s252 + $0x390] sm:$0xff]
        %v410 = vld [vmem:[%s252 + $0x398] sm:$0xff]
        %v411 = vld [vmem:[%s252 + $0x3a0] sm:$0xff]
        %v412 = vld [vmem:[%s252 + $0x3a8] sm:$0xff]
        %v413 = vld [vmem:[%s252 + $0x3b0] sm:$0xff]
        %v414 = vld [vmem:[%s252 + $0x3b8] sm:$0xff]
        %v415 = vld [vmem:[%s252 + $0x3c0] sm:$0xff]
        %v416 = vld [vmem:[%s252 + $0x3c8] sm:$0xff]
        %v417 = vld [vmem:[%s252 + $0x3d0] sm:$0xff]
        %v418 = vld [vmem:[%s252 + $0x3d8] sm:$0xff]
        %v419 = vld [vmem:[%s252 + $0x3e0] sm:$0xff]
        %v420 = vld [vmem:[%s252 + $0x3e8] sm:$0xff]
        %v421 = vld [vmem:[%s252 + $0x3f0] sm:$0xff]
        %v422 = vld [vmem:[%s252 + $0x3f8] sm:$0xff]
        %v435 = vunpack.c.l.b16 %v283
        %v436 = vunpack.c.h.b16 %v283
        %v437 = vunpack.c.l.b16 %v284
        %v438 = vunpack.c.h.b16 %v284
        %v439 = vunpack.c.l.b16 %v285
        %v440 = vunpack.c.h.b16 %v285
        %v441 = vunpack.c.l.b16 %v286
        %v442 = vunpack.c.h.b16 %v286
        %v443 = vunpack.c.l.b16 %v287
        %v444 = vunpack.c.h.b16 %v287
        %v445 = vunpack.c.l.b16 %v288
        %v446 = vunpack.c.h.b16 %v288
        %v447 = vunpack.c.l.b16 %v289
        %v448 = vunpack.c.h.b16 %v289
        %v449 = vunpack.c.l.b16 %v290
        %v450 = vunpack.c.h.b16 %v290
        %v451 = vunpack.c.l.b16 %v291
        %v452 = vunpack.c.h.b16 %v291
        %v453 = vunpack.c.l.b16 %v292
        %v454 = vunpack.c.h.b16 %v292
        %v455 = vunpack.c.l.b16 %v293
        %v456 = vunpack.c.h.b16 %v293
        %v457 = vunpack.c.l.b16 %v294
        %v458 = vunpack.c.h.b16 %v294
        %v459 = vpack.c.b16 %v443, %v435
        %v460 = vpack.c.b16 %v444, %v436
        %v461 = vpack.c.b16 %v445, %v437
        %v462 = vpack.c.b16 %v446, %v438
        %v463 = vpack.c.b16 %v447, %v439
        %v464 = vpack.c.b16 %v448, %v440
        %v465 = vpack.c.b16 %v449, %v441
        %v466 = vpack.c.b16 %v450, %v442
        %v467 = vpack.c.b16 %v451, %v451
        %v468 = vpack.c.b16 %v452, %v452
        %v469 = vpack.c.b16 %v453, %v453
        %v470 = vpack.c.b16 %v454, %v454
        %v471 = vpack.c.b16 %v455, %v455
        %v472 = vpack.c.b16 %v456, %v456
        %v473 = vpack.c.b16 %v457, %v457
        %v474 = vpack.c.b16 %v458, %v458
        %v619 = vunpack.c.l.b16 %v295
        %v620 = vunpack.c.h.b16 %v295
        %v621 = vunpack.c.l.b16 %v296
        %v622 = vunpack.c.h.b16 %v296
        %v623 = vunpack.c.l.b16 %v297
        %v624 = vunpack.c.h.b16 %v297
        %v625 = vunpack.c.l.b16 %v298
        %v626 = vunpack.c.h.b16 %v298
        %v627 = vunpack.c.l.b16 %v299
        %v628 = vunpack.c.h.b16 %v299
        %v629 = vunpack.c.l.b16 %v300
        %v630 = vunpack.c.h.b16 %v300
        %v631 = vunpack.c.l.b16 %v301
        %v632 = vunpack.c.h.b16 %v301
        %v633 = vunpack.c.l.b16 %v302
        %v634 = vunpack.c.h.b16 %v302
        %v635 = vunpack.c.l.b16 %v303
        %v636 = vunpack.c.h.b16 %v303
        %v637 = vunpack.c.l.b16 %v304
        %v638 = vunpack.c.h.b16 %v304
        %v639 = vunpack.c.l.b16 %v305
        %v640 = vunpack.c.h.b16 %v305
        %v641 = vunpack.c.l.b16 %v306
        %v642 = vunpack.c.h.b16 %v306
        %v643 = vunpack.c.l.b16 %v307
        %v644 = vunpack.c.h.b16 %v307
        %v645 = vunpack.c.l.b16 %v308
        %v646 = vunpack.c.h.b16 %v308
        %v647 = vunpack.c.l.b16 %v309
        %v648 = vunpack.c.h.b16 %v309
        %v649 = vunpack.c.l.b16 %v310
        %v650 = vunpack.c.h.b16 %v310
        %v651 = vunpack.c.l.b16 %v311
        %v652 = vunpack.c.h.b16 %v311
        %v653 = vunpack.c.l.b16 %v312
        %v654 = vunpack.c.h.b16 %v312
        %v655 = vunpack.c.l.b16 %v313
        %v656 = vunpack.c.h.b16 %v313
        %v657 = vunpack.c.l.b16 %v314
        %v658 = vunpack.c.h.b16 %v314
        %v659 = vunpack.c.l.b16 %v315
        %v660 = vunpack.c.h.b16 %v315
        %v661 = vunpack.c.l.b16 %v316
        %v662 = vunpack.c.h.b16 %v316
        %v663 = vunpack.c.l.b16 %v317
        %v664 = vunpack.c.h.b16 %v317
        %v665 = vunpack.c.l.b16 %v318
        %v666 = vunpack.c.h.b16 %v318
        %v667 = vunpack.c.l.b16 %v319
        %v668 = vunpack.c.h.b16 %v319
        %v669 = vunpack.c.l.b16 %v320
        %v670 = vunpack.c.h.b16 %v320
        %v671 = vunpack.c.l.b16 %v321
        %v672 = vunpack.c.h.b16 %v321
        %v673 = vunpack.c.l.b16 %v322
        %v674 = vunpack.c.h.b16 %v322
        %v675 = vunpack.c.l.b16 %v323
        %v676 = vunpack.c.h.b16 %v323
        %v677 = vunpack.c.l.b16 %v324
        %v678 = vunpack.c.h.b16 %v324
        %v679 = vunpack.c.l.b16 %v325
        %v680 = vunpack.c.h.b16 %v325
        %v681 = vunpack.c.l.b16 %v326
        %v682 = vunpack.c.h.b16 %v326
        %v683 = vunpack.c.l.b16 %v327
        %v684 = vunpack.c.h.b16 %v327
        %v685 = vunpack.c.l.b16 %v328
        %v686 = vunpack.c.h.b16 %v328
        %v687 = vunpack.c.l.b16 %v329
        %v688 = vunpack.c.h.b16 %v329
        %v689 = vunpack.c.l.b16 %v330
        %v690 = vunpack.c.h.b16 %v330
        %v691 = vunpack.c.l.b16 %v331
        %v692 = vunpack.c.h.b16 %v331
        %v693 = vunpack.c.l.b16 %v332
        %v694 = vunpack.c.h.b16 %v332
        %v695 = vunpack.c.l.b16 %v333
        %v696 = vunpack.c.h.b16 %v333
        %v697 = vunpack.c.l.b16 %v334
        %v698 = vunpack.c.h.b16 %v334
        %v699 = vunpack.c.l.b16 %v335
        %v700 = vunpack.c.h.b16 %v335
        %v701 = vunpack.c.l.b16 %v336
        %v702 = vunpack.c.h.b16 %v336
        %v703 = vunpack.c.l.b16 %v337
        %v704 = vunpack.c.h.b16 %v337
        %v705 = vunpack.c.l.b16 %v338
        %v706 = vunpack.c.h.b16 %v338
        %v707 = vunpack.c.l.b16 %v339
        %v708 = vunpack.c.h.b16 %v339
        %v709 = vunpack.c.l.b16 %v340
        %v710 = vunpack.c.h.b16 %v340
        %v711 = vunpack.c.l.b16 %v341
        %v712 = vunpack.c.h.b16 %v341
        %v713 = vunpack.c.l.b16 %v342
        %v714 = vunpack.c.h.b16 %v342
        %v715 = vunpack.c.l.b16 %v343
        %v716 = vunpack.c.h.b16 %v343
        %v717 = vunpack.c.l.b16 %v344
        %v718 = vunpack.c.h.b16 %v344
        %v719 = vunpack.c.l.b16 %v345
        %v720 = vunpack.c.h.b16 %v345
        %v721 = vunpack.c.l.b16 %v346
        %v722 = vunpack.c.h.b16 %v346
        %v723 = vunpack.c.l.b16 %v347
        %v724 = vunpack.c.h.b16 %v347
        %v725 = vunpack.c.l.b16 %v348
        %v726 = vunpack.c.h.b16 %v348
        %v727 = vunpack.c.l.b16 %v349
        %v728 = vunpack.c.h.b16 %v349
        %v729 = vunpack.c.l.b16 %v350
        %v730 = vunpack.c.h.b16 %v350
        %v731 = vunpack.c.l.b16 %v351
        %v732 = vunpack.c.h.b16 %v351
        %v733 = vunpack.c.l.b16 %v352
        %v734 = vunpack.c.h.b16 %v352
        %v735 = vunpack.c.l.b16 %v353
        %v736 = vunpack.c.h.b16 %v353
        %v737 = vunpack.c.l.b16 %v354
        %v738 = vunpack.c.h.b16 %v354
        %v739 = vunpack.c.l.b16 %v355
        %v740 = vunpack.c.h.b16 %v355
        %v741 = vunpack.c.l.b16 %v356
        %v742 = vunpack.c.h.b16 %v356
        %v743 = vunpack.c.l.b16 %v357
        %v744 = vunpack.c.h.b16 %v357
        %v745 = vunpack.c.l.b16 %v358
        %v746 = vunpack.c.h.b16 %v358
        %v747 = vunpack.c.l.b16 %v359
        %v748 = vunpack.c.h.b16 %v359
        %v749 = vunpack.c.l.b16 %v360
        %v750 = vunpack.c.h.b16 %v360
        %v751 = vunpack.c.l.b16 %v361
        %v752 = vunpack.c.h.b16 %v361
        %v753 = vunpack.c.l.b16 %v362
        %v754 = vunpack.c.h.b16 %v362
        %v755 = vunpack.c.l.b16 %v363
        %v756 = vunpack.c.h.b16 %v363
        %v757 = vunpack.c.l.b16 %v364
        %v758 = vunpack.c.h.b16 %v364
        %v759 = vunpack.c.l.b16 %v365
        %v760 = vunpack.c.h.b16 %v365
        %v761 = vunpack.c.l.b16 %v366
        %v762 = vunpack.c.h.b16 %v366
        %v763 = vunpack.c.l.b16 %v367
        %v764 = vunpack.c.h.b16 %v367
        %v765 = vunpack.c.l.b16 %v368
        %v766 = vunpack.c.h.b16 %v368
        %v767 = vunpack.c.l.b16 %v369
        %v768 = vunpack.c.h.b16 %v369
        %v769 = vunpack.c.l.b16 %v370
        %v770 = vunpack.c.h.b16 %v370
        %v771 = vunpack.c.l.b16 %v371
        %v772 = vunpack.c.h.b16 %v371
        %v773 = vunpack.c.l.b16 %v372
        %v774 = vunpack.c.h.b16 %v372
        %v775 = vunpack.c.l.b16 %v373
        %v776 = vunpack.c.h.b16 %v373
        %v777 = vunpack.c.l.b16 %v374
        %v778 = vunpack.c.h.b16 %v374
        %v779 = vunpack.c.l.b16 %v375
        %v780 = vunpack.c.h.b16 %v375
        %v781 = vunpack.c.l.b16 %v376
        %v782 = vunpack.c.h.b16 %v376
        %v783 = vunpack.c.l.b16 %v377
        %v784 = vunpack.c.h.b16 %v377
        %v785 = vunpack.c.l.b16 %v378
        %v786 = vunpack.c.h.b16 %v378
        %v787 = vunpack.c.l.b16 %v379
        %v788 = vunpack.c.h.b16 %v379
        %v789 = vunpack.c.l.b16 %v380
        %v790 = vunpack.c.h.b16 %v380
        %v791 = vunpack.c.l.b16 %v381
        %v792 = vunpack.c.h.b16 %v381
        %v793 = vunpack.c.l.b16 %v382
        %v794 = vunpack.c.h.b16 %v382
        %v795 = vunpack.c.l.b16 %v383
        %v796 = vunpack.c.h.b16 %v383
        %v797 = vunpack.c.l.b16 %v384
        %v798 = vunpack.c.h.b16 %v384
        %v799 = vunpack.c.l.b16 %v385
        %v800 = vunpack.c.h.b16 %v385
        %v801 = vunpack.c.l.b16 %v386
        %v802 = vunpack.c.h.b16 %v386
        %v803 = vunpack.c.l.b16 %v387
        %v804 = vunpack.c.h.b16 %v387
        %v805 = vunpack.c.l.b16 %v388
        %v806 = vunpack.c.h.b16 %v388
        %v807 = vunpack.c.l.b16 %v389
        %v808 = vunpack.c.h.b16 %v389
        %v809 = vunpack.c.l.b16 %v390
        %v810 = vunpack.c.h.b16 %v390
        %v811 = vunpack.c.l.b16 %v391
        %v812 = vunpack.c.h.b16 %v391
        %v813 = vunpack.c.l.b16 %v392
        %v814 = vunpack.c.h.b16 %v392
        %v815 = vunpack.c.l.b16 %v393
        %v816 = vunpack.c.h.b16 %v393
        %v817 = vunpack.c.l.b16 %v394
        %v818 = vunpack.c.h.b16 %v394
        %v819 = vunpack.c.l.b16 %v395
        %v820 = vunpack.c.h.b16 %v395
        %v821 = vunpack.c.l.b16 %v396
        %v822 = vunpack.c.h.b16 %v396
        %v823 = vunpack.c.l.b16 %v397
        %v824 = vunpack.c.h.b16 %v397
        %v825 = vunpack.c.l.b16 %v398
        %v826 = vunpack.c.h.b16 %v398
        %v827 = vunpack.c.l.b16 %v399
        %v828 = vunpack.c.h.b16 %v399
        %v829 = vunpack.c.l.b16 %v400
        %v830 = vunpack.c.h.b16 %v400
        %v831 = vunpack.c.l.b16 %v401
        %v832 = vunpack.c.h.b16 %v401
        %v833 = vunpack.c.l.b16 %v402
        %v834 = vunpack.c.h.b16 %v402
        %v835 = vunpack.c.l.b16 %v403
        %v836 = vunpack.c.h.b16 %v403
        %v837 = vunpack.c.l.b16 %v404
        %v838 = vunpack.c.h.b16 %v404
        %v839 = vunpack.c.l.b16 %v405
        %v840 = vunpack.c.h.b16 %v405
        %v841 = vunpack.c.l.b16 %v406
        %v842 = vunpack.c.h.b16 %v406
        %v843 = vunpack.c.l.b16 %v407
        %v844 = vunpack.c.h.b16 %v407
        %v845 = vunpack.c.l.b16 %v408
        %v846 = vunpack.c.h.b16 %v408
        %v847 = vunpack.c.l.b16 %v409
        %v848 = vunpack.c.h.b16 %v409
        %v849 = vunpack.c.l.b16 %v410
        %v850 = vunpack.c.h.b16 %v410
        %v851 = vunpack.c.l.b16 %v411
        %v852 = vunpack.c.h.b16 %v411
        %v853 = vunpack.c.l.b16 %v412
        %v854 = vunpack.c.h.b16 %v412
        %v855 = vunpack.c.l.b16 %v413
        %v856 = vunpack.c.h.b16 %v413
        %v857 = vunpack.c.l.b16 %v414
        %v858 = vunpack.c.h.b16 %v414
        %v859 = vunpack.c.l.b16 %v415
        %v860 = vunpack.c.h.b16 %v415
        %v861 = vunpack.c.l.b16 %v416
        %v862 = vunpack.c.h.b16 %v416
        %v863 = vunpack.c.l.b16 %v417
        %v864 = vunpack.c.h.b16 %v417
        %v865 = vunpack.c.l.b16 %v418
        %v866 = vunpack.c.h.b16 %v418
        %v867 = vunpack.c.l.b16 %v419
        %v868 = vunpack.c.h.b16 %v419
        %v869 = vunpack.c.l.b16 %v420
        %v870 = vunpack.c.h.b16 %v420
        %v871 = vunpack.c.l.b16 %v421
        %v872 = vunpack.c.h.b16 %v421
        %v873 = vunpack.c.l.b16 %v422
        %v874 = vunpack.c.h.b16 %v422
        %v875 = vpack.c.b16 %v621, %v619
        %v876 = vpack.c.b16 %v622, %v620
        %v877 = vpack.c.b16 %v625, %v623
        %v878 = vpack.c.b16 %v626, %v624
        %v879 = vpack.c.b16 %v629, %v627
        %v880 = vpack.c.b16 %v630, %v628
        %v881 = vpack.c.b16 %v633, %v631
        %v882 = vpack.c.b16 %v634, %v632
        %v883 = vpack.c.b16 %v637, %v635
        %v884 = vpack.c.b16 %v638, %v636
        %v885 = vpack.c.b16 %v641, %v639
        %v886 = vpack.c.b16 %v642, %v640
        %v887 = vpack.c.b16 %v645, %v643
        %v888 = vpack.c.b16 %v646, %v644
        %v889 = vpack.c.b16 %v649, %v647
        %v890 = vpack.c.b16 %v650, %v648
        %v891 = vpack.c.b16 %v653, %v651
        %v892 = vpack.c.b16 %v654, %v652
        %v893 = vpack.c.b16 %v657, %v655
        %v894 = vpack.c.b16 %v658, %v656
        %v895 = vpack.c.b16 %v661, %v659
        %v896 = vpack.c.b16 %v662, %v660
        %v897 = vpack.c.b16 %v665, %v663
        %v898 = vpack.c.b16 %v666, %v664
        %v899 = vpack.c.b16 %v669, %v667
        %v900 = vpack.c.b16 %v670, %v668
        %v901 = vpack.c.b16 %v673, %v671
        %v902 = vpack.c.b16 %v674, %v672
        %v903 = vpack.c.b16 %v677, %v675
        %v904 = vpack.c.b16 %v678, %v676
        %v905 = vpack.c.b16 %v681, %v679
        %v906 = vpack.c.b16 %v682, %v680
        %v907 = vpack.c.b16 %v685, %v683
        %v908 = vpack.c.b16 %v686, %v684
        %v909 = vpack.c.b16 %v689, %v687
        %v910 = vpack.c.b16 %v690, %v688
        %v911 = vpack.c.b16 %v693, %v691
        %v912 = vpack.c.b16 %v694, %v692
        %v913 = vpack.c.b16 %v697, %v695
        %v914 = vpack.c.b16 %v698, %v696
        %v915 = vpack.c.b16 %v701, %v699
        %v916 = vpack.c.b16 %v702, %v700
        %v917 = vpack.c.b16 %v705, %v703
        %v918 = vpack.c.b16 %v706, %v704
        %v919 = vpack.c.b16 %v709, %v707
        %v920 = vpack.c.b16 %v710, %v708
        %v921 = vpack.c.b16 %v713, %v711
        %v922 = vpack.c.b16 %v714, %v712
        %v923 = vpack.c.b16 %v717, %v715
        %v924 = vpack.c.b16 %v718, %v716
        %v925 = vpack.c.b16 %v721, %v719
        %v926 = vpack.c.b16 %v722, %v720
        %v927 = vpack.c.b16 %v725, %v723
        %v928 = vpack.c.b16 %v726, %v724
        %v929 = vpack.c.b16 %v729, %v727
        %v930 = vpack.c.b16 %v730, %v728
        %v931 = vpack.c.b16 %v733, %v731
        %v932 = vpack.c.b16 %v734, %v732
        %v933 = vpack.c.b16 %v737, %v735
        %v934 = vpack.c.b16 %v738, %v736
        %v935 = vpack.c.b16 %v741, %v739
        %v936 = vpack.c.b16 %v742, %v740
        %v937 = vpack.c.b16 %v745, %v743
        %v938 = vpack.c.b16 %v746, %v744
        %v939 = vpack.c.b16 %v749, %v747
        %v940 = vpack.c.b16 %v750, %v748
        %v941 = vpack.c.b16 %v753, %v751
        %v942 = vpack.c.b16 %v754, %v752
        %v943 = vpack.c.b16 %v757, %v755
        %v944 = vpack.c.b16 %v758, %v756
        %v945 = vpack.c.b16 %v761, %v759
        %v946 = vpack.c.b16 %v762, %v760
        %v947 = vpack.c.b16 %v765, %v763
        %v948 = vpack.c.b16 %v766, %v764
        %v949 = vpack.c.b16 %v769, %v767
        %v950 = vpack.c.b16 %v770, %v768
        %v951 = vpack.c.b16 %v773, %v771
        %v952 = vpack.c.b16 %v774, %v772
        %v953 = vpack.c.b16 %v777, %v775
        %v954 = vpack.c.b16 %v778, %v776
        %v955 = vpack.c.b16 %v781, %v779
        %v956 = vpack.c.b16 %v782, %v780
        %v957 = vpack.c.b16 %v785, %v783
        %v958 = vpack.c.b16 %v786, %v784
        %v959 = vpack.c.b16 %v789, %v787
        %v960 = vpack.c.b16 %v790, %v788
        %v961 = vpack.c.b16 %v793, %v791
        %v962 = vpack.c.b16 %v794, %v792
        %v963 = vpack.c.b16 %v797, %v795
        %v964 = vpack.c.b16 %v798, %v796
        %v965 = vpack.c.b16 %v801, %v799
        %v966 = vpack.c.b16 %v802, %v800
        %v967 = vpack.c.b16 %v805, %v803
        %v968 = vpack.c.b16 %v806, %v804
        %v969 = vpack.c.b16 %v809, %v807
        %v970 = vpack.c.b16 %v810, %v808
        %v971 = vpack.c.b16 %v813, %v811
        %v972 = vpack.c.b16 %v814, %v812
        %v973 = vpack.c.b16 %v817, %v815
        %v974 = vpack.c.b16 %v818, %v816
        %v975 = vpack.c.b16 %v821, %v819
        %v976 = vpack.c.b16 %v822, %v820
        %v977 = vpack.c.b16 %v825, %v823
        %v978 = vpack.c.b16 %v826, %v824
        %v979 = vpack.c.b16 %v829, %v827
        %v980 = vpack.c.b16 %v830, %v828
        %v981 = vpack.c.b16 %v833, %v831
        %v982 = vpack.c.b16 %v834, %v832
        %v983 = vpack.c.b16 %v837, %v835
        %v984 = vpack.c.b16 %v838, %v836
        %v985 = vpack.c.b16 %v841, %v839
        %v986 = vpack.c.b16 %v842, %v840
        %v987 = vpack.c.b16 %v845, %v843
        %v988 = vpack.c.b16 %v846, %v844
        %v989 = vpack.c.b16 %v849, %v847
        %v990 = vpack.c.b16 %v850, %v848
        %v991 = vpack.c.b16 %v853, %v851
        %v992 = vpack.c.b16 %v854, %v852
        %v993 = vpack.c.b16 %v857, %v855
        %v994 = vpack.c.b16 %v858, %v856
        %v995 = vpack.c.b16 %v861, %v859
        %v996 = vpack.c.b16 %v862, %v860
        %v997 = vpack.c.b16 %v865, %v863
        %v998 = vpack.c.b16 %v866, %v864
        %v999 = vpack.c.b16 %v869, %v867
        %v1000 = vpack.c.b16 %v870, %v868
        %v1001 = vpack.c.b16 %v873, %v871
        %v1002 = vpack.c.b16 %v874, %v872
        %1131 = vmatpush.bf16.msra.mxu0 %v889
        %1132 = vmatpush.bf16.msra.mxu0 %v887
        %1133 = vmatpush.bf16.msra.mxu0 %v885
        %1134 = vmatpush.bf16.msra.mxu0 %v883
        %1135 = vmatpush.bf16.msra.mxu0 %v881
        %1136 = vmatpush.bf16.msra.mxu0 %v879
        %1137 = vmatpush.bf16.msra.mxu0 %v877
        %1138 = vmatpush.bf16.msra.mxu0 %v875
        %1139 = vmatmul.bf16.gmra.mxu0 %v459
        %v1140 = vpop.f32.mrf.mxu0
        %v1141 = vadd.f32 0.0, %v1140
        %v1142 = vpop.f32.mrf.mxu0
        %v1143 = vadd.f32 0.0, %v1142
        %1144 = vmatmul.bf16.gmra.mxu0 %v467
        %v1145 = vpop.f32.mrf.mxu0
        %v1146 = vadd.f32 0.0, %v1145
        %v1147 = vpop.f32.mrf.mxu0
        %1148 = vdwg.mxu0
        %1149 = vmatpush.bf16.msra.mxu0 %v905
        %1150 = vmatpush.bf16.msra.mxu0 %v903
        %1151 = vmatpush.bf16.msra.mxu0 %v901
        %1152 = vmatpush.bf16.msra.mxu0 %v899
        %1153 = vmatpush.bf16.msra.mxu0 %v897
        %1154 = vmatpush.bf16.msra.mxu0 %v895
        %1155 = vmatpush.bf16.msra.mxu0 %v893
        %1156 = vmatpush.bf16.msra.mxu0 %v891
        %1157 = vmatmul.bf16.gmra.mxu0 %v460
        %v1158 = vpop.f32.mrf.mxu0
        %v1159 = vadd.f32 %v1141, %v1158
        %v1160 = vpop.f32.mrf.mxu0
        %v1161 = vadd.f32 %v1143, %v1160
        %1162 = vmatmul.bf16.gmra.mxu0 %v468
        %v1163 = vpop.f32.mrf.mxu0
        %v1164 = vadd.f32 %v1146, %v1163
        %v1165 = vpop.f32.mrf.mxu0
        %1166 = vdwg.mxu0
        %1167 = vmatpush.bf16.msra.mxu0 %v921
        %1168 = vmatpush.bf16.msra.mxu0 %v919
        %1169 = vmatpush.bf16.msra.mxu0 %v917
        %1170 = vmatpush.bf16.msra.mxu0 %v915
        %1171 = vmatpush.bf16.msra.mxu0 %v913
        %1172 = vmatpush.bf16.msra.mxu0 %v911
        %1173 = vmatpush.bf16.msra.mxu0 %v909
        %1174 = vmatpush.bf16.msra.mxu0 %v907
        %1175 = vmatmul.bf16.gmra.mxu0 %v461
        %v1176 = vpop.f32.mrf.mxu0
        %v1177 = vadd.f32 %v1159, %v1176
        %v1178 = vpop.f32.mrf.mxu0
        %v1179 = vadd.f32 %v1161, %v1178
        %1180 = vmatmul.bf16.gmra.mxu0 %v469
        %v1181 = vpop.f32.mrf.mxu0
        %v1182 = vadd.f32 %v1164, %v1181
        %v1183 = vpop.f32.mrf.mxu0
        %1184 = vdwg.mxu0
        %1185 = vmatpush.bf16.msra.mxu0 %v937
        %1186 = vmatpush.bf16.msra.mxu0 %v935
        %1187 = vmatpush.bf16.msra.mxu0 %v933
        %1188 = vmatpush.bf16.msra.mxu0 %v931
        %1189 = vmatpush.bf16.msra.mxu0 %v929
        %1190 = vmatpush.bf16.msra.mxu0 %v927
        %1191 = vmatpush.bf16.msra.mxu0 %v925
        %1192 = vmatpush.bf16.msra.mxu0 %v923
        %1193 = vmatmul.bf16.gmra.mxu0 %v462
        %v1194 = vpop.f32.mrf.mxu0
        %v1195 = vadd.f32 %v1177, %v1194
        %v1196 = vpop.f32.mrf.mxu0
        %v1197 = vadd.f32 %v1179, %v1196
        %1198 = vmatmul.bf16.gmra.mxu0 %v470
        %v1199 = vpop.f32.mrf.mxu0
        %v1200 = vadd.f32 %v1182, %v1199
        %v1201 = vpop.f32.mrf.mxu0
        %1202 = vdwg.mxu0
        %1203 = vmatpush.bf16.msra.mxu0 %v953
        %1204 = vmatpush.bf16.msra.mxu0 %v951
        %1205 = vmatpush.bf16.msra.mxu0 %v949
        %1206 = vmatpush.bf16.msra.mxu0 %v947
        %1207 = vmatpush.bf16.msra.mxu0 %v945
        %1208 = vmatpush.bf16.msra.mxu0 %v943
        %1209 = vmatpush.bf16.msra.mxu0 %v941
        %1210 = vmatpush.bf16.msra.mxu0 %v939
        %1211 = vmatmul.bf16.gmra.mxu0 %v463
        %v1212 = vpop.f32.mrf.mxu0
        %v1213 = vadd.f32 %v1195, %v1212
        %v1214 = vpop.f32.mrf.mxu0
        %v1215 = vadd.f32 %v1197, %v1214
        %1216 = vmatmul.bf16.gmra.mxu0 %v471
        %v1217 = vpop.f32.mrf.mxu0
        %v1218 = vadd.f32 %v1200, %v1217
        %v1219 = vpop.f32.mrf.mxu0
        %1220 = vdwg.mxu0
        %1221 = vmatpush.bf16.msra.mxu0 %v969
        %1222 = vmatpush.bf16.msra.mxu0 %v967
        %1223 = vmatpush.bf16.msra.mxu0 %v965
        %1224 = vmatpush.bf16.msra.mxu0 %v963
        %1225 = vmatpush.bf16.msra.mxu0 %v961
        %1226 = vmatpush.bf16.msra.mxu0 %v959
        %1227 = vmatpush.bf16.msra.mxu0 %v957
        %1228 = vmatpush.bf16.msra.mxu0 %v955
        %1229 = vmatmul.bf16.gmra.mxu0 %v464
        %v1230 = vpop.f32.mrf.mxu0
        %v1231 = vadd.f32 %v1213, %v1230
        %v1232 = vpop.f32.mrf.mxu0
        %v1233 = vadd.f32 %v1215, %v1232
        %1234 = vmatmul.bf16.gmra.mxu0 %v472
        %v1235 = vpop.f32.mrf.mxu0
        %v1236 = vadd.f32 %v1218, %v1235
        %v1237 = vpop.f32.mrf.mxu0
        %1238 = vdwg.mxu0
        %1239 = vmatpush.bf16.msra.mxu0 %v985
        %1240 = vmatpush.bf16.msra.mxu0 %v983
        %1241 = vmatpush.bf16.msra.mxu0 %v981
        %1242 = vmatpush.bf16.msra.mxu0 %v979
        %1243 = vmatpush.bf16.msra.mxu0 %v977
        %1244 = vmatpush.bf16.msra.mxu0 %v975
        %1245 = vmatpush.bf16.msra.mxu0 %v973
        %1246 = vmatpush.bf16.msra.mxu0 %v971
        %1247 = vmatmul.bf16.gmra.mxu0 %v465
        %v1248 = vpop.f32.mrf.mxu0
        %v1249 = vadd.f32 %v1231, %v1248
        %v1250 = vpop.f32.mrf.mxu0
        %v1251 = vadd.f32 %v1233, %v1250
        %1252 = vmatmul.bf16.gmra.mxu0 %v473
        %v1253 = vpop.f32.mrf.mxu0
        %v1254 = vadd.f32 %v1236, %v1253
        %v1255 = vpop.f32.mrf.mxu0
        %1256 = vdwg.mxu0
        %1257 = vmatpush.bf16.msra.mxu0 %v1001
        %1258 = vmatpush.bf16.msra.mxu0 %v999
        %1259 = vmatpush.bf16.msra.mxu0 %v997
        %1260 = vmatpush.bf16.msra.mxu0 %v995
        %1261 = vmatpush.bf16.msra.mxu0 %v993
        %1262 = vmatpush.bf16.msra.mxu0 %v991
        %1263 = vmatpush.bf16.msra.mxu0 %v989
        %1264 = vmatpush.bf16.msra.mxu0 %v987
        %1265 = vmatmul.bf16.gmra.mxu0 %v466
        %v1266 = vpop.f32.mrf.mxu0
        %v1267 = vadd.f32 %v1249, %v1266
        %v1268 = vpop.f32.mrf.mxu0
        %v1269 = vadd.f32 %v1251, %v1268
        %1270 = vmatmul.bf16.gmra.mxu0 %v474
        %v1271 = vpop.f32.mrf.mxu0
        %v1272 = vadd.f32 %v1254, %v1271
        %v1273 = vpop.f32.mrf.mxu0
        %1274 = vdwg.mxu0
        %1275 = vmatpush.bf16.msra.mxu0 %v890
        %1276 = vmatpush.bf16.msra.mxu0 %v888
        %1277 = vmatpush.bf16.msra.mxu0 %v886
        %1278 = vmatpush.bf16.msra.mxu0 %v884
        %1279 = vmatpush.bf16.msra.mxu0 %v882
        %1280 = vmatpush.bf16.msra.mxu0 %v880
        %1281 = vmatpush.bf16.msra.mxu0 %v878
        %1282 = vmatpush.bf16.msra.mxu0 %v876
        %1283 = vmatmul.bf16.gmra.mxu0 %v459
        %v1284 = vpop.f32.mrf.mxu0
        %v1285 = vadd.f32 0.0, %v1284
        %v1286 = vpop.f32.mrf.mxu0
        %v1287 = vadd.f32 0.0, %v1286
        %1288 = vmatmul.bf16.gmra.mxu0 %v467
        %v1289 = vpop.f32.mrf.mxu0
        %v1290 = vadd.f32 0.0, %v1289
        %v1291 = vpop.f32.mrf.mxu0
        %1292 = vdwg.mxu0
        %1293 = vmatpush.bf16.msra.mxu0 %v906
        %1294 = vmatpush.bf16.msra.mxu0 %v904
        %1295 = vmatpush.bf16.msra.mxu0 %v902
        %1296 = vmatpush.bf16.msra.mxu0 %v900
        %1297 = vmatpush.bf16.msra.mxu0 %v898
        %1298 = vmatpush.bf16.msra.mxu0 %v896
        %1299 = vmatpush.bf16.msra.mxu0 %v894
        %1300 = vmatpush.bf16.msra.mxu0 %v892
        %1301 = vmatmul.bf16.gmra.mxu0 %v460
        %v1302 = vpop.f32.mrf.mxu0
        %v1303 = vadd.f32 %v1285, %v1302
        %v1304 = vpop.f32.mrf.mxu0
        %v1305 = vadd.f32 %v1287, %v1304
        %1306 = vmatmul.bf16.gmra.mxu0 %v468
        %v1307 = vpop.f32.mrf.mxu0
        %v1308 = vadd.f32 %v1290, %v1307
        %v1309 = vpop.f32.mrf.mxu0
        %1310 = vdwg.mxu0
        %1311 = vmatpush.bf16.msra.mxu0 %v922
        %1312 = vmatpush.bf16.msra.mxu0 %v920
        %1313 = vmatpush.bf16.msra.mxu0 %v918
        %1314 = vmatpush.bf16.msra.mxu0 %v916
        %1315 = vmatpush.bf16.msra.mxu0 %v914
        %1316 = vmatpush.bf16.msra.mxu0 %v912
        %1317 = vmatpush.bf16.msra.mxu0 %v910
        %1318 = vmatpush.bf16.msra.mxu0 %v908
        %1319 = vmatmul.bf16.gmra.mxu0 %v461
        %v1320 = vpop.f32.mrf.mxu0
        %v1321 = vadd.f32 %v1303, %v1320
        %v1322 = vpop.f32.mrf.mxu0
        %v1323 = vadd.f32 %v1305, %v1322
        %1324 = vmatmul.bf16.gmra.mxu0 %v469
        %v1325 = vpop.f32.mrf.mxu0
        %v1326 = vadd.f32 %v1308, %v1325
        %v1327 = vpop.f32.mrf.mxu0
        %1328 = vdwg.mxu0
        %1329 = vmatpush.bf16.msra.mxu0 %v938
        %1330 = vmatpush.bf16.msra.mxu0 %v936
        %1331 = vmatpush.bf16.msra.mxu0 %v934
        %1332 = vmatpush.bf16.msra.mxu0 %v932
        %1333 = vmatpush.bf16.msra.mxu0 %v930
        %1334 = vmatpush.bf16.msra.mxu0 %v928
        %1335 = vmatpush.bf16.msra.mxu0 %v926
        %1336 = vmatpush.bf16.msra.mxu0 %v924
        %1337 = vmatmul.bf16.gmra.mxu0 %v462
        %v1338 = vpop.f32.mrf.mxu0
        %v1339 = vadd.f32 %v1321, %v1338
        %v1340 = vpop.f32.mrf.mxu0
        %v1341 = vadd.f32 %v1323, %v1340
        %1342 = vmatmul.bf16.gmra.mxu0 %v470
        %v1343 = vpop.f32.mrf.mxu0
        %v1344 = vadd.f32 %v1326, %v1343
        %v1345 = vpop.f32.mrf.mxu0
        %1346 = vdwg.mxu0
        %1347 = vmatpush.bf16.msra.mxu0 %v954
        %1348 = vmatpush.bf16.msra.mxu0 %v952
        %1349 = vmatpush.bf16.msra.mxu0 %v950
        %1350 = vmatpush.bf16.msra.mxu0 %v948
        %1351 = vmatpush.bf16.msra.mxu0 %v946
        %1352 = vmatpush.bf16.msra.mxu0 %v944
        %1353 = vmatpush.bf16.msra.mxu0 %v942
        %1354 = vmatpush.bf16.msra.mxu0 %v940
        %1355 = vmatmul.bf16.gmra.mxu0 %v463
        %v1356 = vpop.f32.mrf.mxu0
        %v1357 = vadd.f32 %v1339, %v1356
        %v1358 = vpop.f32.mrf.mxu0
        %v1359 = vadd.f32 %v1341, %v1358
        %1360 = vmatmul.bf16.gmra.mxu0 %v471
        %v1361 = vpop.f32.mrf.mxu0
        %v1362 = vadd.f32 %v1344, %v1361
        %v1363 = vpop.f32.mrf.mxu0
        %1364 = vdwg.mxu0
        %1365 = vmatpush.bf16.msra.mxu0 %v970
        %1366 = vmatpush.bf16.msra.mxu0 %v968
        %1367 = vmatpush.bf16.msra.mxu0 %v966
        %1368 = vmatpush.bf16.msra.mxu0 %v964
        %1369 = vmatpush.bf16.msra.mxu0 %v962
        %1370 = vmatpush.bf16.msra.mxu0 %v960
        %1371 = vmatpush.bf16.msra.mxu0 %v958
        %1372 = vmatpush.bf16.msra.mxu0 %v956
        %1373 = vmatmul.bf16.gmra.mxu0 %v464
        %v1374 = vpop.f32.mrf.mxu0
        %v1375 = vadd.f32 %v1357, %v1374
        %v1376 = vpop.f32.mrf.mxu0
        %v1377 = vadd.f32 %v1359, %v1376
        %1378 = vmatmul.bf16.gmra.mxu0 %v472
        %v1379 = vpop.f32.mrf.mxu0
        %v1380 = vadd.f32 %v1362, %v1379
        %v1381 = vpop.f32.mrf.mxu0
        %1382 = vdwg.mxu0
        %1383 = vmatpush.bf16.msra.mxu0 %v986
        %1384 = vmatpush.bf16.msra.mxu0 %v984
        %1385 = vmatpush.bf16.msra.mxu0 %v982
        %1386 = vmatpush.bf16.msra.mxu0 %v980
        %1387 = vmatpush.bf16.msra.mxu0 %v978
        %1388 = vmatpush.bf16.msra.mxu0 %v976
        %1389 = vmatpush.bf16.msra.mxu0 %v974
        %1390 = vmatpush.bf16.msra.mxu0 %v972
        %1391 = vmatmul.bf16.gmra.mxu0 %v465
        %v1392 = vpop.f32.mrf.mxu0
        %v1393 = vadd.f32 %v1375, %v1392
        %v1394 = vpop.f32.mrf.mxu0
        %v1395 = vadd.f32 %v1377, %v1394
        %1396 = vmatmul.bf16.gmra.mxu0 %v473
        %v1397 = vpop.f32.mrf.mxu0
        %v1398 = vadd.f32 %v1380, %v1397
        %v1399 = vpop.f32.mrf.mxu0
        %1400 = vdwg.mxu0
        %1401 = vmatpush.bf16.msra.mxu0 %v1002
        %1402 = vmatpush.bf16.msra.mxu0 %v1000
        %1403 = vmatpush.bf16.msra.mxu0 %v998
        %1404 = vmatpush.bf16.msra.mxu0 %v996
        %1405 = vmatpush.bf16.msra.mxu0 %v994
        %1406 = vmatpush.bf16.msra.mxu0 %v992
        %1407 = vmatpush.bf16.msra.mxu0 %v990
        %1408 = vmatpush.bf16.msra.mxu0 %v988
        %1409 = vmatmul.bf16.gmra.mxu0 %v466
        %v1410 = vpop.f32.mrf.mxu0
        %v1411 = vadd.f32 %v1393, %v1410
        %v1412 = vpop.f32.mrf.mxu0
        %v1413 = vadd.f32 %v1395, %v1412
        %1414 = vmatmul.bf16.gmra.mxu0 %v474
        %v1415 = vpop.f32.mrf.mxu0
        %v1416 = vadd.f32 %v1398, %v1415
        %v1417 = vpop.f32.mrf.mxu0
        %1418 = vdwg.mxu0
        %v1419 = vadd.f32 %v277, %v1267
        %v1420 = vadd.f32 %v278, %v1411
        %v1421 = vadd.f32 %v279, %v1269
        %v1422 = vadd.f32 %v280, %v1413
        %v1423 = vadd.f32 %v281, %v1272
        %v1424 = vadd.f32 %v282, %v1416
        %1425 = vst [vmem:[#allocation2] sm:$0xff] %v1419
        %1426 = vst [vmem:[#allocation2 + $0x8] sm:$0xff] %v1420
        %1427 = vst [vmem:[#allocation2 + $0x10] sm:$0xff] %v1421
        %1428 = vst [vmem:[#allocation2 + $0x18] sm:$0xff] %v1422
        %1429 = vst [vmem:[#allocation2 + $0x20] sm:$0x3] %v1423
        %1430 = vst [vmem:[#allocation2 + $0x28] sm:$0x3] %v1424
        %p1431 = scmp.eq.s32.totalorder %s20, 1
        // Predicated region
        $region56: #{output_discriminator.7} parent=46 // pred_check
          %p1432 = pneg %p1431
        $region57: #{output_discriminator.7} parent=46 // pred_check_branch
          %1434 = sbr.rel (%p1432) target = $region59
        $region58: #{output_discriminator.7} parent=46 // pred_region
          %v1435 = vld [vmem:[#allocation2] sm:$0xff]
          %v1436 = vld [vmem:[#allocation2 + $0x8] sm:$0xff]
          %v1437 = vld [vmem:[#allocation2 + $0x10] sm:$0xff]
          %v1438 = vld [vmem:[#allocation2 + $0x18] sm:$0xff]
          %v1439 = vld [vmem:[#allocation2 + $0x20] sm:$0x3]
          %v1440 = vld [vmem:[#allocation2 + $0x28] sm:$0x3]
          %vm1441 = vcmp.ge.f32.partialorder %v1435, 0.0
          %vm1442 = vcmp.ge.f32.partialorder %v1436, 0.0
          %vm1443 = vcmp.ge.f32.partialorder %v1437, 0.0
          %vm1444 = vcmp.ge.f32.partialorder %v1438, 0.0
          %vm1445 = vcmp.ge.f32.partialorder %v1439, 0.0
          %vm1446 = vcmp.ge.f32.partialorder %v1440, 0.0
          %v1447 = vmul.f32 %v1435, 0.2
          %v1448 = vmul.f32 %v1436, 0.2
          %v1449 = vmul.f32 %v1437, 0.2
          %v1450 = vmul.f32 %v1438, 0.2
          %v1451 = vmul.f32 %v1439, 0.2
          %v1452 = vmul.f32 %v1440, 0.2
          %v1453 = vsel %vm1441, %v1435, %v1447
          %v1454 = vsel %vm1442, %v1436, %v1448
          %v1455 = vsel %vm1443, %v1437, %v1449
          %v1456 = vsel %vm1444, %v1438, %v1450
          %v1457 = vsel %vm1445, %v1439, %v1451
          %v1458 = vsel %vm1446, %v1440, %v1452
          %v1459 = vpack.c.bf16 %v1454, %v1453
          %v1460 = vpack.c.bf16 %v1456, %v1455
          %v1461 = vpack.c.bf16 %v1458, %v1457
          %1462 = vst [vmem:[%s264] sm:$0xff] %v1459
          %1463 = vst [vmem:[%s264 + $0x8] sm:$0xff] %v1460
          %1464 = vst [vmem:[%s264 + $0x10] sm:$0x11] %v1461
        $region59: #{output_discriminator.7} parent=46 // pred_fallthru
          _
        %s1465 = smul.u32 3, %s18
        %s1466 = smul.u32 2, %s19
        %p1467 = scmp.lt.s32.totalorder %s1465, 2
        %s1468 = scalar_select %p1467, %s1465, 2
        %p1469 = scmp.lt.s32.totalorder %s1466, 1
        %s1470 = scalar_select %p1469, %s1466, 1
        %s1471 = smul.addr %s1468, 2
        %s1472 = sadd.s32 %s1470, %s1471
        %s1473 = smul.addr %s1472, 4
        %s1474 = scalar_lea.vmem %s2, %s1473
        // Predicated region
        $region60: #{output_discriminator.7} parent=46 // pred_check
          %p1475 = pneg %p108
        $region61: #{output_discriminator.7} parent=46 // pred_check_branch
          %1477 = sbr.rel (%p1475) target = $region63
        $region62: #{output_discriminator.7} parent=46 // pred_region
          %s1478 = smul.u32 3, %s18
          %s1479 = smul.u32 2, %s19
        $region63: #{output_discriminator.7} parent=46 // pred_fallthru
          _
        // Predicated region
        $region64: #{output_discriminator.7} parent=46 // pred_check
          %p1480 = pneg %p108
        $region65: #{output_discriminator.7} parent=46 // pred_check_branch
          %1482 = sbr.rel (%p1480) target = $region67
        $region66: #{output_discriminator.7} parent=46 // pred_region
          %s1483 = smul.u32 3, %s18
          %s1484 = smul.u32 2, %s19
          %p1485 = scmp.lt.s32.totalorder %s1483, 2
          %s1486 = scalar_select %p1485, %s1483, 2
          %p1487 = scmp.lt.s32.totalorder %s1484, 1
          %s1488 = scalar_select %p1487, %s1484, 1
          %s1489 = smul.addr %s1486, 2
          %s1490 = sadd.s32 %s1488, %s1489
          %s1491 = smul.addr %s1490, 4
          %s1492 = scalar_lea.vmem %s2, %s1491
        $region67: #{output_discriminator.7} parent=46 // pred_fallthru
          _
      $region47: #{output_discriminator.7} parent=5 // pred_fallthru
        _
      %p1493 = scmp.le.s32.totalorder 2, %s8
      // Predicated region
      $region68: #{output_discriminator.7} parent=5 // pred_check
        %p1494 = pneg %p1493
      $region69: #{output_discriminator.7} parent=5 // pred_check_branch
        %1496 = sbr.rel (%p1494) target = $region71
      $region70: #{output_discriminator.7} parent=5 // pred_region
        %s1497 = ssub.s32 %s8, 2
      $region71: #{output_discriminator.7} parent=5 // pred_fallthru
        _
    $region6: #{output_discriminator.7} parent=1 // loop_footer
      %s12 = sadd.s32 1, %s8
    $region7: #{output_discriminator.7} parent=1 // loop_footer_branch
      %7 = sbr.rel target = $region3
    $region8: #{output_discriminator.7} parent=1 // loop_exit
      _

// kernel: output_discriminator.8
$region0: #{output_discriminator.8}
  #allocation0 [shape = 'u32[]', space=smem, size = 0x4, offset = 0x4, fixed_abs, tag = 'smem constant byte address 0x4 - core index']
  #allocation1 [shape = 'u32[72,128]{1,0:T(1,128)}', space=vmem, size = 0x9000, scoped, tag = 'internal scratch']
  #allocation2 [shape = 'f32[8,512]{1,0:T(8,128)}', space=vmem, size = 0x4000, scoped, tag = 'scratch operand']
  %s0 = inlined_call_operand.vmem [shape: bf16[8,4096], index: 0, kind: input, shape index: {}]
  %s1 = inlined_call_operand.vmem [shape: bf16[4096,512], index: 1, kind: input, shape index: {}]
  %s2 = inlined_call_operand.vmem [shape: bf16[8,512], index: 2, kind: output, shape index: {}]
  %s3 = sld [smem:[#allocation0]]
  $region49: #{output_discriminator.8} parent=0
    _
  %s5 = ssub.s32 1, %s3
  %s6 = scalar_select 0, %s5, %s3
  loop: start=0, step=1, limit=6
  $region2: #{output_discriminator.8} parent=0 // loop_pre_header
    _
  $region3: #{output_discriminator.8} parent=0 // loop_header
    %s8 = sphi 0, %s12
    %p9 = scmp.ge.s32.totalorder %s8, 6
    %s15 = sphi 0, %s34
    %s16 = sphi 0, %s30
    %s17 = sphi 0, %s26
    %s18 = sphi 0, %s15
    %s19 = sphi 0, %s16
    %s20 = sphi 0, %s17
    %s21 = sphi 0, %s18
    %s22 = sphi 0, %s19
    %s23 = sphi 0, %s20
    %s39 = sphi 0, %s41
    %s42 = sphi 0, %s39
    %s43 = sphi 0, %s42
    %s59 = sphi 0, %s43
    %s67 = sphi 0, %s69
    %s70 = sphi 0, %s67
    %s71 = sphi 0, %s70
    %s87 = sphi 0, %s71
    %s95 = sphi 0, %s97
    %s98 = sphi 0, %s95
    %s99 = sphi 0, %s98
    %s115 = sphi 0, %s99
  $region4: #{output_discriminator.8} parent=0 // loop_header_branch
    %11 = sbr.rel (%p9) target = $region8
  $region5: #{output_discriminator.8} parent=0 // loop_body
    %s13 = ssub.s32 %s8, 1
    %s14 = ssub.s32 %s8, 2
    %s24 = sadd.s32 1, %s17
    %p25 = scmp.ge.s32.totalorder %s24, 4
    %s26 = scalar_select %p25, 0, %s24
    %s27 = sadd.s32 1, %s16
    %s28 = scalar_select %p25, %s27, %s16
    %p29 = scmp.ge.s32.totalorder %s28, 1
    %s30 = scalar_select %p29, 0, %s28
    %s31 = sadd.s32 1, %s15
    %s32 = scalar_select %p29, %s31, %s15
    %p33 = scmp.ge.s32.totalorder %s32, 1
    %s34 = scalar_select %p33, 0, %s32
    %s35 = ssub.s32 %s15, %s34
    %s36 = ssub.s32 %s17, %s26
    %s37 = sor.u32 %s35, %s36
    %p38 = scmp.eq.s32.totalorder %s37, 0
    %s40 = sadd.s32 %s39, 1
    %s41 = scalar_select %p38, %s39, %s40
    %p44 = pneg %p38
    %p45 = scmp.eq.s32.totalorder %s8, 3
    %p46 = por %p44, %p45
    %p47 = scmp.ne.s32.totalorder %s39, %s42
    %p48 = scmp.eq.s32.totalorder %s8, 0
    %p49 = por %p47, %p48
    %p50 = scmp.ne.s32.totalorder %s39, %s42
    %p51 = scmp.eq.s32.totalorder %s13, 3
    %p52 = por %p50, %p51
    %p53 = scmp.ne.s32.totalorder %s42, %s43
    %p54 = scmp.eq.s32.totalorder %s13, 0
    %p55 = por %p53, %p54
    %p56 = scmp.ne.s32.totalorder %s42, %s43
    %p57 = scmp.eq.s32.totalorder %s14, 3
    %p58 = por %p56, %p57
    %p60 = scmp.ne.s32.totalorder %s43, %s59
    %p61 = scmp.eq.s32.totalorder %s14, 0
    %p62 = por %p60, %p61
    %s63 = ssub.s32 %s17, %s26
    %s64 = ssub.s32 %s16, %s30
    %s65 = sor.u32 %s63, %s64
    %p66 = scmp.eq.s32.totalorder %s65, 0
    %s68 = sadd.s32 %s67, 1
    %s69 = scalar_select %p66, %s67, %s68
    %p72 = pneg %p66
    %p73 = scmp.eq.s32.totalorder %s8, 3
    %p74 = por %p72, %p73
    %p75 = scmp.ne.s32.totalorder %s67, %s70
    %p76 = scmp.eq.s32.totalorder %s8, 0
    %p77 = por %p75, %p76
    %p78 = scmp.ne.s32.totalorder %s67, %s70
    %p79 = scmp.eq.s32.totalorder %s13, 3
    %p80 = por %p78, %p79
    %p81 = scmp.ne.s32.totalorder %s70, %s71
    %p82 = scmp.eq.s32.totalorder %s13, 0
    %p83 = por %p81, %p82
    %p84 = scmp.ne.s32.totalorder %s70, %s71
    %p85 = scmp.eq.s32.totalorder %s14, 3
    %p86 = por %p84, %p85
    %p88 = scmp.ne.s32.totalorder %s71, %s87
    %p89 = scmp.eq.s32.totalorder %s14, 0
    %p90 = por %p88, %p89
    %s91 = ssub.s32 %s15, %s34
    %s92 = ssub.s32 %s16, %s30
    %s93 = sor.u32 %s91, %s92
    %p94 = scmp.eq.s32.totalorder %s93, 0
    %s96 = sadd.s32 %s95, 1
    %s97 = scalar_select %p94, %s95, %s96
    %p100 = pneg %p94
    %p101 = scmp.eq.s32.totalorder %s8, 3
    %p102 = por %p100, %p101
    %p103 = scmp.ne.s32.totalorder %s95, %s98
    %p104 = scmp.eq.s32.totalorder %s8, 0
    %p105 = por %p103, %p104
    %p106 = scmp.ne.s32.totalorder %s95, %s98
    %p107 = scmp.eq.s32.totalorder %s13, 3
    %p108 = por %p106, %p107
    %p109 = scmp.ne.s32.totalorder %s98, %s99
    %p110 = scmp.eq.s32.totalorder %s13, 0
    %p111 = por %p109, %p110
    %p112 = scmp.ne.s32.totalorder %s98, %s99
    %p113 = scmp.eq.s32.totalorder %s14, 3
    %p114 = por %p112, %p113
    %p116 = scmp.ne.s32.totalorder %s99, %s115
    %p117 = scmp.eq.s32.totalorder %s14, 0
    %p118 = por %p116, %p117
    %p119 = scmp.le.s32.totalorder 1, %s8
    %p120 = scmp.lt.s32.totalorder %s8, 5
    %p121 = pnand %p119, %p120
    %p122 = pneg %p121
    // Predicated region
    $region9: #{output_discriminator.8} parent=5 // pred_check
      _
    $region10: #{output_discriminator.8} parent=5 // pred_check_branch
      %124 = sbr.rel (%p121) target = $region12
    $region11: #{output_discriminator.8} parent=5 // pred_region
      %s125 = ssub.s32 %s8, 1
    $region12: #{output_discriminator.8} parent=5 // pred_fallthru
      _
    %p126 = scmp.lt.s32.totalorder %s8, 4
    // Predicated region
    $region13: #{output_discriminator.8} parent=5 // pred_check
      %p127 = pneg %p126
    $region14: #{output_discriminator.8} parent=5 // pred_check_branch
      %129 = sbr.rel (%p127) target = $region16
    $region15: #{output_discriminator.8} parent=5 // pred_region
      // Predicated region
      $region17: #{output_discriminator.8} parent=15 // pred_check
        %p130 = pneg %p49
      $region18: #{output_discriminator.8} parent=15 // pred_check_branch
        %132 = sbr.rel (%p130) target = $region20
      $region19: #{output_discriminator.8} parent=15 // pred_region
        %s133 = smul.u32 8, %s17
        %p134 = scmp.lt.s32.totalorder %s15, 0
        %s135 = scalar_select %p134, %s15, 0
        %p136 = scmp.lt.s32.totalorder %s133, 31
        %s137 = scalar_select %p136, %s133, 31
        %s138 = smul.addr %s135, 32
        %s139 = sadd.s32 %s137, %s138
        %s140 = smul.addr %s139, 4
        %s141 = scalar_lea.vmem %s0, %s140
        %s142 = smul.u32 8, %s17
      $region20: #{output_discriminator.8} parent=15 // pred_fallthru
        _
      // Predicated region
      $region21: #{output_discriminator.8} parent=15 // pred_check
        %p143 = pneg %p77
      $region22: #{output_discriminator.8} parent=15 // pred_check_branch
        %145 = sbr.rel (%p143) target = $region24
      $region23: #{output_discriminator.8} parent=15 // pred_region
        %s146 = smul.u32 128, %s17
        %s147 = smul.u32 4, %s16
        %p148 = scmp.lt.s32.totalorder %s146, 511
        %s149 = scalar_select %p148, %s146, 511
        %p150 = scmp.lt.s32.totalorder %s147, 3
        %s151 = scalar_select %p150, %s147, 3
        %s152 = smul.addr %s149, 4
        %s153 = sadd.s32 %s151, %s152
        %s154 = smul.addr %s153, 4
        %s155 = scalar_lea.vmem %s1, %s154
        %s156 = smul.u32 128, %s17
        %s157 = smul.u32 4, %s16
      $region24: #{output_discriminator.8} parent=15 // pred_fallthru
        _
    $region16: #{output_discriminator.8} parent=5 // pred_fallthru
      _
    %p158 = scmp.le.s32.totalorder 1, %s8
    %p159 = scmp.lt.s32.totalorder %s8, 5
    %p160 = pnand %p158, %p159
    %p161 = pneg %p160
    // Predicated region
    $region25: #{output_discriminator.8} parent=5 // pred_check
      _
    $region26: #{output_discriminator.8} parent=5 // pred_check_branch
      %163 = sbr.rel (%p160) target = $region28
    $region27: #{output_discriminator.8} parent=5 // pred_region
      %s164 = ssub.s32 %s8, 1
      %s165 = smul.u32 8, %s20
      %p166 = scmp.lt.s32.totalorder %s18, 0
      %s167 = scalar_select %p166, %s18, 0
      %p168 = scmp.lt.s32.totalorder %s165, 31
      %s169 = scalar_select %p168, %s165, 31
      %s170 = smul.addr %s167, 32
      %s171 = sadd.s32 %s169, %s170
      %s172 = smul.addr %s171, 4
      %s173 = scalar_lea.vmem %s0, %s172
      %p174 = pneg %p55
      %p175 = pneg %p52
      %s176 = smul.u32 128, %s20
      %s177 = smul.u32 4, %s19
      %p178 = scmp.lt.s32.totalorder %s176, 511
      %s179 = scalar_select %p178, %s176, 511
      %p180 = scmp.lt.s32.totalorder %s177, 3
      %s181 = scalar_select %p180, %s177, 3
      %s182 = smul.addr %s179, 4
      %s183 = sadd.s32 %s181, %s182
      %s184 = smul.addr %s183, 4
      %s185 = scalar_lea.vmem %s1, %s184
      %p186 = pneg %p83
      %p187 = pneg %p80
      %p188 = pneg %p111
      %p189 = pneg %p108
      %s190 = smul.u32 4, %s19
      %p191 = scmp.lt.s32.totalorder %s18, 0
      %s192 = scalar_select %p191, %s18, 0
      %p193 = scmp.lt.s32.totalorder %s190, 3
      %s194 = scalar_select %p193, %s190, 3
      %s195 = smul.addr %s192, 4
      %s196 = sadd.s32 %s194, %s195
      %s197 = smul.addr %s196, 4
      %s198 = scalar_lea.vmem %s2, %s197
      %s199 = smul.u32 8, %s20
      %p200 = scmp.lt.s32.totalorder %s18, 0
      %s201 = scalar_select %p200, %s18, 0
      %p202 = scmp.lt.s32.totalorder %s199, 31
      %s203 = scalar_select %p202, %s199, 31
      %s204 = smul.addr %s201, 32
      %s205 = sadd.s32 %s203, %s204
      %s206 = smul.addr %s205, 4
      %s207 = scalar_lea.vmem %s0, %s206
      %s208 = smul.u32 8, %s20
      %s209 = smul.u32 128, %s20
      %s210 = smul.u32 4, %s19
      %p211 = scmp.lt.s32.totalorder %s209, 511
      %s212 = scalar_select %p211, %s209, 511
      %p213 = scmp.lt.s32.totalorder %s210, 3
      %s214 = scalar_select %p213, %s210, 3
      %s215 = smul.addr %s212, 4
      %s216 = sadd.s32 %s214, %s215
      %s217 = smul.addr %s216, 4
      %s218 = scalar_lea.vmem %s1, %s217
      %s219 = smul.u32 128, %s20
      %s220 = smul.u32 4, %s19
      %s221 = smul.u32 4, %s19
      %p222 = scmp.lt.s32.totalorder %s18, 0
      %s223 = scalar_select %p222, %s18, 0
      %p224 = scmp.lt.s32.totalorder %s221, 3
      %s225 = scalar_select %p224, %s221, 3
      %s226 = smul.addr %s223, 4
      %s227 = sadd.s32 %s225, %s226
      %s228 = smul.addr %s227, 4
      %s229 = scalar_lea.vmem %s2, %s228
      %s230 = smul.u32 4, %s19
      %p231 = scmp.eq.s32.totalorder %s20, 0
      // Predicated region
      $region29: #{output_discriminator.8} parent=27 // pred_check
        %p232 = pneg %p231
      $region30: #{output_discriminator.8} parent=27 // pred_check_branch
        %234 = sbr.rel (%p232) target = $region32
      $region31: #{output_discriminator.8} parent=27 // pred_region
        %235 = vst [vmem:[#allocation2] sm:$0xff] 0.0
        %236 = vst [vmem:[#allocation2 + $0x8] sm:$0xff] 0.0
        %237 = vst [vmem:[#allocation2 + $0x10] sm:$0xff] 0.0
        %238 = vst [vmem:[#allocation2 + $0x18] sm:$0xff] 0.0
      $region32: #{output_discriminator.8} parent=27 // pred_fallthru
        _
      %v239 = vld [vmem:[#allocation2] sm:$0xff]
      %v240 = vld [vmem:[#allocation2 + $0x8] sm:$0xff]
      %v241 = vld [vmem:[#allocation2 + $0x10] sm:$0xff]
      %v242 = vld [vmem:[#allocation2 + $0x18] sm:$0xff]
      %v243 = vld [vmem:[%s207] sm:$0xff]
      %v244 = vld [vmem:[%s207 + $0x8] sm:$0xff]
      %v245 = vld [vmem:[%s207 + $0x10] sm:$0xff]
      %v246 = vld [vmem:[%s207 + $0x18] sm:$0xff]
      %v247 = vld [vmem:[%s218] sm:$0xff]
      %v248 = vld [vmem:[%s218 + $0x8] sm:$0xff]
      %v249 = vld [vmem:[%s218 + $0x10] sm:$0xff]
      %v250 = vld [vmem:[%s218 + $0x18] sm:$0xff]
      %v251 = vld [vmem:[%s218 + $0x20] sm:$0xff]
      %v252 = vld [vmem:[%s218 + $0x28] sm:$0xff]
      %v253 = vld [vmem:[%s218 + $0x30] sm:$0xff]
      %v254 = vld [vmem:[%s218 + $0x38] sm:$0xff]
      %v255 = vld [vmem:[%s218 + $0x40] sm:$0xff]
      %v256 = vld [vmem:[%s218 + $0x48] sm:$0xff]
      %v257 = vld [vmem:[%s218 + $0x50] sm:$0xff]
      %v258 = vld [vmem:[%s218 + $0x58] sm:$0xff]
      %v259 = vld [vmem:[%s218 + $0x60] sm:$0xff]
      %v260 = vld [vmem:[%s218 + $0x68] sm:$0xff]
      %v261 = vld [vmem:[%s218 + $0x70] sm:$0xff]
      %v262 = vld [vmem:[%s218 + $0x78] sm:$0xff]
      %v263 = vld [vmem:[%s218 + $0x80] sm:$0xff]
      %v264 = vld [vmem:[%s218 + $0x88] sm:$0xff]
      %v265 = vld [vmem:[%s218 + $0x90] sm:$0xff]
      %v266 = vld [vmem:[%s218 + $0x98] sm:$0xff]
      %v267 = vld [vmem:[%s218 + $0xa0] sm:$0xff]
      %v268 = vld [vmem:[%s218 + $0xa8] sm:$0xff]
      %v269 = vld [vmem:[%s218 + $0xb0] sm:$0xff]
      %v270 = vld [vmem:[%s218 + $0xb8] sm:$0xff]
      %v271 = vld [vmem:[%s218 + $0xc0] sm:$0xff]
      %v272 = vld [vmem:[%s218 + $0xc8] sm:$0xff]
      %v273 = vld [vmem:[%s218 + $0xd0] sm:$0xff]
      %v274 = vld [vmem:[%s218 + $0xd8] sm:$0xff]
      %v275 = vld [vmem:[%s218 + $0xe0] sm:$0xff]
      %v276 = vld [vmem:[%s218 + $0xe8] sm:$0xff]
      %v277 = vld [vmem:[%s218 + $0xf0] sm:$0xff]
      %v278 = vld [vmem:[%s218 + $0xf8] sm:$0xff]
      %v279 = vld [vmem:[%s218 + $0x100] sm:$0xff]
      %v280 = vld [vmem:[%s218 + $0x108] sm:$0xff]
      %v281 = vld [vmem:[%s218 + $0x110] sm:$0xff]
      %v282 = vld [vmem:[%s218 + $0x118] sm:$0xff]
      %v283 = vld [vmem:[%s218 + $0x120] sm:$0xff]
      %v284 = vld [vmem:[%s218 + $0x128] sm:$0xff]
      %v285 = vld [vmem:[%s218 + $0x130] sm:$0xff]
      %v286 = vld [vmem:[%s218 + $0x138] sm:$0xff]
      %v287 = vld [vmem:[%s218 + $0x140] sm:$0xff]
      %v288 = vld [vmem:[%s218 + $0x148] sm:$0xff]
      %v289 = vld [vmem:[%s218 + $0x150] sm:$0xff]
      %v290 = vld [vmem:[%s218 + $0x158] sm:$0xff]
      %v291 = vld [vmem:[%s218 + $0x160] sm:$0xff]
      %v292 = vld [vmem:[%s218 + $0x168] sm:$0xff]
      %v293 = vld [vmem:[%s218 + $0x170] sm:$0xff]
      %v294 = vld [vmem:[%s218 + $0x178] sm:$0xff]
      %v295 = vld [vmem:[%s218 + $0x180] sm:$0xff]
      %v296 = vld [vmem:[%s218 + $0x188] sm:$0xff]
      %v297 = vld [vmem:[%s218 + $0x190] sm:$0xff]
      %v298 = vld [vmem:[%s218 + $0x198] sm:$0xff]
      %v299 = vld [vmem:[%s218 + $0x1a0] sm:$0xff]
      %v300 = vld [vmem:[%s218 + $0x1a8] sm:$0xff]
      %v301 = vld [vmem:[%s218 + $0x1b0] sm:$0xff]
      %v302 = vld [vmem:[%s218 + $0x1b8] sm:$0xff]
      %v303 = vld [vmem:[%s218 + $0x1c0] sm:$0xff]
      %v304 = vld [vmem:[%s218 + $0x1c8] sm:$0xff]
      %v305 = vld [vmem:[%s218 + $0x1d0] sm:$0xff]
      %v306 = vld [vmem:[%s218 + $0x1d8] sm:$0xff]
      %v307 = vld [vmem:[%s218 + $0x1e0] sm:$0xff]
      %v308 = vld [vmem:[%s218 + $0x1e8] sm:$0xff]
      %v309 = vld [vmem:[%s218 + $0x1f0] sm:$0xff]
      %v310 = vld [vmem:[%s218 + $0x1f8] sm:$0xff]
      %v311 = vld [vmem:[%s218 + $0x200] sm:$0xff]
      %v312 = vld [vmem:[%s218 + $0x208] sm:$0xff]
      %v313 = vld [vmem:[%s218 + $0x210] sm:$0xff]
      %v314 = vld [vmem:[%s218 + $0x218] sm:$0xff]
      %v315 = vld [vmem:[%s218 + $0x220] sm:$0xff]
      %v316 = vld [vmem:[%s218 + $0x228] sm:$0xff]
      %v317 = vld [vmem:[%s218 + $0x230] sm:$0xff]
      %v318 = vld [vmem:[%s218 + $0x238] sm:$0xff]
      %v319 = vld [vmem:[%s218 + $0x240] sm:$0xff]
      %v320 = vld [vmem:[%s218 + $0x248] sm:$0xff]
      %v321 = vld [vmem:[%s218 + $0x250] sm:$0xff]
      %v322 = vld [vmem:[%s218 + $0x258] sm:$0xff]
      %v323 = vld [vmem:[%s218 + $0x260] sm:$0xff]
      %v324 = vld [vmem:[%s218 + $0x268] sm:$0xff]
      %v325 = vld [vmem:[%s218 + $0x270] sm:$0xff]
      %v326 = vld [vmem:[%s218 + $0x278] sm:$0xff]
      %v327 = vld [vmem:[%s218 + $0x280] sm:$0xff]
      %v328 = vld [vmem:[%s218 + $0x288] sm:$0xff]
      %v329 = vld [vmem:[%s218 + $0x290] sm:$0xff]
      %v330 = vld [vmem:[%s218 + $0x298] sm:$0xff]
      %v331 = vld [vmem:[%s218 + $0x2a0] sm:$0xff]
      %v332 = vld [vmem:[%s218 + $0x2a8] sm:$0xff]
      %v333 = vld [vmem:[%s218 + $0x2b0] sm:$0xff]
      %v334 = vld [vmem:[%s218 + $0x2b8] sm:$0xff]
      %v335 = vld [vmem:[%s218 + $0x2c0] sm:$0xff]
      %v336 = vld [vmem:[%s218 + $0x2c8] sm:$0xff]
      %v337 = vld [vmem:[%s218 + $0x2d0] sm:$0xff]
      %v338 = vld [vmem:[%s218 + $0x2d8] sm:$0xff]
      %v339 = vld [vmem:[%s218 + $0x2e0] sm:$0xff]
      %v340 = vld [vmem:[%s218 + $0x2e8] sm:$0xff]
      %v341 = vld [vmem:[%s218 + $0x2f0] sm:$0xff]
      %v342 = vld [vmem:[%s218 + $0x2f8] sm:$0xff]
      %v343 = vld [vmem:[%s218 + $0x300] sm:$0xff]
      %v344 = vld [vmem:[%s218 + $0x308] sm:$0xff]
      %v345 = vld [vmem:[%s218 + $0x310] sm:$0xff]
      %v346 = vld [vmem:[%s218 + $0x318] sm:$0xff]
      %v347 = vld [vmem:[%s218 + $0x320] sm:$0xff]
      %v348 = vld [vmem:[%s218 + $0x328] sm:$0xff]
      %v349 = vld [vmem:[%s218 + $0x330] sm:$0xff]
      %v350 = vld [vmem:[%s218 + $0x338] sm:$0xff]
      %v351 = vld [vmem:[%s218 + $0x340] sm:$0xff]
      %v352 = vld [vmem:[%s218 + $0x348] sm:$0xff]
      %v353 = vld [vmem:[%s218 + $0x350] sm:$0xff]
      %v354 = vld [vmem:[%s218 + $0x358] sm:$0xff]
      %v355 = vld [vmem:[%s218 + $0x360] sm:$0xff]
      %v356 = vld [vmem:[%s218 + $0x368] sm:$0xff]
      %v357 = vld [vmem:[%s218 + $0x370] sm:$0xff]
      %v358 = vld [vmem:[%s218 + $0x378] sm:$0xff]
      %v359 = vld [vmem:[%s218 + $0x380] sm:$0xff]
      %v360 = vld [vmem:[%s218 + $0x388] sm:$0xff]
      %v361 = vld [vmem:[%s218 + $0x390] sm:$0xff]
      %v362 = vld [vmem:[%s218 + $0x398] sm:$0xff]
      %v363 = vld [vmem:[%s218 + $0x3a0] sm:$0xff]
      %v364 = vld [vmem:[%s218 + $0x3a8] sm:$0xff]
      %v365 = vld [vmem:[%s218 + $0x3b0] sm:$0xff]
      %v366 = vld [vmem:[%s218 + $0x3b8] sm:$0xff]
      %v367 = vld [vmem:[%s218 + $0x3c0] sm:$0xff]
      %v368 = vld [vmem:[%s218 + $0x3c8] sm:$0xff]
      %v369 = vld [vmem:[%s218 + $0x3d0] sm:$0xff]
      %v370 = vld [vmem:[%s218 + $0x3d8] sm:$0xff]
      %v371 = vld [vmem:[%s218 + $0x3e0] sm:$0xff]
      %v372 = vld [vmem:[%s218 + $0x3e8] sm:$0xff]
      %v373 = vld [vmem:[%s218 + $0x3f0] sm:$0xff]
      %v374 = vld [vmem:[%s218 + $0x3f8] sm:$0xff]
      %v375 = vld [vmem:[%s218 + $0x400] sm:$0xff]
      %v376 = vld [vmem:[%s218 + $0x408] sm:$0xff]
      %v377 = vld [vmem:[%s218 + $0x410] sm:$0xff]
      %v378 = vld [vmem:[%s218 + $0x418] sm:$0xff]
      %v379 = vld [vmem:[%s218 + $0x420] sm:$0xff]
      %v380 = vld [vmem:[%s218 + $0x428] sm:$0xff]
      %v381 = vld [vmem:[%s218 + $0x430] sm:$0xff]
      %v382 = vld [vmem:[%s218 + $0x438] sm:$0xff]
      %v383 = vld [vmem:[%s218 + $0x440] sm:$0xff]
      %v384 = vld [vmem:[%s218 + $0x448] sm:$0xff]
      %v385 = vld [vmem:[%s218 + $0x450] sm:$0xff]
      %v386 = vld [vmem:[%s218 + $0x458] sm:$0xff]
      %v387 = vld [vmem:[%s218 + $0x460] sm:$0xff]
      %v388 = vld [vmem:[%s218 + $0x468] sm:$0xff]
      %v389 = vld [vmem:[%s218 + $0x470] sm:$0xff]
      %v390 = vld [vmem:[%s218 + $0x478] sm:$0xff]
      %v391 = vld [vmem:[%s218 + $0x480] sm:$0xff]
      %v392 = vld [vmem:[%s218 + $0x488] sm:$0xff]
      %v393 = vld [vmem:[%s218 + $0x490] sm:$0xff]
      %v394 = vld [vmem:[%s218 + $0x498] sm:$0xff]
      %v395 = vld [vmem:[%s218 + $0x4a0] sm:$0xff]
      %v396 = vld [vmem:[%s218 + $0x4a8] sm:$0xff]
      %v397 = vld [vmem:[%s218 + $0x4b0] sm:$0xff]
      %v398 = vld [vmem:[%s218 + $0x4b8] sm:$0xff]
      %v399 = vld [vmem:[%s218 + $0x4c0] sm:$0xff]
      %v400 = vld [vmem:[%s218 + $0x4c8] sm:$0xff]
      %v401 = vld [vmem:[%s218 + $0x4d0] sm:$0xff]
      %v402 = vld [vmem:[%s218 + $0x4d8] sm:$0xff]
      %v403 = vld [vmem:[%s218 + $0x4e0] sm:$0xff]
      %v404 = vld [vmem:[%s218 + $0x4e8] sm:$0xff]
      %v405 = vld [vmem:[%s218 + $0x4f0] sm:$0xff]
      %v406 = vld [vmem:[%s218 + $0x4f8] sm:$0xff]
      %v407 = vld [vmem:[%s218 + $0x500] sm:$0xff]
      %v408 = vld [vmem:[%s218 + $0x508] sm:$0xff]
      %v409 = vld [vmem:[%s218 + $0x510] sm:$0xff]
      %v410 = vld [vmem:[%s218 + $0x518] sm:$0xff]
      %v411 = vld [vmem:[%s218 + $0x520] sm:$0xff]
      %v412 = vld [vmem:[%s218 + $0x528] sm:$0xff]
      %v413 = vld [vmem:[%s218 + $0x530] sm:$0xff]
      %v414 = vld [vmem:[%s218 + $0x538] sm:$0xff]
      %v415 = vld [vmem:[%s218 + $0x540] sm:$0xff]
      %v416 = vld [vmem:[%s218 + $0x548] sm:$0xff]
      %v417 = vld [vmem:[%s218 + $0x550] sm:$0xff]
      %v418 = vld [vmem:[%s218 + $0x558] sm:$0xff]
      %v419 = vld [vmem:[%s218 + $0x560] sm:$0xff]
      %v420 = vld [vmem:[%s218 + $0x568] sm:$0xff]
      %v421 = vld [vmem:[%s218 + $0x570] sm:$0xff]
      %v422 = vld [vmem:[%s218 + $0x578] sm:$0xff]
      %v423 = vld [vmem:[%s218 + $0x580] sm:$0xff]
      %v424 = vld [vmem:[%s218 + $0x588] sm:$0xff]
      %v425 = vld [vmem:[%s218 + $0x590] sm:$0xff]
      %v426 = vld [vmem:[%s218 + $0x598] sm:$0xff]
      %v427 = vld [vmem:[%s218 + $0x5a0] sm:$0xff]
      %v428 = vld [vmem:[%s218 + $0x5a8] sm:$0xff]
      %v429 = vld [vmem:[%s218 + $0x5b0] sm:$0xff]
      %v430 = vld [vmem:[%s218 + $0x5b8] sm:$0xff]
      %v431 = vld [vmem:[%s218 + $0x5c0] sm:$0xff]
      %v432 = vld [vmem:[%s218 + $0x5c8] sm:$0xff]
      %v433 = vld [vmem:[%s218 + $0x5d0] sm:$0xff]
      %v434 = vld [vmem:[%s218 + $0x5d8] sm:$0xff]
      %v435 = vld [vmem:[%s218 + $0x5e0] sm:$0xff]
      %v436 = vld [vmem:[%s218 + $0x5e8] sm:$0xff]
      %v437 = vld [vmem:[%s218 + $0x5f0] sm:$0xff]
      %v438 = vld [vmem:[%s218 + $0x5f8] sm:$0xff]
      %v439 = vld [vmem:[%s218 + $0x600] sm:$0xff]
      %v440 = vld [vmem:[%s218 + $0x608] sm:$0xff]
      %v441 = vld [vmem:[%s218 + $0x610] sm:$0xff]
      %v442 = vld [vmem:[%s218 + $0x618] sm:$0xff]
      %v443 = vld [vmem:[%s218 + $0x620] sm:$0xff]
      %v444 = vld [vmem:[%s218 + $0x628] sm:$0xff]
      %v445 = vld [vmem:[%s218 + $0x630] sm:$0xff]
      %v446 = vld [vmem:[%s218 + $0x638] sm:$0xff]
      %v447 = vld [vmem:[%s218 + $0x640] sm:$0xff]
      %v448 = vld [vmem:[%s218 + $0x648] sm:$0xff]
      %v449 = vld [vmem:[%s218 + $0x650] sm:$0xff]
      %v450 = vld [vmem:[%s218 + $0x658] sm:$0xff]
      %v451 = vld [vmem:[%s218 + $0x660] sm:$0xff]
      %v452 = vld [vmem:[%s218 + $0x668] sm:$0xff]
      %v453 = vld [vmem:[%s218 + $0x670] sm:$0xff]
      %v454 = vld [vmem:[%s218 + $0x678] sm:$0xff]
      %v455 = vld [vmem:[%s218 + $0x680] sm:$0xff]
      %v456 = vld [vmem:[%s218 + $0x688] sm:$0xff]
      %v457 = vld [vmem:[%s218 + $0x690] sm:$0xff]
      %v458 = vld [vmem:[%s218 + $0x698] sm:$0xff]
      %v459 = vld [vmem:[%s218 + $0x6a0] sm:$0xff]
      %v460 = vld [vmem:[%s218 + $0x6a8] sm:$0xff]
      %v461 = vld [vmem:[%s218 + $0x6b0] sm:$0xff]
      %v462 = vld [vmem:[%s218 + $0x6b8] sm:$0xff]
      %v463 = vld [vmem:[%s218 + $0x6c0] sm:$0xff]
      %v464 = vld [vmem:[%s218 + $0x6c8] sm:$0xff]
      %v465 = vld [vmem:[%s218 + $0x6d0] sm:$0xff]
      %v466 = vld [vmem:[%s218 + $0x6d8] sm:$0xff]
      %v467 = vld [vmem:[%s218 + $0x6e0] sm:$0xff]
      %v468 = vld [vmem:[%s218 + $0x6e8] sm:$0xff]
      %v469 = vld [vmem:[%s218 + $0x6f0] sm:$0xff]
      %v470 = vld [vmem:[%s218 + $0x6f8] sm:$0xff]
      %v471 = vld [vmem:[%s218 + $0x700] sm:$0xff]
      %v472 = vld [vmem:[%s218 + $0x708] sm:$0xff]
      %v473 = vld [vmem:[%s218 + $0x710] sm:$0xff]
      %v474 = vld [vmem:[%s218 + $0x718] sm:$0xff]
      %v475 = vld [vmem:[%s218 + $0x720] sm:$0xff]
      %v476 = vld [vmem:[%s218 + $0x728] sm:$0xff]
      %v477 = vld [vmem:[%s218 + $0x730] sm:$0xff]
      %v478 = vld [vmem:[%s218 + $0x738] sm:$0xff]
      %v479 = vld [vmem:[%s218 + $0x740] sm:$0xff]
      %v480 = vld [vmem:[%s218 + $0x748] sm:$0xff]
      %v481 = vld [vmem:[%s218 + $0x750] sm:$0xff]
      %v482 = vld [vmem:[%s218 + $0x758] sm:$0xff]
      %v483 = vld [vmem:[%s218 + $0x760] sm:$0xff]
      %v484 = vld [vmem:[%s218 + $0x768] sm:$0xff]
      %v485 = vld [vmem:[%s218 + $0x770] sm:$0xff]
      %v486 = vld [vmem:[%s218 + $0x778] sm:$0xff]
      %v487 = vld [vmem:[%s218 + $0x780] sm:$0xff]
      %v488 = vld [vmem:[%s218 + $0x788] sm:$0xff]
      %v489 = vld [vmem:[%s218 + $0x790] sm:$0xff]
      %v490 = vld [vmem:[%s218 + $0x798] sm:$0xff]
      %v491 = vld [vmem:[%s218 + $0x7a0] sm:$0xff]
      %v492 = vld [vmem:[%s218 + $0x7a8] sm:$0xff]
      %v493 = vld [vmem:[%s218 + $0x7b0] sm:$0xff]
      %v494 = vld [vmem:[%s218 + $0x7b8] sm:$0xff]
      %v495 = vld [vmem:[%s218 + $0x7c0] sm:$0xff]
      %v496 = vld [vmem:[%s218 + $0x7c8] sm:$0xff]
      %v497 = vld [vmem:[%s218 + $0x7d0] sm:$0xff]
      %v498 = vld [vmem:[%s218 + $0x7d8] sm:$0xff]
      %v499 = vld [vmem:[%s218 + $0x7e0] sm:$0xff]
      %v500 = vld [vmem:[%s218 + $0x7e8] sm:$0xff]
      %v501 = vld [vmem:[%s218 + $0x7f0] sm:$0xff]
      %v502 = vld [vmem:[%s218 + $0x7f8] sm:$0xff]
      %v507 = vunpack.c.l.b16 %v243
      %v508 = vunpack.c.h.b16 %v243
      %v509 = vunpack.c.l.b16 %v244
      %v510 = vunpack.c.h.b16 %v244
      %v511 = vunpack.c.l.b16 %v245
      %v512 = vunpack.c.h.b16 %v245
      %v513 = vunpack.c.l.b16 %v246
      %v514 = vunpack.c.h.b16 %v246
      %v515 = vpack.c.b16 %v507, %v507
      %v516 = vpack.c.b16 %v508, %v508
      %v517 = vpack.c.b16 %v509, %v509
      %v518 = vpack.c.b16 %v510, %v510
      %v519 = vpack.c.b16 %v511, %v511
      %v520 = vpack.c.b16 %v512, %v512
      %v521 = vpack.c.b16 %v513, %v513
      %v522 = vpack.c.b16 %v514, %v514
      %v787 = vunpack.c.l.b16 %v247
      %v788 = vunpack.c.h.b16 %v247
      %v789 = vunpack.c.l.b16 %v248
      %v790 = vunpack.c.h.b16 %v248
      %v791 = vunpack.c.l.b16 %v249
      %v792 = vunpack.c.h.b16 %v249
      %v793 = vunpack.c.l.b16 %v250
      %v794 = vunpack.c.h.b16 %v250
      %v795 = vunpack.c.l.b16 %v251
      %v796 = vunpack.c.h.b16 %v251
      %v797 = vunpack.c.l.b16 %v252
      %v798 = vunpack.c.h.b16 %v252
      %v799 = vunpack.c.l.b16 %v253
      %v800 = vunpack.c.h.b16 %v253
      %v801 = vunpack.c.l.b16 %v254
      %v802 = vunpack.c.h.b16 %v254
      %v803 = vunpack.c.l.b16 %v255
      %v804 = vunpack.c.h.b16 %v255
      %v805 = vunpack.c.l.b16 %v256
      %v806 = vunpack.c.h.b16 %v256
      %v807 = vunpack.c.l.b16 %v257
      %v808 = vunpack.c.h.b16 %v257
      %v809 = vunpack.c.l.b16 %v258
      %v810 = vunpack.c.h.b16 %v258
      %v811 = vunpack.c.l.b16 %v259
      %v812 = vunpack.c.h.b16 %v259
      %v813 = vunpack.c.l.b16 %v260
      %v814 = vunpack.c.h.b16 %v260
      %v815 = vunpack.c.l.b16 %v261
      %v816 = vunpack.c.h.b16 %v261
      %v817 = vunpack.c.l.b16 %v262
      %v818 = vunpack.c.h.b16 %v262
      %v819 = vunpack.c.l.b16 %v263
      %v820 = vunpack.c.h.b16 %v263
      %v821 = vunpack.c.l.b16 %v264
      %v822 = vunpack.c.h.b16 %v264
      %v823 = vunpack.c.l.b16 %v265
      %v824 = vunpack.c.h.b16 %v265
      %v825 = vunpack.c.l.b16 %v266
      %v826 = vunpack.c.h.b16 %v266
      %v827 = vunpack.c.l.b16 %v267
      %v828 = vunpack.c.h.b16 %v267
      %v829 = vunpack.c.l.b16 %v268
      %v830 = vunpack.c.h.b16 %v268
      %v831 = vunpack.c.l.b16 %v269
      %v832 = vunpack.c.h.b16 %v269
      %v833 = vunpack.c.l.b16 %v270
      %v834 = vunpack.c.h.b16 %v270
      %v835 = vunpack.c.l.b16 %v271
      %v836 = vunpack.c.h.b16 %v271
      %v837 = vunpack.c.l.b16 %v272
      %v838 = vunpack.c.h.b16 %v272
      %v839 = vunpack.c.l.b16 %v273
      %v840 = vunpack.c.h.b16 %v273
      %v841 = vunpack.c.l.b16 %v274
      %v842 = vunpack.c.h.b16 %v274
      %v843 = vunpack.c.l.b16 %v275
      %v844 = vunpack.c.h.b16 %v275
      %v845 = vunpack.c.l.b16 %v276
      %v846 = vunpack.c.h.b16 %v276
      %v847 = vunpack.c.l.b16 %v277
      %v848 = vunpack.c.h.b16 %v277
      %v849 = vunpack.c.l.b16 %v278
      %v850 = vunpack.c.h.b16 %v278
      %v851 = vunpack.c.l.b16 %v279
      %v852 = vunpack.c.h.b16 %v279
      %v853 = vunpack.c.l.b16 %v280
      %v854 = vunpack.c.h.b16 %v280
      %v855 = vunpack.c.l.b16 %v281
      %v856 = vunpack.c.h.b16 %v281
      %v857 = vunpack.c.l.b16 %v282
      %v858 = vunpack.c.h.b16 %v282
      %v859 = vunpack.c.l.b16 %v283
      %v860 = vunpack.c.h.b16 %v283
      %v861 = vunpack.c.l.b16 %v284
      %v862 = vunpack.c.h.b16 %v284
      %v863 = vunpack.c.l.b16 %v285
      %v864 = vunpack.c.h.b16 %v285
      %v865 = vunpack.c.l.b16 %v286
      %v866 = vunpack.c.h.b16 %v286
      %v867 = vunpack.c.l.b16 %v287
      %v868 = vunpack.c.h.b16 %v287
      %v869 = vunpack.c.l.b16 %v288
      %v870 = vunpack.c.h.b16 %v288
      %v871 = vunpack.c.l.b16 %v289
      %v872 = vunpack.c.h.b16 %v289
      %v873 = vunpack.c.l.b16 %v290
      %v874 = vunpack.c.h.b16 %v290
      %v875 = vunpack.c.l.b16 %v291
      %v876 = vunpack.c.h.b16 %v291
      %v877 = vunpack.c.l.b16 %v292
      %v878 = vunpack.c.h.b16 %v292
      %v879 = vunpack.c.l.b16 %v293
      %v880 = vunpack.c.h.b16 %v293
      %v881 = vunpack.c.l.b16 %v294
      %v882 = vunpack.c.h.b16 %v294
      %v883 = vunpack.c.l.b16 %v295
      %v884 = vunpack.c.h.b16 %v295
      %v885 = vunpack.c.l.b16 %v296
      %v886 = vunpack.c.h.b16 %v296
      %v887 = vunpack.c.l.b16 %v297
      %v888 = vunpack.c.h.b16 %v297
      %v889 = vunpack.c.l.b16 %v298
      %v890 = vunpack.c.h.b16 %v298
      %v891 = vunpack.c.l.b16 %v299
      %v892 = vunpack.c.h.b16 %v299
      %v893 = vunpack.c.l.b16 %v300
      %v894 = vunpack.c.h.b16 %v300
      %v895 = vunpack.c.l.b16 %v301
      %v896 = vunpack.c.h.b16 %v301
      %v897 = vunpack.c.l.b16 %v302
      %v898 = vunpack.c.h.b16 %v302
      %v899 = vunpack.c.l.b16 %v303
      %v900 = vunpack.c.h.b16 %v303
      %v901 = vunpack.c.l.b16 %v304
      %v902 = vunpack.c.h.b16 %v304
      %v903 = vunpack.c.l.b16 %v305
      %v904 = vunpack.c.h.b16 %v305
      %v905 = vunpack.c.l.b16 %v306
      %v906 = vunpack.c.h.b16 %v306
      %v907 = vunpack.c.l.b16 %v307
      %v908 = vunpack.c.h.b16 %v307
      %v909 = vunpack.c.l.b16 %v308
      %v910 = vunpack.c.h.b16 %v308
      %v911 = vunpack.c.l.b16 %v309
      %v912 = vunpack.c.h.b16 %v309
      %v913 = vunpack.c.l.b16 %v310
      %v914 = vunpack.c.h.b16 %v310
      %v915 = vunpack.c.l.b16 %v311
      %v916 = vunpack.c.h.b16 %v311
      %v917 = vunpack.c.l.b16 %v312
      %v918 = vunpack.c.h.b16 %v312
      %v919 = vunpack.c.l.b16 %v313
      %v920 = vunpack.c.h.b16 %v313
      %v921 = vunpack.c.l.b16 %v314
      %v922 = vunpack.c.h.b16 %v314
      %v923 = vunpack.c.l.b16 %v315
      %v924 = vunpack.c.h.b16 %v315
      %v925 = vunpack.c.l.b16 %v316
      %v926 = vunpack.c.h.b16 %v316
      %v927 = vunpack.c.l.b16 %v317
      %v928 = vunpack.c.h.b16 %v317
      %v929 = vunpack.c.l.b16 %v318
      %v930 = vunpack.c.h.b16 %v318
      %v931 = vunpack.c.l.b16 %v319
      %v932 = vunpack.c.h.b16 %v319
      %v933 = vunpack.c.l.b16 %v320
      %v934 = vunpack.c.h.b16 %v320
      %v935 = vunpack.c.l.b16 %v321
      %v936 = vunpack.c.h.b16 %v321
      %v937 = vunpack.c.l.b16 %v322
      %v938 = vunpack.c.h.b16 %v322
      %v939 = vunpack.c.l.b16 %v323
      %v940 = vunpack.c.h.b16 %v323
      %v941 = vunpack.c.l.b16 %v324
      %v942 = vunpack.c.h.b16 %v324
      %v943 = vunpack.c.l.b16 %v325
      %v944 = vunpack.c.h.b16 %v325
      %v945 = vunpack.c.l.b16 %v326
      %v946 = vunpack.c.h.b16 %v326
      %v947 = vunpack.c.l.b16 %v327
      %v948 = vunpack.c.h.b16 %v327
      %v949 = vunpack.c.l.b16 %v328
      %v950 = vunpack.c.h.b16 %v328
      %v951 = vunpack.c.l.b16 %v329
      %v952 = vunpack.c.h.b16 %v329
      %v953 = vunpack.c.l.b16 %v330
      %v954 = vunpack.c.h.b16 %v330
      %v955 = vunpack.c.l.b16 %v331
      %v956 = vunpack.c.h.b16 %v331
      %v957 = vunpack.c.l.b16 %v332
      %v958 = vunpack.c.h.b16 %v332
      %v959 = vunpack.c.l.b16 %v333
      %v960 = vunpack.c.h.b16 %v333
      %v961 = vunpack.c.l.b16 %v334
      %v962 = vunpack.c.h.b16 %v334
      %v963 = vunpack.c.l.b16 %v335
      %v964 = vunpack.c.h.b16 %v335
      %v965 = vunpack.c.l.b16 %v336
      %v966 = vunpack.c.h.b16 %v336
      %v967 = vunpack.c.l.b16 %v337
      %v968 = vunpack.c.h.b16 %v337
      %v969 = vunpack.c.l.b16 %v338
      %v970 = vunpack.c.h.b16 %v338
      %v971 = vunpack.c.l.b16 %v339
      %v972 = vunpack.c.h.b16 %v339
      %v973 = vunpack.c.l.b16 %v340
      %v974 = vunpack.c.h.b16 %v340
      %v975 = vunpack.c.l.b16 %v341
      %v976 = vunpack.c.h.b16 %v341
      %v977 = vunpack.c.l.b16 %v342
      %v978 = vunpack.c.h.b16 %v342
      %v979 = vunpack.c.l.b16 %v343
      %v980 = vunpack.c.h.b16 %v343
      %v981 = vunpack.c.l.b16 %v344
      %v982 = vunpack.c.h.b16 %v344
      %v983 = vunpack.c.l.b16 %v345
      %v984 = vunpack.c.h.b16 %v345
      %v985 = vunpack.c.l.b16 %v346
      %v986 = vunpack.c.h.b16 %v346
      %v987 = vunpack.c.l.b16 %v347
      %v988 = vunpack.c.h.b16 %v347
      %v989 = vunpack.c.l.b16 %v348
      %v990 = vunpack.c.h.b16 %v348
      %v991 = vunpack.c.l.b16 %v349
      %v992 = vunpack.c.h.b16 %v349
      %v993 = vunpack.c.l.b16 %v350
      %v994 = vunpack.c.h.b16 %v350
      %v995 = vunpack.c.l.b16 %v351
      %v996 = vunpack.c.h.b16 %v351
      %v997 = vunpack.c.l.b16 %v352
      %v998 = vunpack.c.h.b16 %v352
      %v999 = vunpack.c.l.b16 %v353
      %v1000 = vunpack.c.h.b16 %v353
      %v1001 = vunpack.c.l.b16 %v354
      %v1002 = vunpack.c.h.b16 %v354
      %v1003 = vunpack.c.l.b16 %v355
      %v1004 = vunpack.c.h.b16 %v355
      %v1005 = vunpack.c.l.b16 %v356
      %v1006 = vunpack.c.h.b16 %v356
      %v1007 = vunpack.c.l.b16 %v357
      %v1008 = vunpack.c.h.b16 %v357
      %v1009 = vunpack.c.l.b16 %v358
      %v1010 = vunpack.c.h.b16 %v358
      %v1011 = vunpack.c.l.b16 %v359
      %v1012 = vunpack.c.h.b16 %v359
      %v1013 = vunpack.c.l.b16 %v360
      %v1014 = vunpack.c.h.b16 %v360
      %v1015 = vunpack.c.l.b16 %v361
      %v1016 = vunpack.c.h.b16 %v361
      %v1017 = vunpack.c.l.b16 %v362
      %v1018 = vunpack.c.h.b16 %v362
      %v1019 = vunpack.c.l.b16 %v363
      %v1020 = vunpack.c.h.b16 %v363
      %v1021 = vunpack.c.l.b16 %v364
      %v1022 = vunpack.c.h.b16 %v364
      %v1023 = vunpack.c.l.b16 %v365
      %v1024 = vunpack.c.h.b16 %v365
      %v1025 = vunpack.c.l.b16 %v366
      %v1026 = vunpack.c.h.b16 %v366
      %v1027 = vunpack.c.l.b16 %v367
      %v1028 = vunpack.c.h.b16 %v367
      %v1029 = vunpack.c.l.b16 %v368
      %v1030 = vunpack.c.h.b16 %v368
      %v1031 = vunpack.c.l.b16 %v369
      %v1032 = vunpack.c.h.b16 %v369
      %v1033 = vunpack.c.l.b16 %v370
      %v1034 = vunpack.c.h.b16 %v370
      %v1035 = vunpack.c.l.b16 %v371
      %v1036 = vunpack.c.h.b16 %v371
      %v1037 = vunpack.c.l.b16 %v372
      %v1038 = vunpack.c.h.b16 %v372
      %v1039 = vunpack.c.l.b16 %v373
      %v1040 = vunpack.c.h.b16 %v373
      %v1041 = vunpack.c.l.b16 %v374
      %v1042 = vunpack.c.h.b16 %v374
      %v1043 = vunpack.c.l.b16 %v375
      %v1044 = vunpack.c.h.b16 %v375
      %v1045 = vunpack.c.l.b16 %v376
      %v1046 = vunpack.c.h.b16 %v376
      %v1047 = vunpack.c.l.b16 %v377
      %v1048 = vunpack.c.h.b16 %v377
      %v1049 = vunpack.c.l.b16 %v378
      %v1050 = vunpack.c.h.b16 %v378
      %v1051 = vunpack.c.l.b16 %v379
      %v1052 = vunpack.c.h.b16 %v379
      %v1053 = vunpack.c.l.b16 %v380
      %v1054 = vunpack.c.h.b16 %v380
      %v1055 = vunpack.c.l.b16 %v381
      %v1056 = vunpack.c.h.b16 %v381
      %v1057 = vunpack.c.l.b16 %v382
      %v1058 = vunpack.c.h.b16 %v382
      %v1059 = vunpack.c.l.b16 %v383
      %v1060 = vunpack.c.h.b16 %v383
      %v1061 = vunpack.c.l.b16 %v384
      %v1062 = vunpack.c.h.b16 %v384
      %v1063 = vunpack.c.l.b16 %v385
      %v1064 = vunpack.c.h.b16 %v385
      %v1065 = vunpack.c.l.b16 %v386
      %v1066 = vunpack.c.h.b16 %v386
      %v1067 = vunpack.c.l.b16 %v387
      %v1068 = vunpack.c.h.b16 %v387
      %v1069 = vunpack.c.l.b16 %v388
      %v1070 = vunpack.c.h.b16 %v388
      %v1071 = vunpack.c.l.b16 %v389
      %v1072 = vunpack.c.h.b16 %v389
      %v1073 = vunpack.c.l.b16 %v390
      %v1074 = vunpack.c.h.b16 %v390
      %v1075 = vunpack.c.l.b16 %v391
      %v1076 = vunpack.c.h.b16 %v391
      %v1077 = vunpack.c.l.b16 %v392
      %v1078 = vunpack.c.h.b16 %v392
      %v1079 = vunpack.c.l.b16 %v393
      %v1080 = vunpack.c.h.b16 %v393
      %v1081 = vunpack.c.l.b16 %v394
      %v1082 = vunpack.c.h.b16 %v394
      %v1083 = vunpack.c.l.b16 %v395
      %v1084 = vunpack.c.h.b16 %v395
      %v1085 = vunpack.c.l.b16 %v396
      %v1086 = vunpack.c.h.b16 %v396
      %v1087 = vunpack.c.l.b16 %v397
      %v1088 = vunpack.c.h.b16 %v397
      %v1089 = vunpack.c.l.b16 %v398
      %v1090 = vunpack.c.h.b16 %v398
      %v1091 = vunpack.c.l.b16 %v399
      %v1092 = vunpack.c.h.b16 %v399
      %v1093 = vunpack.c.l.b16 %v400
      %v1094 = vunpack.c.h.b16 %v400
      %v1095 = vunpack.c.l.b16 %v401
      %v1096 = vunpack.c.h.b16 %v401
      %v1097 = vunpack.c.l.b16 %v402
      %v1098 = vunpack.c.h.b16 %v402
      %v1099 = vunpack.c.l.b16 %v403
      %v1100 = vunpack.c.h.b16 %v403
      %v1101 = vunpack.c.l.b16 %v404
      %v1102 = vunpack.c.h.b16 %v404
      %v1103 = vunpack.c.l.b16 %v405
      %v1104 = vunpack.c.h.b16 %v405
      %v1105 = vunpack.c.l.b16 %v406
      %v1106 = vunpack.c.h.b16 %v406
      %v1107 = vunpack.c.l.b16 %v407
      %v1108 = vunpack.c.h.b16 %v407
      %v1109 = vunpack.c.l.b16 %v408
      %v1110 = vunpack.c.h.b16 %v408
      %v1111 = vunpack.c.l.b16 %v409
      %v1112 = vunpack.c.h.b16 %v409
      %v1113 = vunpack.c.l.b16 %v410
      %v1114 = vunpack.c.h.b16 %v410
      %v1115 = vunpack.c.l.b16 %v411
      %v1116 = vunpack.c.h.b16 %v411
      %v1117 = vunpack.c.l.b16 %v412
      %v1118 = vunpack.c.h.b16 %v412
      %v1119 = vunpack.c.l.b16 %v413
      %v1120 = vunpack.c.h.b16 %v413
      %v1121 = vunpack.c.l.b16 %v414
      %v1122 = vunpack.c.h.b16 %v414
      %v1123 = vunpack.c.l.b16 %v415
      %v1124 = vunpack.c.h.b16 %v415
      %v1125 = vunpack.c.l.b16 %v416
      %v1126 = vunpack.c.h.b16 %v416
      %v1127 = vunpack.c.l.b16 %v417
      %v1128 = vunpack.c.h.b16 %v417
      %v1129 = vunpack.c.l.b16 %v418
      %v1130 = vunpack.c.h.b16 %v418
      %v1131 = vunpack.c.l.b16 %v419
      %v1132 = vunpack.c.h.b16 %v419
      %v1133 = vunpack.c.l.b16 %v420
      %v1134 = vunpack.c.h.b16 %v420
      %v1135 = vunpack.c.l.b16 %v421
      %v1136 = vunpack.c.h.b16 %v421
      %v1137 = vunpack.c.l.b16 %v422
      %v1138 = vunpack.c.h.b16 %v422
      %v1139 = vunpack.c.l.b16 %v423
      %v1140 = vunpack.c.h.b16 %v423
      %v1141 = vunpack.c.l.b16 %v424
      %v1142 = vunpack.c.h.b16 %v424
      %v1143 = vunpack.c.l.b16 %v425
      %v1144 = vunpack.c.h.b16 %v425
      %v1145 = vunpack.c.l.b16 %v426
      %v1146 = vunpack.c.h.b16 %v426
      %v1147 = vunpack.c.l.b16 %v427
      %v1148 = vunpack.c.h.b16 %v427
      %v1149 = vunpack.c.l.b16 %v428
      %v1150 = vunpack.c.h.b16 %v428
      %v1151 = vunpack.c.l.b16 %v429
      %v1152 = vunpack.c.h.b16 %v429
      %v1153 = vunpack.c.l.b16 %v430
      %v1154 = vunpack.c.h.b16 %v430
      %v1155 = vunpack.c.l.b16 %v431
      %v1156 = vunpack.c.h.b16 %v431
      %v1157 = vunpack.c.l.b16 %v432
      %v1158 = vunpack.c.h.b16 %v432
      %v1159 = vunpack.c.l.b16 %v433
      %v1160 = vunpack.c.h.b16 %v433
      %v1161 = vunpack.c.l.b16 %v434
      %v1162 = vunpack.c.h.b16 %v434
      %v1163 = vunpack.c.l.b16 %v435
      %v1164 = vunpack.c.h.b16 %v435
      %v1165 = vunpack.c.l.b16 %v436
      %v1166 = vunpack.c.h.b16 %v436
      %v1167 = vunpack.c.l.b16 %v437
      %v1168 = vunpack.c.h.b16 %v437
      %v1169 = vunpack.c.l.b16 %v438
      %v1170 = vunpack.c.h.b16 %v438
      %v1171 = vunpack.c.l.b16 %v439
      %v1172 = vunpack.c.h.b16 %v439
      %v1173 = vunpack.c.l.b16 %v440
      %v1174 = vunpack.c.h.b16 %v440
      %v1175 = vunpack.c.l.b16 %v441
      %v1176 = vunpack.c.h.b16 %v441
      %v1177 = vunpack.c.l.b16 %v442
      %v1178 = vunpack.c.h.b16 %v442
      %v1179 = vunpack.c.l.b16 %v443
      %v1180 = vunpack.c.h.b16 %v443
      %v1181 = vunpack.c.l.b16 %v444
      %v1182 = vunpack.c.h.b16 %v444
      %v1183 = vunpack.c.l.b16 %v445
      %v1184 = vunpack.c.h.b16 %v445
      %v1185 = vunpack.c.l.b16 %v446
      %v1186 = vunpack.c.h.b16 %v446
      %v1187 = vunpack.c.l.b16 %v447
      %v1188 = vunpack.c.h.b16 %v447
      %v1189 = vunpack.c.l.b16 %v448
      %v1190 = vunpack.c.h.b16 %v448
      %v1191 = vunpack.c.l.b16 %v449
      %v1192 = vunpack.c.h.b16 %v449
      %v1193 = vunpack.c.l.b16 %v450
      %v1194 = vunpack.c.h.b16 %v450
      %v1195 = vunpack.c.l.b16 %v451
      %v1196 = vunpack.c.h.b16 %v451
      %v1197 = vunpack.c.l.b16 %v452
      %v1198 = vunpack.c.h.b16 %v452
      %v1199 = vunpack.c.l.b16 %v453
      %v1200 = vunpack.c.h.b16 %v453
      %v1201 = vunpack.c.l.b16 %v454
      %v1202 = vunpack.c.h.b16 %v454
      %v1203 = vunpack.c.l.b16 %v455
      %v1204 = vunpack.c.h.b16 %v455
      %v1205 = vunpack.c.l.b16 %v456
      %v1206 = vunpack.c.h.b16 %v456
      %v1207 = vunpack.c.l.b16 %v457
      %v1208 = vunpack.c.h.b16 %v457
      %v1209 = vunpack.c.l.b16 %v458
      %v1210 = vunpack.c.h.b16 %v458
      %v1211 = vunpack.c.l.b16 %v459
      %v1212 = vunpack.c.h.b16 %v459
      %v1213 = vunpack.c.l.b16 %v460
      %v1214 = vunpack.c.h.b16 %v460
      %v1215 = vunpack.c.l.b16 %v461
      %v1216 = vunpack.c.h.b16 %v461
      %v1217 = vunpack.c.l.b16 %v462
      %v1218 = vunpack.c.h.b16 %v462
      %v1219 = vunpack.c.l.b16 %v463
      %v1220 = vunpack.c.h.b16 %v463
      %v1221 = vunpack.c.l.b16 %v464
      %v1222 = vunpack.c.h.b16 %v464
      %v1223 = vunpack.c.l.b16 %v465
      %v1224 = vunpack.c.h.b16 %v465
      %v1225 = vunpack.c.l.b16 %v466
      %v1226 = vunpack.c.h.b16 %v466
      %v1227 = vunpack.c.l.b16 %v467
      %v1228 = vunpack.c.h.b16 %v467
      %v1229 = vunpack.c.l.b16 %v468
      %v1230 = vunpack.c.h.b16 %v468
      %v1231 = vunpack.c.l.b16 %v469
      %v1232 = vunpack.c.h.b16 %v469
      %v1233 = vunpack.c.l.b16 %v470
      %v1234 = vunpack.c.h.b16 %v470
      %v1235 = vunpack.c.l.b16 %v471
      %v1236 = vunpack.c.h.b16 %v471
      %v1237 = vunpack.c.l.b16 %v472
      %v1238 = vunpack.c.h.b16 %v472
      %v1239 = vunpack.c.l.b16 %v473
      %v1240 = vunpack.c.h.b16 %v473
      %v1241 = vunpack.c.l.b16 %v474
      %v1242 = vunpack.c.h.b16 %v474
      %v1243 = vunpack.c.l.b16 %v475
      %v1244 = vunpack.c.h.b16 %v475
      %v1245 = vunpack.c.l.b16 %v476
      %v1246 = vunpack.c.h.b16 %v476
      %v1247 = vunpack.c.l.b16 %v477
      %v1248 = vunpack.c.h.b16 %v477
      %v1249 = vunpack.c.l.b16 %v478
      %v1250 = vunpack.c.h.b16 %v478
      %v1251 = vunpack.c.l.b16 %v479
      %v1252 = vunpack.c.h.b16 %v479
      %v1253 = vunpack.c.l.b16 %v480
      %v1254 = vunpack.c.h.b16 %v480
      %v1255 = vunpack.c.l.b16 %v481
      %v1256 = vunpack.c.h.b16 %v481
      %v1257 = vunpack.c.l.b16 %v482
      %v1258 = vunpack.c.h.b16 %v482
      %v1259 = vunpack.c.l.b16 %v483
      %v1260 = vunpack.c.h.b16 %v483
      %v1261 = vunpack.c.l.b16 %v484
      %v1262 = vunpack.c.h.b16 %v484
      %v1263 = vunpack.c.l.b16 %v485
      %v1264 = vunpack.c.h.b16 %v485
      %v1265 = vunpack.c.l.b16 %v486
      %v1266 = vunpack.c.h.b16 %v486
      %v1267 = vunpack.c.l.b16 %v487
      %v1268 = vunpack.c.h.b16 %v487
      %v1269 = vunpack.c.l.b16 %v488
      %v1270 = vunpack.c.h.b16 %v488
      %v1271 = vunpack.c.l.b16 %v489
      %v1272 = vunpack.c.h.b16 %v489
      %v1273 = vunpack.c.l.b16 %v490
      %v1274 = vunpack.c.h.b16 %v490
      %v1275 = vunpack.c.l.b16 %v491
      %v1276 = vunpack.c.h.b16 %v491
      %v1277 = vunpack.c.l.b16 %v492
      %v1278 = vunpack.c.h.b16 %v492
      %v1279 = vunpack.c.l.b16 %v493
      %v1280 = vunpack.c.h.b16 %v493
      %v1281 = vunpack.c.l.b16 %v494
      %v1282 = vunpack.c.h.b16 %v494
      %v1283 = vunpack.c.l.b16 %v495
      %v1284 = vunpack.c.h.b16 %v495
      %v1285 = vunpack.c.l.b16 %v496
      %v1286 = vunpack.c.h.b16 %v496
      %v1287 = vunpack.c.l.b16 %v497
      %v1288 = vunpack.c.h.b16 %v497
      %v1289 = vunpack.c.l.b16 %v498
      %v1290 = vunpack.c.h.b16 %v498
      %v1291 = vunpack.c.l.b16 %v499
      %v1292 = vunpack.c.h.b16 %v499
      %v1293 = vunpack.c.l.b16 %v500
      %v1294 = vunpack.c.h.b16 %v500
      %v1295 = vunpack.c.l.b16 %v501
      %v1296 = vunpack.c.h.b16 %v501
      %v1297 = vunpack.c.l.b16 %v502
      %v1298 = vunpack.c.h.b16 %v502
      %v1299 = vpack.c.b16 %v791, %v787
      %v1300 = vpack.c.b16 %v792, %v788
      %v1301 = vpack.c.b16 %v793, %v789
      %v1302 = vpack.c.b16 %v794, %v790
      %v1303 = vpack.c.b16 %v799, %v795
      %v1304 = vpack.c.b16 %v800, %v796
      %v1305 = vpack.c.b16 %v801, %v797
      %v1306 = vpack.c.b16 %v802, %v798
      %v1307 = vpack.c.b16 %v807, %v803
      %v1308 = vpack.c.b16 %v808, %v804
      %v1309 = vpack.c.b16 %v809, %v805
      %v1310 = vpack.c.b16 %v810, %v806
      %v1311 = vpack.c.b16 %v815, %v811
      %v1312 = vpack.c.b16 %v816, %v812
      %v1313 = vpack.c.b16 %v817, %v813
      %v1314 = vpack.c.b16 %v818, %v814
      %v1315 = vpack.c.b16 %v823, %v819
      %v1316 = vpack.c.b16 %v824, %v820
      %v1317 = vpack.c.b16 %v825, %v821
      %v1318 = vpack.c.b16 %v826, %v822
      %v1319 = vpack.c.b16 %v831, %v827
      %v1320 = vpack.c.b16 %v832, %v828
      %v1321 = vpack.c.b16 %v833, %v829
      %v1322 = vpack.c.b16 %v834, %v830
      %v1323 = vpack.c.b16 %v839, %v835
      %v1324 = vpack.c.b16 %v840, %v836
      %v1325 = vpack.c.b16 %v841, %v837
      %v1326 = vpack.c.b16 %v842, %v838
      %v1327 = vpack.c.b16 %v847, %v843
      %v1328 = vpack.c.b16 %v848, %v844
      %v1329 = vpack.c.b16 %v849, %v845
      %v1330 = vpack.c.b16 %v850, %v846
      %v1331 = vpack.c.b16 %v855, %v851
      %v1332 = vpack.c.b16 %v856, %v852
      %v1333 = vpack.c.b16 %v857, %v853
      %v1334 = vpack.c.b16 %v858, %v854
      %v1335 = vpack.c.b16 %v863, %v859
      %v1336 = vpack.c.b16 %v864, %v860
      %v1337 = vpack.c.b16 %v865, %v861
      %v1338 = vpack.c.b16 %v866, %v862
      %v1339 = vpack.c.b16 %v871, %v867
      %v1340 = vpack.c.b16 %v872, %v868
      %v1341 = vpack.c.b16 %v873, %v869
      %v1342 = vpack.c.b16 %v874, %v870
      %v1343 = vpack.c.b16 %v879, %v875
      %v1344 = vpack.c.b16 %v880, %v876
      %v1345 = vpack.c.b16 %v881, %v877
      %v1346 = vpack.c.b16 %v882, %v878
      %v1347 = vpack.c.b16 %v887, %v883
      %v1348 = vpack.c.b16 %v888, %v884
      %v1349 = vpack.c.b16 %v889, %v885
      %v1350 = vpack.c.b16 %v890, %v886
      %v1351 = vpack.c.b16 %v895, %v891
      %v1352 = vpack.c.b16 %v896, %v892
      %v1353 = vpack.c.b16 %v897, %v893
      %v1354 = vpack.c.b16 %v898, %v894
      %v1355 = vpack.c.b16 %v903, %v899
      %v1356 = vpack.c.b16 %v904, %v900
      %v1357 = vpack.c.b16 %v905, %v901
      %v1358 = vpack.c.b16 %v906, %v902
      %v1359 = vpack.c.b16 %v911, %v907
      %v1360 = vpack.c.b16 %v912, %v908
      %v1361 = vpack.c.b16 %v913, %v909
      %v1362 = vpack.c.b16 %v914, %v910
      %v1363 = vpack.c.b16 %v919, %v915
      %v1364 = vpack.c.b16 %v920, %v916
      %v1365 = vpack.c.b16 %v921, %v917
      %v1366 = vpack.c.b16 %v922, %v918
      %v1367 = vpack.c.b16 %v927, %v923
      %v1368 = vpack.c.b16 %v928, %v924
      %v1369 = vpack.c.b16 %v929, %v925
      %v1370 = vpack.c.b16 %v930, %v926
      %v1371 = vpack.c.b16 %v935, %v931
      %v1372 = vpack.c.b16 %v936, %v932
      %v1373 = vpack.c.b16 %v937, %v933
      %v1374 = vpack.c.b16 %v938, %v934
      %v1375 = vpack.c.b16 %v943, %v939
      %v1376 = vpack.c.b16 %v944, %v940
      %v1377 = vpack.c.b16 %v945, %v941
      %v1378 = vpack.c.b16 %v946, %v942
      %v1379 = vpack.c.b16 %v951, %v947
      %v1380 = vpack.c.b16 %v952, %v948
      %v1381 = vpack.c.b16 %v953, %v949
      %v1382 = vpack.c.b16 %v954, %v950
      %v1383 = vpack.c.b16 %v959, %v955
      %v1384 = vpack.c.b16 %v960, %v956
      %v1385 = vpack.c.b16 %v961, %v957
      %v1386 = vpack.c.b16 %v962, %v958
      %v1387 = vpack.c.b16 %v967, %v963
      %v1388 = vpack.c.b16 %v968, %v964
      %v1389 = vpack.c.b16 %v969, %v965
      %v1390 = vpack.c.b16 %v970, %v966
      %v1391 = vpack.c.b16 %v975, %v971
      %v1392 = vpack.c.b16 %v976, %v972
      %v1393 = vpack.c.b16 %v977, %v973
      %v1394 = vpack.c.b16 %v978, %v974
      %v1395 = vpack.c.b16 %v983, %v979
      %v1396 = vpack.c.b16 %v984, %v980
      %v1397 = vpack.c.b16 %v985, %v981
      %v1398 = vpack.c.b16 %v986, %v982
      %v1399 = vpack.c.b16 %v991, %v987
      %v1400 = vpack.c.b16 %v992, %v988
      %v1401 = vpack.c.b16 %v993, %v989
      %v1402 = vpack.c.b16 %v994, %v990
      %v1403 = vpack.c.b16 %v999, %v995
      %v1404 = vpack.c.b16 %v1000, %v996
      %v1405 = vpack.c.b16 %v1001, %v997
      %v1406 = vpack.c.b16 %v1002, %v998
      %v1407 = vpack.c.b16 %v1007, %v1003
      %v1408 = vpack.c.b16 %v1008, %v1004
      %v1409 = vpack.c.b16 %v1009, %v1005
      %v1410 = vpack.c.b16 %v1010, %v1006
      %v1411 = vpack.c.b16 %v1015, %v1011
      %v1412 = vpack.c.b16 %v1016, %v1012
      %v1413 = vpack.c.b16 %v1017, %v1013
      %v1414 = vpack.c.b16 %v1018, %v1014
      %v1415 = vpack.c.b16 %v1023, %v1019
      %v1416 = vpack.c.b16 %v1024, %v1020
      %v1417 = vpack.c.b16 %v1025, %v1021
      %v1418 = vpack.c.b16 %v1026, %v1022
      %v1419 = vpack.c.b16 %v1031, %v1027
      %v1420 = vpack.c.b16 %v1032, %v1028
      %v1421 = vpack.c.b16 %v1033, %v1029
      %v1422 = vpack.c.b16 %v1034, %v1030
      %v1423 = vpack.c.b16 %v1039, %v1035
      %v1424 = vpack.c.b16 %v1040, %v1036
      %v1425 = vpack.c.b16 %v1041, %v1037
      %v1426 = vpack.c.b16 %v1042, %v1038
      %v1427 = vpack.c.b16 %v1047, %v1043
      %v1428 = vpack.c.b16 %v1048, %v1044
      %v1429 = vpack.c.b16 %v1049, %v1045
      %v1430 = vpack.c.b16 %v1050, %v1046
      %v1431 = vpack.c.b16 %v1055, %v1051
      %v1432 = vpack.c.b16 %v1056, %v1052
      %v1433 = vpack.c.b16 %v1057, %v1053
      %v1434 = vpack.c.b16 %v1058, %v1054
      %v1435 = vpack.c.b16 %v1063, %v1059
      %v1436 = vpack.c.b16 %v1064, %v1060
      %v1437 = vpack.c.b16 %v1065, %v1061
      %v1438 = vpack.c.b16 %v1066, %v1062
      %v1439 = vpack.c.b16 %v1071, %v1067
      %v1440 = vpack.c.b16 %v1072, %v1068
      %v1441 = vpack.c.b16 %v1073, %v1069
      %v1442 = vpack.c.b16 %v1074, %v1070
      %v1443 = vpack.c.b16 %v1079, %v1075
      %v1444 = vpack.c.b16 %v1080, %v1076
      %v1445 = vpack.c.b16 %v1081, %v1077
      %v1446 = vpack.c.b16 %v1082, %v1078
      %v1447 = vpack.c.b16 %v1087, %v1083
      %v1448 = vpack.c.b16 %v1088, %v1084
      %v1449 = vpack.c.b16 %v1089, %v1085
      %v1450 = vpack.c.b16 %v1090, %v1086
      %v1451 = vpack.c.b16 %v1095, %v1091
      %v1452 = vpack.c.b16 %v1096, %v1092
      %v1453 = vpack.c.b16 %v1097, %v1093
      %v1454 = vpack.c.b16 %v1098, %v1094
      %v1455 = vpack.c.b16 %v1103, %v1099
      %v1456 = vpack.c.b16 %v1104, %v1100
      %v1457 = vpack.c.b16 %v1105, %v1101
      %v1458 = vpack.c.b16 %v1106, %v1102
      %v1459 = vpack.c.b16 %v1111, %v1107
      %v1460 = vpack.c.b16 %v1112, %v1108
      %v1461 = vpack.c.b16 %v1113, %v1109
      %v1462 = vpack.c.b16 %v1114, %v1110
      %v1463 = vpack.c.b16 %v1119, %v1115
      %v1464 = vpack.c.b16 %v1120, %v1116
      %v1465 = vpack.c.b16 %v1121, %v1117
      %v1466 = vpack.c.b16 %v1122, %v1118
      %v1467 = vpack.c.b16 %v1127, %v1123
      %v1468 = vpack.c.b16 %v1128, %v1124
      %v1469 = vpack.c.b16 %v1129, %v1125
      %v1470 = vpack.c.b16 %v1130, %v1126
      %v1471 = vpack.c.b16 %v1135, %v1131
      %v1472 = vpack.c.b16 %v1136, %v1132
      %v1473 = vpack.c.b16 %v1137, %v1133
      %v1474 = vpack.c.b16 %v1138, %v1134
      %v1475 = vpack.c.b16 %v1143, %v1139
      %v1476 = vpack.c.b16 %v1144, %v1140
      %v1477 = vpack.c.b16 %v1145, %v1141
      %v1478 = vpack.c.b16 %v1146, %v1142
      %v1479 = vpack.c.b16 %v1151, %v1147
      %v1480 = vpack.c.b16 %v1152, %v1148
      %v1481 = vpack.c.b16 %v1153, %v1149
      %v1482 = vpack.c.b16 %v1154, %v1150
      %v1483 = vpack.c.b16 %v1159, %v1155
      %v1484 = vpack.c.b16 %v1160, %v1156
      %v1485 = vpack.c.b16 %v1161, %v1157
      %v1486 = vpack.c.b16 %v1162, %v1158
      %v1487 = vpack.c.b16 %v1167, %v1163
      %v1488 = vpack.c.b16 %v1168, %v1164
      %v1489 = vpack.c.b16 %v1169, %v1165
      %v1490 = vpack.c.b16 %v1170, %v1166
      %v1491 = vpack.c.b16 %v1175, %v1171
      %v1492 = vpack.c.b16 %v1176, %v1172
      %v1493 = vpack.c.b16 %v1177, %v1173
      %v1494 = vpack.c.b16 %v1178, %v1174
      %v1495 = vpack.c.b16 %v1183, %v1179
      %v1496 = vpack.c.b16 %v1184, %v1180
      %v1497 = vpack.c.b16 %v1185, %v1181
      %v1498 = vpack.c.b16 %v1186, %v1182
      %v1499 = vpack.c.b16 %v1191, %v1187
      %v1500 = vpack.c.b16 %v1192, %v1188
      %v1501 = vpack.c.b16 %v1193, %v1189
      %v1502 = vpack.c.b16 %v1194, %v1190
      %v1503 = vpack.c.b16 %v1199, %v1195
      %v1504 = vpack.c.b16 %v1200, %v1196
      %v1505 = vpack.c.b16 %v1201, %v1197
      %v1506 = vpack.c.b16 %v1202, %v1198
      %v1507 = vpack.c.b16 %v1207, %v1203
      %v1508 = vpack.c.b16 %v1208, %v1204
      %v1509 = vpack.c.b16 %v1209, %v1205
      %v1510 = vpack.c.b16 %v1210, %v1206
      %v1511 = vpack.c.b16 %v1215, %v1211
      %v1512 = vpack.c.b16 %v1216, %v1212
      %v1513 = vpack.c.b16 %v1217, %v1213
      %v1514 = vpack.c.b16 %v1218, %v1214
      %v1515 = vpack.c.b16 %v1223, %v1219
      %v1516 = vpack.c.b16 %v1224, %v1220
      %v1517 = vpack.c.b16 %v1225, %v1221
      %v1518 = vpack.c.b16 %v1226, %v1222
      %v1519 = vpack.c.b16 %v1231, %v1227
      %v1520 = vpack.c.b16 %v1232, %v1228
      %v1521 = vpack.c.b16 %v1233, %v1229
      %v1522 = vpack.c.b16 %v1234, %v1230
      %v1523 = vpack.c.b16 %v1239, %v1235
      %v1524 = vpack.c.b16 %v1240, %v1236
      %v1525 = vpack.c.b16 %v1241, %v1237
      %v1526 = vpack.c.b16 %v1242, %v1238
      %v1527 = vpack.c.b16 %v1247, %v1243
      %v1528 = vpack.c.b16 %v1248, %v1244
      %v1529 = vpack.c.b16 %v1249, %v1245
      %v1530 = vpack.c.b16 %v1250, %v1246
      %v1531 = vpack.c.b16 %v1255, %v1251
      %v1532 = vpack.c.b16 %v1256, %v1252
      %v1533 = vpack.c.b16 %v1257, %v1253
      %v1534 = vpack.c.b16 %v1258, %v1254
      %v1535 = vpack.c.b16 %v1263, %v1259
      %v1536 = vpack.c.b16 %v1264, %v1260
      %v1537 = vpack.c.b16 %v1265, %v1261
      %v1538 = vpack.c.b16 %v1266, %v1262
      %v1539 = vpack.c.b16 %v1271, %v1267
      %v1540 = vpack.c.b16 %v1272, %v1268
      %v1541 = vpack.c.b16 %v1273, %v1269
      %v1542 = vpack.c.b16 %v1274, %v1270
      %v1543 = vpack.c.b16 %v1279, %v1275
      %v1544 = vpack.c.b16 %v1280, %v1276
      %v1545 = vpack.c.b16 %v1281, %v1277
      %v1546 = vpack.c.b16 %v1282, %v1278
      %v1547 = vpack.c.b16 %v1287, %v1283
      %v1548 = vpack.c.b16 %v1288, %v1284
      %v1549 = vpack.c.b16 %v1289, %v1285
      %v1550 = vpack.c.b16 %v1290, %v1286
      %v1551 = vpack.c.b16 %v1295, %v1291
      %v1552 = vpack.c.b16 %v1296, %v1292
      %v1553 = vpack.c.b16 %v1297, %v1293
      %v1554 = vpack.c.b16 %v1298, %v1294
      %1811 = vmatpush.bf16.msra.mxu0 %v1327
      %1812 = vmatpush.bf16.msra.mxu0 %v1323
      %1813 = vmatpush.bf16.msra.mxu0 %v1319
      %1814 = vmatpush.bf16.msra.mxu0 %v1315
      %1815 = vmatpush.bf16.msra.mxu0 %v1311
      %1816 = vmatpush.bf16.msra.mxu0 %v1307
      %1817 = vmatpush.bf16.msra.mxu0 %v1303
      %1818 = vmatpush.bf16.msra.mxu0 %v1299
      %1819 = vmatmul.bf16.gmra.mxu0 %v515
      %v1820 = vpop.f32.mrf.mxu0
      %v1821 = vadd.f32 0.0, %v1820
      %v1822 = vpop.f32.mrf.mxu0
      %1823 = vdwg.mxu0
      %1824 = vmatpush.bf16.msra.mxu0 %v1359
      %1825 = vmatpush.bf16.msra.mxu0 %v1355
      %1826 = vmatpush.bf16.msra.mxu0 %v1351
      %1827 = vmatpush.bf16.msra.mxu0 %v1347
      %1828 = vmatpush.bf16.msra.mxu0 %v1343
      %1829 = vmatpush.bf16.msra.mxu0 %v1339
      %1830 = vmatpush.bf16.msra.mxu0 %v1335
      %1831 = vmatpush.bf16.msra.mxu0 %v1331
      %1832 = vmatmul.bf16.gmra.mxu0 %v516
      %v1833 = vpop.f32.mrf.mxu0
      %v1834 = vadd.f32 %v1821, %v1833
      %v1835 = vpop.f32.mrf.mxu0
      %1836 = vdwg.mxu0
      %1837 = vmatpush.bf16.msra.mxu0 %v1391
      %1838 = vmatpush.bf16.msra.mxu0 %v1387
      %1839 = vmatpush.bf16.msra.mxu0 %v1383
      %1840 = vmatpush.bf16.msra.mxu0 %v1379
      %1841 = vmatpush.bf16.msra.mxu0 %v1375
      %1842 = vmatpush.bf16.msra.mxu0 %v1371
      %1843 = vmatpush.bf16.msra.mxu0 %v1367
      %1844 = vmatpush.bf16.msra.mxu0 %v1363
      %1845 = vmatmul.bf16.gmra.mxu0 %v517
      %v1846 = vpop.f32.mrf.mxu0
      %v1847 = vadd.f32 %v1834, %v1846
      %v1848 = vpop.f32.mrf.mxu0
      %1849 = vdwg.mxu0
      %1850 = vmatpush.bf16.msra.mxu0 %v1423
      %1851 = vmatpush.bf16.msra.mxu0 %v1419
      %1852 = vmatpush.bf16.msra.mxu0 %v1415
      %1853 = vmatpush.bf16.msra.mxu0 %v1411
      %1854 = vmatpush.bf16.msra.mxu0 %v1407
      %1855 = vmatpush.bf16.msra.mxu0 %v1403
      %1856 = vmatpush.bf16.msra.mxu0 %v1399
      %1857 = vmatpush.bf16.msra.mxu0 %v1395
      %1858 = vmatmul.bf16.gmra.mxu0 %v518
      %v1859 = vpop.f32.mrf.mxu0
      %v1860 = vadd.f32 %v1847, %v1859
      %v1861 = vpop.f32.mrf.mxu0
      %1862 = vdwg.mxu0
      %1863 = vmatpush.bf16.msra.mxu0 %v1455
      %1864 = vmatpush.bf16.msra.mxu0 %v1451
      %1865 = vmatpush.bf16.msra.mxu0 %v1447
      %1866 = vmatpush.bf16.msra.mxu0 %v1443
      %1867 = vmatpush.bf16.msra.mxu0 %v1439
      %1868 = vmatpush.bf16.msra.mxu0 %v1435
      %1869 = vmatpush.bf16.msra.mxu0 %v1431
      %1870 = vmatpush.bf16.msra.mxu0 %v1427
      %1871 = vmatmul.bf16.gmra.mxu0 %v519
      %v1872 = vpop.f32.mrf.mxu0
      %v1873 = vadd.f32 %v1860, %v1872
      %v1874 = vpop.f32.mrf.mxu0
      %1875 = vdwg.mxu0
      %1876 = vmatpush.bf16.msra.mxu0 %v1487
      %1877 = vmatpush.bf16.msra.mxu0 %v1483
      %1878 = vmatpush.bf16.msra.mxu0 %v1479
      %1879 = vmatpush.bf16.msra.mxu0 %v1475
      %1880 = vmatpush.bf16.msra.mxu0 %v1471
      %1881 = vmatpush.bf16.msra.mxu0 %v1467
      %1882 = vmatpush.bf16.msra.mxu0 %v1463
      %1883 = vmatpush.bf16.msra.mxu0 %v1459
      %1884 = vmatmul.bf16.gmra.mxu0 %v520
      %v1885 = vpop.f32.mrf.mxu0
      %v1886 = vadd.f32 %v1873, %v1885
      %v1887 = vpop.f32.mrf.mxu0
      %1888 = vdwg.mxu0
      %1889 = vmatpush.bf16.msra.mxu0 %v1519
      %1890 = vmatpush.bf16.msra.mxu0 %v1515
      %1891 = vmatpush.bf16.msra.mxu0 %v1511
      %1892 = vmatpush.bf16.msra.mxu0 %v1507
      %1893 = vmatpush.bf16.msra.mxu0 %v1503
      %1894 = vmatpush.bf16.msra.mxu0 %v1499
      %1895 = vmatpush.bf16.msra.mxu0 %v1495
      %1896 = vmatpush.bf16.msra.mxu0 %v1491
      %1897 = vmatmul.bf16.gmra.mxu0 %v521
      %v1898 = vpop.f32.mrf.mxu0
      %v1899 = vadd.f32 %v1886, %v1898
      %v1900 = vpop.f32.mrf.mxu0
      %1901 = vdwg.mxu0
      %1902 = vmatpush.bf16.msra.mxu0 %v1551
      %1903 = vmatpush.bf16.msra.mxu0 %v1547
      %1904 = vmatpush.bf16.msra.mxu0 %v1543
      %1905 = vmatpush.bf16.msra.mxu0 %v1539
      %1906 = vmatpush.bf16.msra.mxu0 %v1535
      %1907 = vmatpush.bf16.msra.mxu0 %v1531
      %1908 = vmatpush.bf16.msra.mxu0 %v1527
      %1909 = vmatpush.bf16.msra.mxu0 %v1523
      %1910 = vmatmul.bf16.gmra.mxu0 %v522
      %v1911 = vpop.f32.mrf.mxu0
      %v1912 = vadd.f32 %v1899, %v1911
      %v1913 = vpop.f32.mrf.mxu0
      %1914 = vdwg.mxu0
      %1915 = vmatpush.bf16.msra.mxu0 %v1328
      %1916 = vmatpush.bf16.msra.mxu0 %v1324
      %1917 = vmatpush.bf16.msra.mxu0 %v1320
      %1918 = vmatpush.bf16.msra.mxu0 %v1316
      %1919 = vmatpush.bf16.msra.mxu0 %v1312
      %1920 = vmatpush.bf16.msra.mxu0 %v1308
      %1921 = vmatpush.bf16.msra.mxu0 %v1304
      %1922 = vmatpush.bf16.msra.mxu0 %v1300
      %1923 = vmatmul.bf16.gmra.mxu0 %v515
      %v1924 = vpop.f32.mrf.mxu0
      %v1925 = vadd.f32 0.0, %v1924
      %v1926 = vpop.f32.mrf.mxu0
      %1927 = vdwg.mxu0
      %1928 = vmatpush.bf16.msra.mxu0 %v1360
      %1929 = vmatpush.bf16.msra.mxu0 %v1356
      %1930 = vmatpush.bf16.msra.mxu0 %v1352
      %1931 = vmatpush.bf16.msra.mxu0 %v1348
      %1932 = vmatpush.bf16.msra.mxu0 %v1344
      %1933 = vmatpush.bf16.msra.mxu0 %v1340
      %1934 = vmatpush.bf16.msra.mxu0 %v1336
      %1935 = vmatpush.bf16.msra.mxu0 %v1332
      %1936 = vmatmul.bf16.gmra.mxu0 %v516
      %v1937 = vpop.f32.mrf.mxu0
      %v1938 = vadd.f32 %v1925, %v1937
      %v1939 = vpop.f32.mrf.mxu0
      %1940 = vdwg.mxu0
      %1941 = vmatpush.bf16.msra.mxu0 %v1392
      %1942 = vmatpush.bf16.msra.mxu0 %v1388
      %1943 = vmatpush.bf16.msra.mxu0 %v1384
      %1944 = vmatpush.bf16.msra.mxu0 %v1380
      %1945 = vmatpush.bf16.msra.mxu0 %v1376
      %1946 = vmatpush.bf16.msra.mxu0 %v1372
      %1947 = vmatpush.bf16.msra.mxu0 %v1368
      %1948 = vmatpush.bf16.msra.mxu0 %v1364
      %1949 = vmatmul.bf16.gmra.mxu0 %v517
      %v1950 = vpop.f32.mrf.mxu0
      %v1951 = vadd.f32 %v1938, %v1950
      %v1952 = vpop.f32.mrf.mxu0
      %1953 = vdwg.mxu0
      %1954 = vmatpush.bf16.msra.mxu0 %v1424
      %1955 = vmatpush.bf16.msra.mxu0 %v1420
      %1956 = vmatpush.bf16.msra.mxu0 %v1416
      %1957 = vmatpush.bf16.msra.mxu0 %v1412
      %1958 = vmatpush.bf16.msra.mxu0 %v1408
      %1959 = vmatpush.bf16.msra.mxu0 %v1404
      %1960 = vmatpush.bf16.msra.mxu0 %v1400
      %1961 = vmatpush.bf16.msra.mxu0 %v1396
      %1962 = vmatmul.bf16.gmra.mxu0 %v518
      %v1963 = vpop.f32.mrf.mxu0
      %v1964 = vadd.f32 %v1951, %v1963
      %v1965 = vpop.f32.mrf.mxu0
      %1966 = vdwg.mxu0
      %1967 = vmatpush.bf16.msra.mxu0 %v1456
      %1968 = vmatpush.bf16.msra.mxu0 %v1452
      %1969 = vmatpush.bf16.msra.mxu0 %v1448
      %1970 = vmatpush.bf16.msra.mxu0 %v1444
      %1971 = vmatpush.bf16.msra.mxu0 %v1440
      %1972 = vmatpush.bf16.msra.mxu0 %v1436
      %1973 = vmatpush.bf16.msra.mxu0 %v1432
      %1974 = vmatpush.bf16.msra.mxu0 %v1428
      %1975 = vmatmul.bf16.gmra.mxu0 %v519
      %v1976 = vpop.f32.mrf.mxu0
      %v1977 = vadd.f32 %v1964, %v1976
      %v1978 = vpop.f32.mrf.mxu0
      %1979 = vdwg.mxu0
      %1980 = vmatpush.bf16.msra.mxu0 %v1488
      %1981 = vmatpush.bf16.msra.mxu0 %v1484
      %1982 = vmatpush.bf16.msra.mxu0 %v1480
      %1983 = vmatpush.bf16.msra.mxu0 %v1476
      %1984 = vmatpush.bf16.msra.mxu0 %v1472
      %1985 = vmatpush.bf16.msra.mxu0 %v1468
      %1986 = vmatpush.bf16.msra.mxu0 %v1464
      %1987 = vmatpush.bf16.msra.mxu0 %v1460
      %1988 = vmatmul.bf16.gmra.mxu0 %v520
      %v1989 = vpop.f32.mrf.mxu0
      %v1990 = vadd.f32 %v1977, %v1989
      %v1991 = vpop.f32.mrf.mxu0
      %1992 = vdwg.mxu0
      %1993 = vmatpush.bf16.msra.mxu0 %v1520
      %1994 = vmatpush.bf16.msra.mxu0 %v1516
      %1995 = vmatpush.bf16.msra.mxu0 %v1512
      %1996 = vmatpush.bf16.msra.mxu0 %v1508
      %1997 = vmatpush.bf16.msra.mxu0 %v1504
      %1998 = vmatpush.bf16.msra.mxu0 %v1500
      %1999 = vmatpush.bf16.msra.mxu0 %v1496
      %2000 = vmatpush.bf16.msra.mxu0 %v1492
      %2001 = vmatmul.bf16.gmra.mxu0 %v521
      %v2002 = vpop.f32.mrf.mxu0
      %v2003 = vadd.f32 %v1990, %v2002
      %v2004 = vpop.f32.mrf.mxu0
      %2005 = vdwg.mxu0
      %2006 = vmatpush.bf16.msra.mxu0 %v1552
      %2007 = vmatpush.bf16.msra.mxu0 %v1548
      %2008 = vmatpush.bf16.msra.mxu0 %v1544
      %2009 = vmatpush.bf16.msra.mxu0 %v1540
      %2010 = vmatpush.bf16.msra.mxu0 %v1536
      %2011 = vmatpush.bf16.msra.mxu0 %v1532
      %2012 = vmatpush.bf16.msra.mxu0 %v1528
      %2013 = vmatpush.bf16.msra.mxu0 %v1524
      %2014 = vmatmul.bf16.gmra.mxu0 %v522
      %v2015 = vpop.f32.mrf.mxu0
      %v2016 = vadd.f32 %v2003, %v2015
      %v2017 = vpop.f32.mrf.mxu0
      %2018 = vdwg.mxu0
      %2019 = vmatpush.bf16.msra.mxu0 %v1329
      %2020 = vmatpush.bf16.msra.mxu0 %v1325
      %2021 = vmatpush.bf16.msra.mxu0 %v1321
      %2022 = vmatpush.bf16.msra.mxu0 %v1317
      %2023 = vmatpush.bf16.msra.mxu0 %v1313
      %2024 = vmatpush.bf16.msra.mxu0 %v1309
      %2025 = vmatpush.bf16.msra.mxu0 %v1305
      %2026 = vmatpush.bf16.msra.mxu0 %v1301
      %2027 = vmatmul.bf16.gmra.mxu0 %v515
      %v2028 = vpop.f32.mrf.mxu0
      %v2029 = vadd.f32 0.0, %v2028
      %v2030 = vpop.f32.mrf.mxu0
      %2031 = vdwg.mxu0
      %2032 = vmatpush.bf16.msra.mxu0 %v1361
      %2033 = vmatpush.bf16.msra.mxu0 %v1357
      %2034 = vmatpush.bf16.msra.mxu0 %v1353
      %2035 = vmatpush.bf16.msra.mxu0 %v1349
      %2036 = vmatpush.bf16.msra.mxu0 %v1345
      %2037 = vmatpush.bf16.msra.mxu0 %v1341
      %2038 = vmatpush.bf16.msra.mxu0 %v1337
      %2039 = vmatpush.bf16.msra.mxu0 %v1333
      %2040 = vmatmul.bf16.gmra.mxu0 %v516
      %v2041 = vpop.f32.mrf.mxu0
      %v2042 = vadd.f32 %v2029, %v2041
      %v2043 = vpop.f32.mrf.mxu0
      %2044 = vdwg.mxu0
      %2045 = vmatpush.bf16.msra.mxu0 %v1393
      %2046 = vmatpush.bf16.msra.mxu0 %v1389
      %2047 = vmatpush.bf16.msra.mxu0 %v1385
      %2048 = vmatpush.bf16.msra.mxu0 %v1381
      %2049 = vmatpush.bf16.msra.mxu0 %v1377
      %2050 = vmatpush.bf16.msra.mxu0 %v1373
      %2051 = vmatpush.bf16.msra.mxu0 %v1369
      %2052 = vmatpush.bf16.msra.mxu0 %v1365
      %2053 = vmatmul.bf16.gmra.mxu0 %v517
      %v2054 = vpop.f32.mrf.mxu0
      %v2055 = vadd.f32 %v2042, %v2054
      %v2056 = vpop.f32.mrf.mxu0
      %2057 = vdwg.mxu0
      %2058 = vmatpush.bf16.msra.mxu0 %v1425
      %2059 = vmatpush.bf16.msra.mxu0 %v1421
      %2060 = vmatpush.bf16.msra.mxu0 %v1417
      %2061 = vmatpush.bf16.msra.mxu0 %v1413
      %2062 = vmatpush.bf16.msra.mxu0 %v1409
      %2063 = vmatpush.bf16.msra.mxu0 %v1405
      %2064 = vmatpush.bf16.msra.mxu0 %v1401
      %2065 = vmatpush.bf16.msra.mxu0 %v1397
      %2066 = vmatmul.bf16.gmra.mxu0 %v518
      %v2067 = vpop.f32.mrf.mxu0
      %v2068 = vadd.f32 %v2055, %v2067
      %v2069 = vpop.f32.mrf.mxu0
      %2070 = vdwg.mxu0
      %2071 = vmatpush.bf16.msra.mxu0 %v1457
      %2072 = vmatpush.bf16.msra.mxu0 %v1453
      %2073 = vmatpush.bf16.msra.mxu0 %v1449
      %2074 = vmatpush.bf16.msra.mxu0 %v1445
      %2075 = vmatpush.bf16.msra.mxu0 %v1441
      %2076 = vmatpush.bf16.msra.mxu0 %v1437
      %2077 = vmatpush.bf16.msra.mxu0 %v1433
      %2078 = vmatpush.bf16.msra.mxu0 %v1429
      %2079 = vmatmul.bf16.gmra.mxu0 %v519
      %v2080 = vpop.f32.mrf.mxu0
      %v2081 = vadd.f32 %v2068, %v2080
      %v2082 = vpop.f32.mrf.mxu0
      %2083 = vdwg.mxu0
      %2084 = vmatpush.bf16.msra.mxu0 %v1489
      %2085 = vmatpush.bf16.msra.mxu0 %v1485
      %2086 = vmatpush.bf16.msra.mxu0 %v1481
      %2087 = vmatpush.bf16.msra.mxu0 %v1477
      %2088 = vmatpush.bf16.msra.mxu0 %v1473
      %2089 = vmatpush.bf16.msra.mxu0 %v1469
      %2090 = vmatpush.bf16.msra.mxu0 %v1465
      %2091 = vmatpush.bf16.msra.mxu0 %v1461
      %2092 = vmatmul.bf16.gmra.mxu0 %v520
      %v2093 = vpop.f32.mrf.mxu0
      %v2094 = vadd.f32 %v2081, %v2093
      %v2095 = vpop.f32.mrf.mxu0
      %2096 = vdwg.mxu0
      %2097 = vmatpush.bf16.msra.mxu0 %v1521
      %2098 = vmatpush.bf16.msra.mxu0 %v1517
      %2099 = vmatpush.bf16.msra.mxu0 %v1513
      %2100 = vmatpush.bf16.msra.mxu0 %v1509
      %2101 = vmatpush.bf16.msra.mxu0 %v1505
      %2102 = vmatpush.bf16.msra.mxu0 %v1501
      %2103 = vmatpush.bf16.msra.mxu0 %v1497
      %2104 = vmatpush.bf16.msra.mxu0 %v1493
      %2105 = vmatmul.bf16.gmra.mxu0 %v521
      %v2106 = vpop.f32.mrf.mxu0
      %v2107 = vadd.f32 %v2094, %v2106
      %v2108 = vpop.f32.mrf.mxu0
      %2109 = vdwg.mxu0
      %2110 = vmatpush.bf16.msra.mxu0 %v1553
      %2111 = vmatpush.bf16.msra.mxu0 %v1549
      %2112 = vmatpush.bf16.msra.mxu0 %v1545
      %2113 = vmatpush.bf16.msra.mxu0 %v1541
      %2114 = vmatpush.bf16.msra.mxu0 %v1537
      %2115 = vmatpush.bf16.msra.mxu0 %v1533
      %2116 = vmatpush.bf16.msra.mxu0 %v1529
      %2117 = vmatpush.bf16.msra.mxu0 %v1525
      %2118 = vmatmul.bf16.gmra.mxu0 %v522
      %v2119 = vpop.f32.mrf.mxu0
      %v2120 = vadd.f32 %v2107, %v2119
      %v2121 = vpop.f32.mrf.mxu0
      %2122 = vdwg.mxu0
      %2123 = vmatpush.bf16.msra.mxu0 %v1330
      %2124 = vmatpush.bf16.msra.mxu0 %v1326
      %2125 = vmatpush.bf16.msra.mxu0 %v1322
      %2126 = vmatpush.bf16.msra.mxu0 %v1318
      %2127 = vmatpush.bf16.msra.mxu0 %v1314
      %2128 = vmatpush.bf16.msra.mxu0 %v1310
      %2129 = vmatpush.bf16.msra.mxu0 %v1306
      %2130 = vmatpush.bf16.msra.mxu0 %v1302
      %2131 = vmatmul.bf16.gmra.mxu0 %v515
      %v2132 = vpop.f32.mrf.mxu0
      %v2133 = vadd.f32 0.0, %v2132
      %v2134 = vpop.f32.mrf.mxu0
      %2135 = vdwg.mxu0
      %2136 = vmatpush.bf16.msra.mxu0 %v1362
      %2137 = vmatpush.bf16.msra.mxu0 %v1358
      %2138 = vmatpush.bf16.msra.mxu0 %v1354
      %2139 = vmatpush.bf16.msra.mxu0 %v1350
      %2140 = vmatpush.bf16.msra.mxu0 %v1346
      %2141 = vmatpush.bf16.msra.mxu0 %v1342
      %2142 = vmatpush.bf16.msra.mxu0 %v1338
      %2143 = vmatpush.bf16.msra.mxu0 %v1334
      %2144 = vmatmul.bf16.gmra.mxu0 %v516
      %v2145 = vpop.f32.mrf.mxu0
      %v2146 = vadd.f32 %v2133, %v2145
      %v2147 = vpop.f32.mrf.mxu0
      %2148 = vdwg.mxu0
      %2149 = vmatpush.bf16.msra.mxu0 %v1394
      %2150 = vmatpush.bf16.msra.mxu0 %v1390
      %2151 = vmatpush.bf16.msra.mxu0 %v1386
      %2152 = vmatpush.bf16.msra.mxu0 %v1382
      %2153 = vmatpush.bf16.msra.mxu0 %v1378
      %2154 = vmatpush.bf16.msra.mxu0 %v1374
      %2155 = vmatpush.bf16.msra.mxu0 %v1370
      %2156 = vmatpush.bf16.msra.mxu0 %v1366
      %2157 = vmatmul.bf16.gmra.mxu0 %v517
      %v2158 = vpop.f32.mrf.mxu0
      %v2159 = vadd.f32 %v2146, %v2158
      %v2160 = vpop.f32.mrf.mxu0
      %2161 = vdwg.mxu0
      %2162 = vmatpush.bf16.msra.mxu0 %v1426
      %2163 = vmatpush.bf16.msra.mxu0 %v1422
      %2164 = vmatpush.bf16.msra.mxu0 %v1418
      %2165 = vmatpush.bf16.msra.mxu0 %v1414
      %2166 = vmatpush.bf16.msra.mxu0 %v1410
      %2167 = vmatpush.bf16.msra.mxu0 %v1406
      %2168 = vmatpush.bf16.msra.mxu0 %v1402
      %2169 = vmatpush.bf16.msra.mxu0 %v1398
      %2170 = vmatmul.bf16.gmra.mxu0 %v518
      %v2171 = vpop.f32.mrf.mxu0
      %v2172 = vadd.f32 %v2159, %v2171
      %v2173 = vpop.f32.mrf.mxu0
      %2174 = vdwg.mxu0
      %2175 = vmatpush.bf16.msra.mxu0 %v1458
      %2176 = vmatpush.bf16.msra.mxu0 %v1454
      %2177 = vmatpush.bf16.msra.mxu0 %v1450
      %2178 = vmatpush.bf16.msra.mxu0 %v1446
      %2179 = vmatpush.bf16.msra.mxu0 %v1442
      %2180 = vmatpush.bf16.msra.mxu0 %v1438
      %2181 = vmatpush.bf16.msra.mxu0 %v1434
      %2182 = vmatpush.bf16.msra.mxu0 %v1430
      %2183 = vmatmul.bf16.gmra.mxu0 %v519
      %v2184 = vpop.f32.mrf.mxu0
      %v2185 = vadd.f32 %v2172, %v2184
      %v2186 = vpop.f32.mrf.mxu0
      %2187 = vdwg.mxu0
      %2188 = vmatpush.bf16.msra.mxu0 %v1490
      %2189 = vmatpush.bf16.msra.mxu0 %v1486
      %2190 = vmatpush.bf16.msra.mxu0 %v1482
      %2191 = vmatpush.bf16.msra.mxu0 %v1478
      %2192 = vmatpush.bf16.msra.mxu0 %v1474
      %2193 = vmatpush.bf16.msra.mxu0 %v1470
      %2194 = vmatpush.bf16.msra.mxu0 %v1466
      %2195 = vmatpush.bf16.msra.mxu0 %v1462
      %2196 = vmatmul.bf16.gmra.mxu0 %v520
      %v2197 = vpop.f32.mrf.mxu0
      %v2198 = vadd.f32 %v2185, %v2197
      %v2199 = vpop.f32.mrf.mxu0
      %2200 = vdwg.mxu0
      %2201 = vmatpush.bf16.msra.mxu0 %v1522
      %2202 = vmatpush.bf16.msra.mxu0 %v1518
      %2203 = vmatpush.bf16.msra.mxu0 %v1514
      %2204 = vmatpush.bf16.msra.mxu0 %v1510
      %2205 = vmatpush.bf16.msra.mxu0 %v1506
      %2206 = vmatpush.bf16.msra.mxu0 %v1502
      %2207 = vmatpush.bf16.msra.mxu0 %v1498
      %2208 = vmatpush.bf16.msra.mxu0 %v1494
      %2209 = vmatmul.bf16.gmra.mxu0 %v521
      %v2210 = vpop.f32.mrf.mxu0
      %v2211 = vadd.f32 %v2198, %v2210
      %v2212 = vpop.f32.mrf.mxu0
      %2213 = vdwg.mxu0
      %2214 = vmatpush.bf16.msra.mxu0 %v1554
      %2215 = vmatpush.bf16.msra.mxu0 %v1550
      %2216 = vmatpush.bf16.msra.mxu0 %v1546
      %2217 = vmatpush.bf16.msra.mxu0 %v1542
      %2218 = vmatpush.bf16.msra.mxu0 %v1538
      %2219 = vmatpush.bf16.msra.mxu0 %v1534
      %2220 = vmatpush.bf16.msra.mxu0 %v1530
      %2221 = vmatpush.bf16.msra.mxu0 %v1526
      %2222 = vmatmul.bf16.gmra.mxu0 %v522
      %v2223 = vpop.f32.mrf.mxu0
      %v2224 = vadd.f32 %v2211, %v2223
      %v2225 = vpop.f32.mrf.mxu0
      %2226 = vdwg.mxu0
      %v2227 = vadd.f32 %v239, %v1912
      %v2228 = vadd.f32 %v240, %v2016
      %v2229 = vadd.f32 %v241, %v2120
      %v2230 = vadd.f32 %v242, %v2224
      %2231 = vst [vmem:[#allocation2] sm:$0xff] %v2227
      %2232 = vst [vmem:[#allocation2 + $0x8] sm:$0xff] %v2228
      %2233 = vst [vmem:[#allocation2 + $0x10] sm:$0xff] %v2229
      %2234 = vst [vmem:[#allocation2 + $0x18] sm:$0xff] %v2230
      %p2235 = scmp.eq.s32.totalorder %s20, 3
      // Predicated region
      $region33: #{output_discriminator.8} parent=27 // pred_check
        %p2236 = pneg %p2235
      $region34: #{output_discriminator.8} parent=27 // pred_check_branch
        %2238 = sbr.rel (%p2236) target = $region36
      $region35: #{output_discriminator.8} parent=27 // pred_region
        %v2239 = vld [vmem:[#allocation2] sm:$0xff]
        %v2240 = vld [vmem:[#allocation2 + $0x8] sm:$0xff]
        %v2241 = vld [vmem:[#allocation2 + $0x10] sm:$0xff]
        %v2242 = vld [vmem:[#allocation2 + $0x18] sm:$0xff]
        %vm2243 = vcmp.ge.f32.partialorder %v2239, 0.0
        %vm2244 = vcmp.ge.f32.partialorder %v2240, 0.0
        %vm2245 = vcmp.ge.f32.partialorder %v2241, 0.0
        %vm2246 = vcmp.ge.f32.partialorder %v2242, 0.0
        %v2247 = vmul.f32 %v2239, 0.2
        %v2248 = vmul.f32 %v2240, 0.2
        %v2249 = vmul.f32 %v2241, 0.2
        %v2250 = vmul.f32 %v2242, 0.2
        %v2251 = vsel %vm2243, %v2239, %v2247
        %v2252 = vsel %vm2244, %v2240, %v2248
        %v2253 = vsel %vm2245, %v2241, %v2249
        %v2254 = vsel %vm2246, %v2242, %v2250
        %v2255 = vpack.c.bf16 %v2252, %v2251
        %v2256 = vpack.c.bf16 %v2254, %v2253
        %2257 = vst [vmem:[%s229] sm:$0xff] %v2255
        %2258 = vst [vmem:[%s229 + $0x8] sm:$0xff] %v2256
      $region36: #{output_discriminator.8} parent=27 // pred_fallthru
        _
      %s2259 = smul.u32 4, %s19
      %p2260 = scmp.lt.s32.totalorder %s18, 0
      %s2261 = scalar_select %p2260, %s18, 0
      %p2262 = scmp.lt.s32.totalorder %s2259, 3
      %s2263 = scalar_select %p2262, %s2259, 3
      %s2264 = smul.addr %s2261, 4
      %s2265 = sadd.s32 %s2263, %s2264
      %s2266 = smul.addr %s2265, 4
      %s2267 = scalar_lea.vmem %s2, %s2266
      // Predicated region
      $region37: #{output_discriminator.8} parent=27 // pred_check
        %p2268 = pneg %p108
      $region38: #{output_discriminator.8} parent=27 // pred_check_branch
        %2270 = sbr.rel (%p2268) target = $region40
      $region39: #{output_discriminator.8} parent=27 // pred_region
        %s2271 = smul.u32 4, %s19
      $region40: #{output_discriminator.8} parent=27 // pred_fallthru
        _
      // Predicated region
      $region41: #{output_discriminator.8} parent=27 // pred_check
        %p2272 = pneg %p108
      $region42: #{output_discriminator.8} parent=27 // pred_check_branch
        %2274 = sbr.rel (%p2272) target = $region44
      $region43: #{output_discriminator.8} parent=27 // pred_region
        %s2275 = smul.u32 4, %s19
        %p2276 = scmp.lt.s32.totalorder %s18, 0
        %s2277 = scalar_select %p2276, %s18, 0
        %p2278 = scmp.lt.s32.totalorder %s2275, 3
        %s2279 = scalar_select %p2278, %s2275, 3
        %s2280 = smul.addr %s2277, 4
        %s2281 = sadd.s32 %s2279, %s2280
        %s2282 = smul.addr %s2281, 4
        %s2283 = scalar_lea.vmem %s2, %s2282
      $region44: #{output_discriminator.8} parent=27 // pred_fallthru
        _
    $region28: #{output_discriminator.8} parent=5 // pred_fallthru
      _
    %p2284 = scmp.le.s32.totalorder 2, %s8
    // Predicated region
    $region45: #{output_discriminator.8} parent=5 // pred_check
      %p2285 = pneg %p2284
    $region46: #{output_discriminator.8} parent=5 // pred_check_branch
      %2287 = sbr.rel (%p2285) target = $region48
    $region47: #{output_discriminator.8} parent=5 // pred_region
      %s2288 = ssub.s32 %s8, 2
    $region48: #{output_discriminator.8} parent=5 // pred_fallthru
      _
  $region6: #{output_discriminator.8} parent=0 // loop_footer
    %s12 = sadd.s32 1, %s8
  $region7: #{output_discriminator.8} parent=0 // loop_footer_branch
    %7 = sbr.rel target = $region3
  $region8: #{output_discriminator.8} parent=0 // loop_exit
    _

// kernel: output_discriminator.9
$region0: #{output_discriminator.9}
  #allocation0 [shape = 'u32[]', space=smem, size = 0x4, offset = 0x4, fixed_abs, tag = 'smem constant byte address 0x4 - core index']
  #allocation1 [shape = 'u32[72,128]{1,0:T(1,128)}', space=vmem, size = 0x9000, scoped, tag = 'internal scratch']
  #allocation2 [shape = 'f32[8,1]{1,0:T(8,128)}', space=vmem, size = 0x1000, scoped, tag = 'scratch operand']
  %s0 = inlined_call_operand.vmem [shape: bf16[8,8192], index: 0, kind: input, shape index: {}]
  %s1 = inlined_call_operand.vmem [shape: bf16[8192,1], index: 1, kind: input, shape index: {}]
  %s2 = inlined_call_operand.vmem [shape: f32[8,1], index: 2, kind: output, shape index: {}]
  %s3 = sld [smem:[#allocation0]]
  $region49: #{output_discriminator.9} parent=0
    _
  %s5 = ssub.s32 1, %s3
  %s6 = scalar_select 0, %s5, %s3
  loop: start=0, step=1, limit=10
  $region2: #{output_discriminator.9} parent=0 // loop_pre_header
    _
  $region3: #{output_discriminator.9} parent=0 // loop_header
    %s8 = sphi 0, %s12
    %p9 = scmp.ge.s32.totalorder %s8, 10
    %s15 = sphi 0, %s34
    %s16 = sphi 0, %s30
    %s17 = sphi 0, %s26
    %s18 = sphi 0, %s15
    %s19 = sphi 0, %s16
    %s20 = sphi 0, %s17
    %s21 = sphi 0, %s18
    %s22 = sphi 0, %s19
    %s23 = sphi 0, %s20
    %s39 = sphi 0, %s41
    %s42 = sphi 0, %s39
    %s43 = sphi 0, %s42
    %s59 = sphi 0, %s43
    %s67 = sphi 0, %s69
    %s70 = sphi 0, %s67
    %s71 = sphi 0, %s70
    %s87 = sphi 0, %s71
    %s95 = sphi 0, %s97
    %s98 = sphi 0, %s95
    %s99 = sphi 0, %s98
    %s115 = sphi 0, %s99
  $region4: #{output_discriminator.9} parent=0 // loop_header_branch
    %11 = sbr.rel (%p9) target = $region8
  $region5: #{output_discriminator.9} parent=0 // loop_body
    %s13 = ssub.s32 %s8, 1
    %s14 = ssub.s32 %s8, 2
    %s24 = sadd.s32 1, %s17
    %p25 = scmp.ge.s32.totalorder %s24, 8
    %s26 = scalar_select %p25, 0, %s24
    %s27 = sadd.s32 1, %s16
    %s28 = scalar_select %p25, %s27, %s16
    %p29 = scmp.ge.s32.totalorder %s28, 1
    %s30 = scalar_select %p29, 0, %s28
    %s31 = sadd.s32 1, %s15
    %s32 = scalar_select %p29, %s31, %s15
    %p33 = scmp.ge.s32.totalorder %s32, 1
    %s34 = scalar_select %p33, 0, %s32
    %s35 = ssub.s32 %s15, %s34
    %s36 = ssub.s32 %s17, %s26
    %s37 = sor.u32 %s35, %s36
    %p38 = scmp.eq.s32.totalorder %s37, 0
    %s40 = sadd.s32 %s39, 1
    %s41 = scalar_select %p38, %s39, %s40
    %p44 = pneg %p38
    %p45 = scmp.eq.s32.totalorder %s8, 7
    %p46 = por %p44, %p45
    %p47 = scmp.ne.s32.totalorder %s39, %s42
    %p48 = scmp.eq.s32.totalorder %s8, 0
    %p49 = por %p47, %p48
    %p50 = scmp.ne.s32.totalorder %s39, %s42
    %p51 = scmp.eq.s32.totalorder %s13, 7
    %p52 = por %p50, %p51
    %p53 = scmp.ne.s32.totalorder %s42, %s43
    %p54 = scmp.eq.s32.totalorder %s13, 0
    %p55 = por %p53, %p54
    %p56 = scmp.ne.s32.totalorder %s42, %s43
    %p57 = scmp.eq.s32.totalorder %s14, 7
    %p58 = por %p56, %p57
    %p60 = scmp.ne.s32.totalorder %s43, %s59
    %p61 = scmp.eq.s32.totalorder %s14, 0
    %p62 = por %p60, %p61
    %s63 = ssub.s32 %s17, %s26
    %s64 = ssub.s32 %s16, %s30
    %s65 = sor.u32 %s63, %s64
    %p66 = scmp.eq.s32.totalorder %s65, 0
    %s68 = sadd.s32 %s67, 1
    %s69 = scalar_select %p66, %s67, %s68
    %p72 = pneg %p66
    %p73 = scmp.eq.s32.totalorder %s8, 7
    %p74 = por %p72, %p73
    %p75 = scmp.ne.s32.totalorder %s67, %s70
    %p76 = scmp.eq.s32.totalorder %s8, 0
    %p77 = por %p75, %p76
    %p78 = scmp.ne.s32.totalorder %s67, %s70
    %p79 = scmp.eq.s32.totalorder %s13, 7
    %p80 = por %p78, %p79
    %p81 = scmp.ne.s32.totalorder %s70, %s71
    %p82 = scmp.eq.s32.totalorder %s13, 0
    %p83 = por %p81, %p82
    %p84 = scmp.ne.s32.totalorder %s70, %s71
    %p85 = scmp.eq.s32.totalorder %s14, 7
    %p86 = por %p84, %p85
    %p88 = scmp.ne.s32.totalorder %s71, %s87
    %p89 = scmp.eq.s32.totalorder %s14, 0
    %p90 = por %p88, %p89
    %s91 = ssub.s32 %s15, %s34
    %s92 = ssub.s32 %s16, %s30
    %s93 = sor.u32 %s91, %s92
    %p94 = scmp.eq.s32.totalorder %s93, 0
    %s96 = sadd.s32 %s95, 1
    %s97 = scalar_select %p94, %s95, %s96
    %p100 = pneg %p94
    %p101 = scmp.eq.s32.totalorder %s8, 7
    %p102 = por %p100, %p101
    %p103 = scmp.ne.s32.totalorder %s95, %s98
    %p104 = scmp.eq.s32.totalorder %s8, 0
    %p105 = por %p103, %p104
    %p106 = scmp.ne.s32.totalorder %s95, %s98
    %p107 = scmp.eq.s32.totalorder %s13, 7
    %p108 = por %p106, %p107
    %p109 = scmp.ne.s32.totalorder %s98, %s99
    %p110 = scmp.eq.s32.totalorder %s13, 0
    %p111 = por %p109, %p110
    %p112 = scmp.ne.s32.totalorder %s98, %s99
    %p113 = scmp.eq.s32.totalorder %s14, 7
    %p114 = por %p112, %p113
    %p116 = scmp.ne.s32.totalorder %s99, %s115
    %p117 = scmp.eq.s32.totalorder %s14, 0
    %p118 = por %p116, %p117
    %p119 = scmp.le.s32.totalorder 1, %s8
    %p120 = scmp.lt.s32.totalorder %s8, 9
    %p121 = pnand %p119, %p120
    %p122 = pneg %p121
    // Predicated region
    $region9: #{output_discriminator.9} parent=5 // pred_check
      _
    $region10: #{output_discriminator.9} parent=5 // pred_check_branch
      %124 = sbr.rel (%p121) target = $region12
    $region11: #{output_discriminator.9} parent=5 // pred_region
      %s125 = ssub.s32 %s8, 1
    $region12: #{output_discriminator.9} parent=5 // pred_fallthru
      _
    %p126 = scmp.lt.s32.totalorder %s8, 8
    // Predicated region
    $region13: #{output_discriminator.9} parent=5 // pred_check
      %p127 = pneg %p126
    $region14: #{output_discriminator.9} parent=5 // pred_check_branch
      %129 = sbr.rel (%p127) target = $region16
    $region15: #{output_discriminator.9} parent=5 // pred_region
      // Predicated region
      $region17: #{output_discriminator.9} parent=15 // pred_check
        %p130 = pneg %p49
      $region18: #{output_discriminator.9} parent=15 // pred_check_branch
        %132 = sbr.rel (%p130) target = $region20
      $region19: #{output_discriminator.9} parent=15 // pred_region
        %s133 = smul.u32 8, %s17
        %p134 = scmp.lt.s32.totalorder %s15, 0
        %s135 = scalar_select %p134, %s15, 0
        %p136 = scmp.lt.s32.totalorder %s133, 63
        %s137 = scalar_select %p136, %s133, 63
        %s138 = smul.addr %s135, 64
        %s139 = sadd.s32 %s137, %s138
        %s140 = smul.addr %s139, 4
        %s141 = scalar_lea.vmem %s0, %s140
        %s142 = smul.u32 8, %s17
      $region20: #{output_discriminator.9} parent=15 // pred_fallthru
        _
      // Predicated region
      $region21: #{output_discriminator.9} parent=15 // pred_check
        %p143 = pneg %p77
      $region22: #{output_discriminator.9} parent=15 // pred_check_branch
        %145 = sbr.rel (%p143) target = $region24
      $region23: #{output_discriminator.9} parent=15 // pred_region
        %s146 = smul.u32 128, %s17
        %p147 = scmp.lt.s32.totalorder %s146, 1023
        %s148 = scalar_select %p147, %s146, 1023
        %p149 = scmp.lt.s32.totalorder %s16, 0
        %s150 = scalar_select %p149, %s16, 0
        %s151 = sadd.s32 %s150, %s148
        %s152 = smul.addr %s151, 4
        %s153 = scalar_lea.vmem %s1, %s152
        %s154 = smul.u32 128, %s17
      $region24: #{output_discriminator.9} parent=15 // pred_fallthru
        _
    $region16: #{output_discriminator.9} parent=5 // pred_fallthru
      _
    %p155 = scmp.le.s32.totalorder 1, %s8
    %p156 = scmp.lt.s32.totalorder %s8, 9
    %p157 = pnand %p155, %p156
    %p158 = pneg %p157
    // Predicated region
    $region25: #{output_discriminator.9} parent=5 // pred_check
      _
    $region26: #{output_discriminator.9} parent=5 // pred_check_branch
      %160 = sbr.rel (%p157) target = $region28
    $region27: #{output_discriminator.9} parent=5 // pred_region
      %s161 = ssub.s32 %s8, 1
      %s162 = smul.u32 8, %s20
      %p163 = scmp.lt.s32.totalorder %s18, 0
      %s164 = scalar_select %p163, %s18, 0
      %p165 = scmp.lt.s32.totalorder %s162, 63
      %s166 = scalar_select %p165, %s162, 63
      %s167 = smul.addr %s164, 64
      %s168 = sadd.s32 %s166, %s167
      %s169 = smul.addr %s168, 4
      %s170 = scalar_lea.vmem %s0, %s169
      %p171 = pneg %p55
      %p172 = pneg %p52
      %s173 = smul.u32 128, %s20
      %p174 = scmp.lt.s32.totalorder %s173, 1023
      %s175 = scalar_select %p174, %s173, 1023
      %p176 = scmp.lt.s32.totalorder %s19, 0
      %s177 = scalar_select %p176, %s19, 0
      %s178 = sadd.s32 %s177, %s175
      %s179 = smul.addr %s178, 4
      %s180 = scalar_lea.vmem %s1, %s179
      %p181 = pneg %p83
      %p182 = pneg %p80
      %p183 = pneg %p111
      %p184 = pneg %p108
      %p185 = scmp.lt.s32.totalorder %s18, 0
      %s186 = scalar_select %p185, %s18, 0
      %p187 = scmp.lt.s32.totalorder %s19, 0
      %s188 = scalar_select %p187, %s19, 0
      %s189 = sadd.s32 %s188, %s186
      %s190 = smul.addr %s189, 8
      %s191 = scalar_lea.vmem %s2, %s190
      %s192 = smul.u32 8, %s20
      %p193 = scmp.lt.s32.totalorder %s18, 0
      %s194 = scalar_select %p193, %s18, 0
      %p195 = scmp.lt.s32.totalorder %s192, 63
      %s196 = scalar_select %p195, %s192, 63
      %s197 = smul.addr %s194, 64
      %s198 = sadd.s32 %s196, %s197
      %s199 = smul.addr %s198, 4
      %s200 = scalar_lea.vmem %s0, %s199
      %s201 = smul.u32 8, %s20
      %s202 = smul.u32 128, %s20
      %p203 = scmp.lt.s32.totalorder %s202, 1023
      %s204 = scalar_select %p203, %s202, 1023
      %p205 = scmp.lt.s32.totalorder %s19, 0
      %s206 = scalar_select %p205, %s19, 0
      %s207 = sadd.s32 %s206, %s204
      %s208 = smul.addr %s207, 4
      %s209 = scalar_lea.vmem %s1, %s208
      %s210 = smul.u32 128, %s20
      %p211 = scmp.lt.s32.totalorder %s18, 0
      %s212 = scalar_select %p211, %s18, 0
      %p213 = scmp.lt.s32.totalorder %s19, 0
      %s214 = scalar_select %p213, %s19, 0
      %s215 = sadd.s32 %s214, %s212
      %s216 = smul.addr %s215, 8
      %s217 = scalar_lea.vmem %s2, %s216
      %p218 = scmp.eq.s32.totalorder %s20, 0
      // Predicated region
      $region29: #{output_discriminator.9} parent=27 // pred_check
        %p219 = pneg %p218
      $region30: #{output_discriminator.9} parent=27 // pred_check_branch
        %221 = sbr.rel (%p219) target = $region32
      $region31: #{output_discriminator.9} parent=27 // pred_region
        %vm222 = vcmask 7168
        %223 = vst.msk [vmem:[#allocation2] sm:$0xff] %vm222, 0.0
      $region32: #{output_discriminator.9} parent=27 // pred_fallthru
        _
      %v224 = vld [vmem:[#allocation2] sm:$0xff]
      %v225 = vld [vmem:[%s200] sm:$0xff]
      %v226 = vld [vmem:[%s200 + $0x8] sm:$0xff]
      %v227 = vld [vmem:[%s200 + $0x10] sm:$0xff]
      %v228 = vld [vmem:[%s200 + $0x18] sm:$0xff]
      %v229 = vld [vmem:[%s209] sm:$0xf]
      %v230 = vld [vmem:[%s209 + $0x4] sm:$0xf]
      %v231 = vld [vmem:[%s209 + $0x8] sm:$0xf]
      %v232 = vld [vmem:[%s209 + $0xc] sm:$0xf]
      %v233 = vld [vmem:[%s209 + $0x10] sm:$0xf]
      %v234 = vld [vmem:[%s209 + $0x14] sm:$0xf]
      %v235 = vld [vmem:[%s209 + $0x18] sm:$0xf]
      %v236 = vld [vmem:[%s209 + $0x1c] sm:$0xf]
      %v237 = vld [vmem:[%s209 + $0x20] sm:$0xf]
      %v238 = vld [vmem:[%s209 + $0x24] sm:$0xf]
      %v239 = vld [vmem:[%s209 + $0x28] sm:$0xf]
      %v240 = vld [vmem:[%s209 + $0x2c] sm:$0xf]
      %v241 = vld [vmem:[%s209 + $0x30] sm:$0xf]
      %v242 = vld [vmem:[%s209 + $0x34] sm:$0xf]
      %v243 = vld [vmem:[%s209 + $0x38] sm:$0xf]
      %v244 = vld [vmem:[%s209 + $0x3c] sm:$0xf]
      %v245 = vld [vmem:[%s209 + $0x40] sm:$0xf]
      %v246 = vld [vmem:[%s209 + $0x44] sm:$0xf]
      %v247 = vld [vmem:[%s209 + $0x48] sm:$0xf]
      %v248 = vld [vmem:[%s209 + $0x4c] sm:$0xf]
      %v249 = vld [vmem:[%s209 + $0x50] sm:$0xf]
      %v250 = vld [vmem:[%s209 + $0x54] sm:$0xf]
      %v251 = vld [vmem:[%s209 + $0x58] sm:$0xf]
      %v252 = vld [vmem:[%s209 + $0x5c] sm:$0xf]
      %v253 = vld [vmem:[%s209 + $0x60] sm:$0xf]
      %v254 = vld [vmem:[%s209 + $0x64] sm:$0xf]
      %v255 = vld [vmem:[%s209 + $0x68] sm:$0xf]
      %v256 = vld [vmem:[%s209 + $0x6c] sm:$0xf]
      %v257 = vld [vmem:[%s209 + $0x70] sm:$0xf]
      %v258 = vld [vmem:[%s209 + $0x74] sm:$0xf]
      %v259 = vld [vmem:[%s209 + $0x78] sm:$0xf]
      %v260 = vld [vmem:[%s209 + $0x7c] sm:$0xf]
      %v261 = vld [vmem:[%s209 + $0x80] sm:$0xf]
      %v262 = vld [vmem:[%s209 + $0x84] sm:$0xf]
      %v263 = vld [vmem:[%s209 + $0x88] sm:$0xf]
      %v264 = vld [vmem:[%s209 + $0x8c] sm:$0xf]
      %v265 = vld [vmem:[%s209 + $0x90] sm:$0xf]
      %v266 = vld [vmem:[%s209 + $0x94] sm:$0xf]
      %v267 = vld [vmem:[%s209 + $0x98] sm:$0xf]
      %v268 = vld [vmem:[%s209 + $0x9c] sm:$0xf]
      %v269 = vld [vmem:[%s209 + $0xa0] sm:$0xf]
      %v270 = vld [vmem:[%s209 + $0xa4] sm:$0xf]
      %v271 = vld [vmem:[%s209 + $0xa8] sm:$0xf]
      %v272 = vld [vmem:[%s209 + $0xac] sm:$0xf]
      %v273 = vld [vmem:[%s209 + $0xb0] sm:$0xf]
      %v274 = vld [vmem:[%s209 + $0xb4] sm:$0xf]
      %v275 = vld [vmem:[%s209 + $0xb8] sm:$0xf]
      %v276 = vld [vmem:[%s209 + $0xbc] sm:$0xf]
      %v277 = vld [vmem:[%s209 + $0xc0] sm:$0xf]
      %v278 = vld [vmem:[%s209 + $0xc4] sm:$0xf]
      %v279 = vld [vmem:[%s209 + $0xc8] sm:$0xf]
      %v280 = vld [vmem:[%s209 + $0xcc] sm:$0xf]
      %v281 = vld [vmem:[%s209 + $0xd0] sm:$0xf]
      %v282 = vld [vmem:[%s209 + $0xd4] sm:$0xf]
      %v283 = vld [vmem:[%s209 + $0xd8] sm:$0xf]
      %v284 = vld [vmem:[%s209 + $0xdc] sm:$0xf]
      %v285 = vld [vmem:[%s209 + $0xe0] sm:$0xf]
      %v286 = vld [vmem:[%s209 + $0xe4] sm:$0xf]
      %v287 = vld [vmem:[%s209 + $0xe8] sm:$0xf]
      %v288 = vld [vmem:[%s209 + $0xec] sm:$0xf]
      %v289 = vld [vmem:[%s209 + $0xf0] sm:$0xf]
      %v290 = vld [vmem:[%s209 + $0xf4] sm:$0xf]
      %v291 = vld [vmem:[%s209 + $0xf8] sm:$0xf]
      %v292 = vld [vmem:[%s209 + $0xfc] sm:$0xf]
      %v293 = vld [vmem:[%s209 + $0x100] sm:$0xf]
      %v294 = vld [vmem:[%s209 + $0x104] sm:$0xf]
      %v295 = vld [vmem:[%s209 + $0x108] sm:$0xf]
      %v296 = vld [vmem:[%s209 + $0x10c] sm:$0xf]
      %v297 = vld [vmem:[%s209 + $0x110] sm:$0xf]
      %v298 = vld [vmem:[%s209 + $0x114] sm:$0xf]
      %v299 = vld [vmem:[%s209 + $0x118] sm:$0xf]
      %v300 = vld [vmem:[%s209 + $0x11c] sm:$0xf]
      %v301 = vld [vmem:[%s209 + $0x120] sm:$0xf]
      %v302 = vld [vmem:[%s209 + $0x124] sm:$0xf]
      %v303 = vld [vmem:[%s209 + $0x128] sm:$0xf]
      %v304 = vld [vmem:[%s209 + $0x12c] sm:$0xf]
      %v305 = vld [vmem:[%s209 + $0x130] sm:$0xf]
      %v306 = vld [vmem:[%s209 + $0x134] sm:$0xf]
      %v307 = vld [vmem:[%s209 + $0x138] sm:$0xf]
      %v308 = vld [vmem:[%s209 + $0x13c] sm:$0xf]
      %v309 = vld [vmem:[%s209 + $0x140] sm:$0xf]
      %v310 = vld [vmem:[%s209 + $0x144] sm:$0xf]
      %v311 = vld [vmem:[%s209 + $0x148] sm:$0xf]
      %v312 = vld [vmem:[%s209 + $0x14c] sm:$0xf]
      %v313 = vld [vmem:[%s209 + $0x150] sm:$0xf]
      %v314 = vld [vmem:[%s209 + $0x154] sm:$0xf]
      %v315 = vld [vmem:[%s209 + $0x158] sm:$0xf]
      %v316 = vld [vmem:[%s209 + $0x15c] sm:$0xf]
      %v317 = vld [vmem:[%s209 + $0x160] sm:$0xf]
      %v318 = vld [vmem:[%s209 + $0x164] sm:$0xf]
      %v319 = vld [vmem:[%s209 + $0x168] sm:$0xf]
      %v320 = vld [vmem:[%s209 + $0x16c] sm:$0xf]
      %v321 = vld [vmem:[%s209 + $0x170] sm:$0xf]
      %v322 = vld [vmem:[%s209 + $0x174] sm:$0xf]
      %v323 = vld [vmem:[%s209 + $0x178] sm:$0xf]
      %v324 = vld [vmem:[%s209 + $0x17c] sm:$0xf]
      %v325 = vld [vmem:[%s209 + $0x180] sm:$0xf]
      %v326 = vld [vmem:[%s209 + $0x184] sm:$0xf]
      %v327 = vld [vmem:[%s209 + $0x188] sm:$0xf]
      %v328 = vld [vmem:[%s209 + $0x18c] sm:$0xf]
      %v329 = vld [vmem:[%s209 + $0x190] sm:$0xf]
      %v330 = vld [vmem:[%s209 + $0x194] sm:$0xf]
      %v331 = vld [vmem:[%s209 + $0x198] sm:$0xf]
      %v332 = vld [vmem:[%s209 + $0x19c] sm:$0xf]
      %v333 = vld [vmem:[%s209 + $0x1a0] sm:$0xf]
      %v334 = vld [vmem:[%s209 + $0x1a4] sm:$0xf]
      %v335 = vld [vmem:[%s209 + $0x1a8] sm:$0xf]
      %v336 = vld [vmem:[%s209 + $0x1ac] sm:$0xf]
      %v337 = vld [vmem:[%s209 + $0x1b0] sm:$0xf]
      %v338 = vld [vmem:[%s209 + $0x1b4] sm:$0xf]
      %v339 = vld [vmem:[%s209 + $0x1b8] sm:$0xf]
      %v340 = vld [vmem:[%s209 + $0x1bc] sm:$0xf]
      %v341 = vld [vmem:[%s209 + $0x1c0] sm:$0xf]
      %v342 = vld [vmem:[%s209 + $0x1c4] sm:$0xf]
      %v343 = vld [vmem:[%s209 + $0x1c8] sm:$0xf]
      %v344 = vld [vmem:[%s209 + $0x1cc] sm:$0xf]
      %v345 = vld [vmem:[%s209 + $0x1d0] sm:$0xf]
      %v346 = vld [vmem:[%s209 + $0x1d4] sm:$0xf]
      %v347 = vld [vmem:[%s209 + $0x1d8] sm:$0xf]
      %v348 = vld [vmem:[%s209 + $0x1dc] sm:$0xf]
      %v349 = vld [vmem:[%s209 + $0x1e0] sm:$0xf]
      %v350 = vld [vmem:[%s209 + $0x1e4] sm:$0xf]
      %v351 = vld [vmem:[%s209 + $0x1e8] sm:$0xf]
      %v352 = vld [vmem:[%s209 + $0x1ec] sm:$0xf]
      %v353 = vld [vmem:[%s209 + $0x1f0] sm:$0xf]
      %v354 = vld [vmem:[%s209 + $0x1f4] sm:$0xf]
      %v355 = vld [vmem:[%s209 + $0x1f8] sm:$0xf]
      %v356 = vld [vmem:[%s209 + $0x1fc] sm:$0xf]
      %v361 = vunpack.c.l.b16 %v225
      %v362 = vunpack.c.h.b16 %v225
      %v363 = vunpack.c.l.b16 %v226
      %v364 = vunpack.c.h.b16 %v226
      %v365 = vunpack.c.l.b16 %v227
      %v366 = vunpack.c.h.b16 %v227
      %v367 = vunpack.c.l.b16 %v228
      %v368 = vunpack.c.h.b16 %v228
      %v369 = vpack.c.b16 %v361, %v361
      %v370 = vpack.c.b16 %v362, %v362
      %v371 = vpack.c.b16 %v363, %v363
      %v372 = vpack.c.b16 %v364, %v364
      %v373 = vpack.c.b16 %v365, %v365
      %v374 = vpack.c.b16 %v366, %v366
      %v375 = vpack.c.b16 %v367, %v367
      %v376 = vpack.c.b16 %v368, %v368
      %v513 = vunpack.c.l.b16 %v229
      %v514 = vunpack.c.l.b16 %v230
      %v515 = vunpack.c.l.b16 %v231
      %v516 = vunpack.c.l.b16 %v232
      %v517 = vunpack.c.l.b16 %v233
      %v518 = vunpack.c.l.b16 %v234
      %v519 = vunpack.c.l.b16 %v235
      %v520 = vunpack.c.l.b16 %v236
      %v521 = vunpack.c.l.b16 %v237
      %v522 = vunpack.c.l.b16 %v238
      %v523 = vunpack.c.l.b16 %v239
      %v524 = vunpack.c.l.b16 %v240
      %v525 = vunpack.c.l.b16 %v241
      %v526 = vunpack.c.l.b16 %v242
      %v527 = vunpack.c.l.b16 %v243
      %v528 = vunpack.c.l.b16 %v244
      %v529 = vunpack.c.l.b16 %v245
      %v530 = vunpack.c.l.b16 %v246
      %v531 = vunpack.c.l.b16 %v247
      %v532 = vunpack.c.l.b16 %v248
      %v533 = vunpack.c.l.b16 %v249
      %v534 = vunpack.c.l.b16 %v250
      %v535 = vunpack.c.l.b16 %v251
      %v536 = vunpack.c.l.b16 %v252
      %v537 = vunpack.c.l.b16 %v253
      %v538 = vunpack.c.l.b16 %v254
      %v539 = vunpack.c.l.b16 %v255
      %v540 = vunpack.c.l.b16 %v256
      %v541 = vunpack.c.l.b16 %v257
      %v542 = vunpack.c.l.b16 %v258
      %v543 = vunpack.c.l.b16 %v259
      %v544 = vunpack.c.l.b16 %v260
      %v545 = vunpack.c.l.b16 %v261
      %v546 = vunpack.c.l.b16 %v262
      %v547 = vunpack.c.l.b16 %v263
      %v548 = vunpack.c.l.b16 %v264
      %v549 = vunpack.c.l.b16 %v265
      %v550 = vunpack.c.l.b16 %v266
      %v551 = vunpack.c.l.b16 %v267
      %v552 = vunpack.c.l.b16 %v268
      %v553 = vunpack.c.l.b16 %v269
      %v554 = vunpack.c.l.b16 %v270
      %v555 = vunpack.c.l.b16 %v271
      %v556 = vunpack.c.l.b16 %v272
      %v557 = vunpack.c.l.b16 %v273
      %v558 = vunpack.c.l.b16 %v274
      %v559 = vunpack.c.l.b16 %v275
      %v560 = vunpack.c.l.b16 %v276
      %v561 = vunpack.c.l.b16 %v277
      %v562 = vunpack.c.l.b16 %v278
      %v563 = vunpack.c.l.b16 %v279
      %v564 = vunpack.c.l.b16 %v280
      %v565 = vunpack.c.l.b16 %v281
      %v566 = vunpack.c.l.b16 %v282
      %v567 = vunpack.c.l.b16 %v283
      %v568 = vunpack.c.l.b16 %v284
      %v569 = vunpack.c.l.b16 %v285
      %v570 = vunpack.c.l.b16 %v286
      %v571 = vunpack.c.l.b16 %v287
      %v572 = vunpack.c.l.b16 %v288
      %v573 = vunpack.c.l.b16 %v289
      %v574 = vunpack.c.l.b16 %v290
      %v575 = vunpack.c.l.b16 %v291
      %v576 = vunpack.c.l.b16 %v292
      %v577 = vunpack.c.l.b16 %v293
      %v578 = vunpack.c.l.b16 %v294
      %v579 = vunpack.c.l.b16 %v295
      %v580 = vunpack.c.l.b16 %v296
      %v581 = vunpack.c.l.b16 %v297
      %v582 = vunpack.c.l.b16 %v298
      %v583 = vunpack.c.l.b16 %v299
      %v584 = vunpack.c.l.b16 %v300
      %v585 = vunpack.c.l.b16 %v301
      %v586 = vunpack.c.l.b16 %v302
      %v587 = vunpack.c.l.b16 %v303
      %v588 = vunpack.c.l.b16 %v304
      %v589 = vunpack.c.l.b16 %v305
      %v590 = vunpack.c.l.b16 %v306
      %v591 = vunpack.c.l.b16 %v307
      %v592 = vunpack.c.l.b16 %v308
      %v593 = vunpack.c.l.b16 %v309
      %v594 = vunpack.c.l.b16 %v310
      %v595 = vunpack.c.l.b16 %v311
      %v596 = vunpack.c.l.b16 %v312
      %v597 = vunpack.c.l.b16 %v313
      %v598 = vunpack.c.l.b16 %v314
      %v599 = vunpack.c.l.b16 %v315
      %v600 = vunpack.c.l.b16 %v316
      %v601 = vunpack.c.l.b16 %v317
      %v602 = vunpack.c.l.b16 %v318
      %v603 = vunpack.c.l.b16 %v319
      %v604 = vunpack.c.l.b16 %v320
      %v605 = vunpack.c.l.b16 %v321
      %v606 = vunpack.c.l.b16 %v322
      %v607 = vunpack.c.l.b16 %v323
      %v608 = vunpack.c.l.b16 %v324
      %v609 = vunpack.c.l.b16 %v325
      %v610 = vunpack.c.l.b16 %v326
      %v611 = vunpack.c.l.b16 %v327
      %v612 = vunpack.c.l.b16 %v328
      %v613 = vunpack.c.l.b16 %v329
      %v614 = vunpack.c.l.b16 %v330
      %v615 = vunpack.c.l.b16 %v331
      %v616 = vunpack.c.l.b16 %v332
      %v617 = vunpack.c.l.b16 %v333
      %v618 = vunpack.c.l.b16 %v334
      %v619 = vunpack.c.l.b16 %v335
      %v620 = vunpack.c.l.b16 %v336
      %v621 = vunpack.c.l.b16 %v337
      %v622 = vunpack.c.l.b16 %v338
      %v623 = vunpack.c.l.b16 %v339
      %v624 = vunpack.c.l.b16 %v340
      %v625 = vunpack.c.l.b16 %v341
      %v626 = vunpack.c.l.b16 %v342
      %v627 = vunpack.c.l.b16 %v343
      %v628 = vunpack.c.l.b16 %v344
      %v629 = vunpack.c.l.b16 %v345
      %v630 = vunpack.c.l.b16 %v346
      %v631 = vunpack.c.l.b16 %v347
      %v632 = vunpack.c.l.b16 %v348
      %v633 = vunpack.c.l.b16 %v349
      %v634 = vunpack.c.l.b16 %v350
      %v635 = vunpack.c.l.b16 %v351
      %v636 = vunpack.c.l.b16 %v352
      %v637 = vunpack.c.l.b16 %v353
      %v638 = vunpack.c.l.b16 %v354
      %v639 = vunpack.c.l.b16 %v355
      %v640 = vunpack.c.l.b16 %v356
      %v641 = vpack.c.b16 %v514, %v513
      %v642 = vpack.c.b16 %v516, %v515
      %v643 = vpack.c.b16 %v518, %v517
      %v644 = vpack.c.b16 %v520, %v519
      %v645 = vpack.c.b16 %v522, %v521
      %v646 = vpack.c.b16 %v524, %v523
      %v647 = vpack.c.b16 %v526, %v525
      %v648 = vpack.c.b16 %v528, %v527
      %v649 = vpack.c.b16 %v530, %v529
      %v650 = vpack.c.b16 %v532, %v531
      %v651 = vpack.c.b16 %v534, %v533
      %v652 = vpack.c.b16 %v536, %v535
      %v653 = vpack.c.b16 %v538, %v537
      %v654 = vpack.c.b16 %v540, %v539
      %v655 = vpack.c.b16 %v542, %v541
      %v656 = vpack.c.b16 %v544, %v543
      %v657 = vpack.c.b16 %v546, %v545
      %v658 = vpack.c.b16 %v548, %v547
      %v659 = vpack.c.b16 %v550, %v549
      %v660 = vpack.c.b16 %v552, %v551
      %v661 = vpack.c.b16 %v554, %v553
      %v662 = vpack.c.b16 %v556, %v555
      %v663 = vpack.c.b16 %v558, %v557
      %v664 = vpack.c.b16 %v560, %v559
      %v665 = vpack.c.b16 %v562, %v561
      %v666 = vpack.c.b16 %v564, %v563
      %v667 = vpack.c.b16 %v566, %v565
      %v668 = vpack.c.b16 %v568, %v567
      %v669 = vpack.c.b16 %v570, %v569
      %v670 = vpack.c.b16 %v572, %v571
      %v671 = vpack.c.b16 %v574, %v573
      %v672 = vpack.c.b16 %v576, %v575
      %v673 = vpack.c.b16 %v578, %v577
      %v674 = vpack.c.b16 %v580, %v579
      %v675 = vpack.c.b16 %v582, %v581
      %v676 = vpack.c.b16 %v584, %v583
      %v677 = vpack.c.b16 %v586, %v585
      %v678 = vpack.c.b16 %v588, %v587
      %v679 = vpack.c.b16 %v590, %v589
      %v680 = vpack.c.b16 %v592, %v591
      %v681 = vpack.c.b16 %v594, %v593
      %v682 = vpack.c.b16 %v596, %v595
      %v683 = vpack.c.b16 %v598, %v597
      %v684 = vpack.c.b16 %v600, %v599
      %v685 = vpack.c.b16 %v602, %v601
      %v686 = vpack.c.b16 %v604, %v603
      %v687 = vpack.c.b16 %v606, %v605
      %v688 = vpack.c.b16 %v608, %v607
      %v689 = vpack.c.b16 %v610, %v609
      %v690 = vpack.c.b16 %v612, %v611
      %v691 = vpack.c.b16 %v614, %v613
      %v692 = vpack.c.b16 %v616, %v615
      %v693 = vpack.c.b16 %v618, %v617
      %v694 = vpack.c.b16 %v620, %v619
      %v695 = vpack.c.b16 %v622, %v621
      %v696 = vpack.c.b16 %v624, %v623
      %v697 = vpack.c.b16 %v626, %v625
      %v698 = vpack.c.b16 %v628, %v627
      %v699 = vpack.c.b16 %v630, %v629
      %v700 = vpack.c.b16 %v632, %v631
      %v701 = vpack.c.b16 %v634, %v633
      %v702 = vpack.c.b16 %v636, %v635
      %v703 = vpack.c.b16 %v638, %v637
      %v704 = vpack.c.b16 %v640, %v639
      %769 = vmatpush.bf16.msra.mxu0 %v648
      %770 = vmatpush.bf16.msra.mxu0 %v647
      %771 = vmatpush.bf16.msra.mxu0 %v646
      %772 = vmatpush.bf16.msra.mxu0 %v645
      %773 = vmatpush.bf16.msra.mxu0 %v644
      %774 = vmatpush.bf16.msra.mxu0 %v643
      %775 = vmatpush.bf16.msra.mxu0 %v642
      %776 = vmatpush.bf16.msra.mxu0 %v641
      %777 = vmatmul.bf16.gmra.mxu0 %v369
      %v778 = vpop.f32.mrf.mxu0
      %v779 = vadd.f32 0.0, %v778
      %v780 = vpop.f32.mrf.mxu0
      %781 = vdwg.mxu0
      %782 = vmatpush.bf16.msra.mxu0 %v656
      %783 = vmatpush.bf16.msra.mxu0 %v655
      %784 = vmatpush.bf16.msra.mxu0 %v654
      %785 = vmatpush.bf16.msra.mxu0 %v653
      %786 = vmatpush.bf16.msra.mxu0 %v652
      %787 = vmatpush.bf16.msra.mxu0 %v651
      %788 = vmatpush.bf16.msra.mxu0 %v650
      %789 = vmatpush.bf16.msra.mxu0 %v649
      %790 = vmatmul.bf16.gmra.mxu0 %v370
      %v791 = vpop.f32.mrf.mxu0
      %v792 = vadd.f32 %v779, %v791
      %v793 = vpop.f32.mrf.mxu0
      %794 = vdwg.mxu0
      %795 = vmatpush.bf16.msra.mxu0 %v664
      %796 = vmatpush.bf16.msra.mxu0 %v663
      %797 = vmatpush.bf16.msra.mxu0 %v662
      %798 = vmatpush.bf16.msra.mxu0 %v661
      %799 = vmatpush.bf16.msra.mxu0 %v660
      %800 = vmatpush.bf16.msra.mxu0 %v659
      %801 = vmatpush.bf16.msra.mxu0 %v658
      %802 = vmatpush.bf16.msra.mxu0 %v657
      %803 = vmatmul.bf16.gmra.mxu0 %v371
      %v804 = vpop.f32.mrf.mxu0
      %v805 = vadd.f32 %v792, %v804
      %v806 = vpop.f32.mrf.mxu0
      %807 = vdwg.mxu0
      %808 = vmatpush.bf16.msra.mxu0 %v672
      %809 = vmatpush.bf16.msra.mxu0 %v671
      %810 = vmatpush.bf16.msra.mxu0 %v670
      %811 = vmatpush.bf16.msra.mxu0 %v669
      %812 = vmatpush.bf16.msra.mxu0 %v668
      %813 = vmatpush.bf16.msra.mxu0 %v667
      %814 = vmatpush.bf16.msra.mxu0 %v666
      %815 = vmatpush.bf16.msra.mxu0 %v665
      %816 = vmatmul.bf16.gmra.mxu0 %v372
      %v817 = vpop.f32.mrf.mxu0
      %v818 = vadd.f32 %v805, %v817
      %v819 = vpop.f32.mrf.mxu0
      %820 = vdwg.mxu0
      %821 = vmatpush.bf16.msra.mxu0 %v680
      %822 = vmatpush.bf16.msra.mxu0 %v679
      %823 = vmatpush.bf16.msra.mxu0 %v678
      %824 = vmatpush.bf16.msra.mxu0 %v677
      %825 = vmatpush.bf16.msra.mxu0 %v676
      %826 = vmatpush.bf16.msra.mxu0 %v675
      %827 = vmatpush.bf16.msra.mxu0 %v674
      %828 = vmatpush.bf16.msra.mxu0 %v673
      %829 = vmatmul.bf16.gmra.mxu0 %v373
      %v830 = vpop.f32.mrf.mxu0
      %v831 = vadd.f32 %v818, %v830
      %v832 = vpop.f32.mrf.mxu0
      %833 = vdwg.mxu0
      %834 = vmatpush.bf16.msra.mxu0 %v688
      %835 = vmatpush.bf16.msra.mxu0 %v687
      %836 = vmatpush.bf16.msra.mxu0 %v686
      %837 = vmatpush.bf16.msra.mxu0 %v685
      %838 = vmatpush.bf16.msra.mxu0 %v684
      %839 = vmatpush.bf16.msra.mxu0 %v683
      %840 = vmatpush.bf16.msra.mxu0 %v682
      %841 = vmatpush.bf16.msra.mxu0 %v681
      %842 = vmatmul.bf16.gmra.mxu0 %v374
      %v843 = vpop.f32.mrf.mxu0
      %v844 = vadd.f32 %v831, %v843
      %v845 = vpop.f32.mrf.mxu0
      %846 = vdwg.mxu0
      %847 = vmatpush.bf16.msra.mxu0 %v696
      %848 = vmatpush.bf16.msra.mxu0 %v695
      %849 = vmatpush.bf16.msra.mxu0 %v694
      %850 = vmatpush.bf16.msra.mxu0 %v693
      %851 = vmatpush.bf16.msra.mxu0 %v692
      %852 = vmatpush.bf16.msra.mxu0 %v691
      %853 = vmatpush.bf16.msra.mxu0 %v690
      %854 = vmatpush.bf16.msra.mxu0 %v689
      %855 = vmatmul.bf16.gmra.mxu0 %v375
      %v856 = vpop.f32.mrf.mxu0
      %v857 = vadd.f32 %v844, %v856
      %v858 = vpop.f32.mrf.mxu0
      %859 = vdwg.mxu0
      %860 = vmatpush.bf16.msra.mxu0 %v704
      %861 = vmatpush.bf16.msra.mxu0 %v703
      %862 = vmatpush.bf16.msra.mxu0 %v702
      %863 = vmatpush.bf16.msra.mxu0 %v701
      %864 = vmatpush.bf16.msra.mxu0 %v700
      %865 = vmatpush.bf16.msra.mxu0 %v699
      %866 = vmatpush.bf16.msra.mxu0 %v698
      %867 = vmatpush.bf16.msra.mxu0 %v697
      %868 = vmatmul.bf16.gmra.mxu0 %v376
      %v869 = vpop.f32.mrf.mxu0
      %v870 = vadd.f32 %v857, %v869
      %v871 = vpop.f32.mrf.mxu0
      %872 = vdwg.mxu0
      %v873 = vadd.f32 %v224, %v870
      %vm874 = vcmask 7168
      %875 = vst.msk [vmem:[#allocation2] sm:$0xff] %vm874, %v873
      %p876 = scmp.eq.s32.totalorder %s20, 7
      // Predicated region
      $region33: #{output_discriminator.9} parent=27 // pred_check
        %p877 = pneg %p876
      $region34: #{output_discriminator.9} parent=27 // pred_check_branch
        %879 = sbr.rel (%p877) target = $region36
      $region35: #{output_discriminator.9} parent=27 // pred_region
        %v880 = vld [vmem:[#allocation2] sm:$0xff]
        %881 = vst.msk [vmem:[%s217] sm:$0xff] %vm874, %v880
      $region36: #{output_discriminator.9} parent=27 // pred_fallthru
        _
      %p882 = scmp.lt.s32.totalorder %s18, 0
      %s883 = scalar_select %p882, %s18, 0
      %p884 = scmp.lt.s32.totalorder %s19, 0
      %s885 = scalar_select %p884, %s19, 0
      %s886 = sadd.s32 %s885, %s883
      %s887 = smul.addr %s886, 8
      %s888 = scalar_lea.vmem %s2, %s887
      // Predicated region
      $region37: #{output_discriminator.9} parent=27 // pred_check
        %p889 = pneg %p108
      $region38: #{output_discriminator.9} parent=27 // pred_check_branch
        %891 = sbr.rel (%p889) target = $region40
      $region39: #{output_discriminator.9} parent=27 // pred_region
        _
      $region40: #{output_discriminator.9} parent=27 // pred_fallthru
        _
      // Predicated region
      $region41: #{output_discriminator.9} parent=27 // pred_check
        %p892 = pneg %p108
      $region42: #{output_discriminator.9} parent=27 // pred_check_branch
        %894 = sbr.rel (%p892) target = $region44
      $region43: #{output_discriminator.9} parent=27 // pred_region
        %p895 = scmp.lt.s32.totalorder %s18, 0
        %s896 = scalar_select %p895, %s18, 0
        %p897 = scmp.lt.s32.totalorder %s19, 0
        %s898 = scalar_select %p897, %s19, 0
        %s899 = sadd.s32 %s898, %s896
        %s900 = smul.addr %s899, 8
        %s901 = scalar_lea.vmem %s2, %s900
      $region44: #{output_discriminator.9} parent=27 // pred_fallthru
        _
    $region28: #{output_discriminator.9} parent=5 // pred_fallthru
      _
    %p902 = scmp.le.s32.totalorder 2, %s8
    // Predicated region
    $region45: #{output_discriminator.9} parent=5 // pred_check
      %p903 = pneg %p902
    $region46: #{output_discriminator.9} parent=5 // pred_check_branch
      %905 = sbr.rel (%p903) target = $region48
    $region47: #{output_discriminator.9} parent=5 // pred_region
      %s906 = ssub.s32 %s8, 2
    $region48: #{output_discriminator.9} parent=5 // pred_fallthru
      _
  $region6: #{output_discriminator.9} parent=0 // loop_footer
    %s12 = sadd.s32 1, %s8
  $region7: #{output_discriminator.9} parent=0 // loop_footer_branch
    %7 = sbr.rel target = $region3
  $region8: #{output_discriminator.9} parent=0 // loop_exit
    _

</llo_original>
